<compile_context>
chip_gen: v7x
topology: tpu7x:2x2x1
jax: 0.10.0
libtpu: 0.0.40
codegen_flags: <defaults>
</compile_context>

<pallas_src>
import math

import jax
import jax.numpy as jnp
import numpy as np
from jax import lax
from jax.experimental import pallas as pl
from jax.experimental.pallas import tpu as pltpu
from jax.scipy.linalg import block_diag

F32 = jnp.float32
BF16 = jnp.bfloat16


def _dot(a, b):
    # MXU matmul: bf16 operands, f32 accumulation (matches the reference).
    return jnp.dot(a.astype(BF16), b.astype(BF16), preferred_element_type=F32)


def _sigmoid(v):
    return 0.5 * (jnp.tanh(0.5 * v) + 1.0)      # numerically stable logistic


def _silu(v):
    return v * _sigmoid(v)


def _pvm_kernel(x_ref, ln_g_ref, ln_b_ref, wx_ref, wz_ref, convw_ref, convb_ref,
                wxpdt_ref, wxpb_ref, wxpc_ref, wdt_ref, bdt_ref, a_ref,
                dpar_ref, wout_ref, skip_ref, wproj_ref, bproj_ref,
                es_ref, ec_ref, red_ref, o_ref):
    N = x_ref.shape[1]
    C = x_ref.shape[2]
    CI = wx_ref.shape[1]          # n_chunks * d_inner
    CDN = a_ref.shape[1]          # n_chunks * d_inner * d_state
    K = convw_ref.shape[0]

    x = x_ref[0]                  # (N, C)
    g = ln_g_ref[...]             # (1, C)
    beta = ln_b_ref[...]          # (1, C)

    def layer_norm(v):
        mu = jnp.mean(v, axis=-1, keepdims=True)
        var = jnp.mean((v - mu) * (v - mu), axis=-1, keepdims=True)
        return (v - mu) * lax.rsqrt(var + 1e-5) * g + beta

    def shift_tokens(v, d, fill):
        # v[t] -> v[t - d]; first d token rows become `fill` (causal shift).
        return jnp.concatenate(
            [jnp.full((d, v.shape[1]), fill, F32), v[:v.shape[0] - d, :]], axis=0)

    # ---- LayerNorm over the full channel dim (shared across the 4 chunks) ----
    xn = layer_norm(x)                               # (N, C)

    # ---- in_proj: all 4 chunks through the shared weights at once (block-diag)
    xin = _dot(xn, wx_ref[...])                      # (N, CI)
    z = _dot(xn, wz_ref[...])                        # (N, CI)

    # ---- causal depthwise conv1d (taps lane-tiled across chunks) ----
    convw = convw_ref[...]
    acc = jnp.broadcast_to(convb_ref[...], (N, CI))
    for k in range(K):
        s = K - 1 - k
        xs = xin if s == 0 else shift_tokens(xin, s, 0.0)
        acc = acc + xs * convw[k:k + 1, :]
    u = _silu(acc)                                   # (N, CI)

    # ---- x_proj (dt / B / C), dt_proj, softplus ----
    dt_low = _dot(u, wxpdt_ref[...])                 # (N, n_chunks*dt_rank)
    Bm = _dot(u, wxpb_ref[...])                      # (N, n_chunks*d_state)
    Cm = _dot(u, wxpc_ref[...])                      # (N, n_chunks*d_state)
    dtv = _dot(dt_low, wdt_ref[...]) + bdt_ref[...]  # (N, CI)
    delta = jnp.where(dtv > 20.0, dtv,
                      jnp.log(1.0 + jnp.exp(jnp.minimum(dtv, 20.0))))

    # ---- discretize: expand to the (chunk, channel, state) lane layout with
    #      exact 0/1 expansion matrices on the (otherwise idle) MXU, in f32.
    es = es_ref[...]                                                # (CI, CDN)
    ec = ec_ref[...]                                                # (CS, CDN)
    delta_e = jnp.dot(delta, es, preferred_element_type=F32)        # (N, CDN)
    du_e = jnp.dot(delta * u, es, preferred_element_type=F32)       # (N, CDN)
    b_e = jnp.dot(Bm, ec, preferred_element_type=F32)               # (N, CDN)
    c_e = jnp.dot(Cm, ec, preferred_element_type=F32)               # (N, CDN)

    dA = jnp.exp(delta_e * a_ref[...])               # (N, CDN), values in (0, 1]
    dBu = du_e * b_e                                 # (N, CDN)

    # ---- selective scan  h[t] = dA[t] * h[t-1] + dBu[t],  h[-1] = 0 ----
    # Log-depth associative scan over tokens, vectorised over all CDN lanes.
    # Combine (aL,bL) then (aR,bR) -> (aR*aL, aR*bL + bR); identity = (1, 0).
    Ac, Bc = dA, dBu
    d = 1
    while d < N:
        a_sh = shift_tokens(Ac, d, 1.0)
        b_sh = shift_tokens(Bc, d, 0.0)
        Bc = Bc + Ac * b_sh          # uses pre-update Ac
        Ac = Ac * a_sh
        d *= 2
    h = Bc                                           # (N, CDN): h at every token

    # ---- y = sum_s h * C (exact 0/1 reducer on MXU), + D*u, gate, out_proj ----
    y = jnp.dot(h * c_e, red_ref[...], preferred_element_type=F32)  # (N, CI)
    y = y + u * dpar_ref[...]
    y = y * _silu(z)
    y = _dot(y, wout_ref[...])                       # (N, C), chunk-major lanes

    # skip connection (lane-aligned per chunk), shared LayerNorm, output proj
    y = y + skip_ref[...] * xn
    xm = layer_norm(y)
    o_ref[0] = _dot(xm, wproj_ref[...]) + bproj_ref[...]   # (N, Cout_pad) lane-dense


def init_params(key, input_dim, output_dim, d_state=16, d_conv=4, expand=2):
    d_model = input_dim // 4
    d_inner = expand * d_model
    dt_rank = max(1, math.ceil(d_model / 16))
    ks = list(jax.random.split(key, 14))

    def nrm(k, shape, scale):
        return (scale * jax.random.normal(k, shape)).astype(F32)

    p = {
        "ln_g": (1.0 + 0.1 * jax.random.normal(ks[0], (1, input_dim))).astype(F32),
        "ln_b": nrm(ks[1], (1, input_dim), 0.1),
        "Wx_in": nrm(ks[2], (d_model, d_inner), 0.5),    # in_proj (x half), transposed
        "Wz_in": nrm(ks[3], (d_model, d_inner), 0.5),    # in_proj (z half), transposed
        "convw": nrm(ks[4], (d_conv, d_inner), 0.5),     # depthwise conv1d taps
        "convb": nrm(ks[5], (1, d_inner), 0.1),
        "Wxp_dt": nrm(ks[6], (d_inner, dt_rank), 0.5),   # x_proj splits, transposed
        "Wxp_B": nrm(ks[7], (d_inner, d_state), 0.5),
        "Wxp_C": nrm(ks[8], (d_inner, d_state), 0.5),
        "Wdt": nrm(ks[9], (dt_rank, d_inner), 0.5),      # dt_proj, transposed
        "bdt": nrm(ks[10], (1, d_inner), 0.1),
        "Dp": jnp.ones((1, d_inner), F32),
        "Wout": nrm(ks[11], (d_inner, d_model), 0.5),    # out_proj, transposed
        "skip": jnp.ones((1, 1), F32),
        "Wproj": nrm(ks[12], (input_dim, output_dim), 0.3),
        "bproj": nrm(ks[13], (1, output_dim), 0.1),
    }
    A = jnp.tile(jnp.arange(1, d_state + 1, dtype=F32)[None, :], (d_inner, 1))
    p["Alog"] = jnp.log(A)                               # (d_inner, d_state)
    return p


def pvm_layer_forward(x, params):
    B, C, H, W = x.shape
    N = H * W
    d_model, d_inner = params["Wx_in"].shape
    d_state = params["Wxp_B"].shape[1]
    n_chunks = C // d_model
    DN = d_inner * d_state
    CI = n_chunks * d_inner
    CS = n_chunks * d_state
    CDN = n_chunks * DN
    Cout = params["Wproj"].shape[1]
    Cout_pad = ((Cout + 127) // 128) * 128               # lane-dense output width

    x_flat = jnp.transpose(x.reshape(B, C, N), (0, 2, 1)).astype(F32)   # (B, N, C)

    def bd(w):                      # shared per-chunk weight -> block-diagonal
        return block_diag(*([w.astype(F32)] * n_chunks))

    # chunk-in-lanes weight forms
    wx_blk = bd(params["Wx_in"])                             # (C, CI)
    wz_blk = bd(params["Wz_in"])                             # (C, CI)
    convw_t = jnp.tile(params["convw"], (1, n_chunks))       # (K, CI)
    convb_t = jnp.tile(params["convb"], (1, n_chunks))       # (1, CI)
    wxpdt_blk = bd(params["Wxp_dt"])                         # (CI, n_chunks*dt_rank)
    wxpb_blk = bd(params["Wxp_B"])                           # (CI, CS)
    wxpc_blk = bd(params["Wxp_C"])                           # (CI, CS)
    wdt_blk = bd(params["Wdt"])                              # (n_chunks*dt_rank, CI)
    bdt_t = jnp.tile(params["bdt"], (1, n_chunks))           # (1, CI)
    a_blk = jnp.tile((-jnp.exp(params["Alog"])).reshape(1, DN), (1, n_chunks))  # (1, CDN)
    dpar_t = jnp.tile(params["Dp"], (1, n_chunks))           # (1, CI)
    wout_blk = bd(params["Wout"])                            # (CI, C)
    wproj_pad = jnp.pad(params["Wproj"], ((0, 0), (0, Cout_pad - Cout)))  # (C, Cout_pad)
    bproj_pad = jnp.pad(params["bproj"], ((0, 0), (0, Cout_pad - Cout)))  # (1, Cout_pad)

    # exact 0/1 expansion / reduction matrices for the flattened state lanes
    # (lane = chunk*DN + channel*d_state + state, i.e. channel-major per chunk)
    es = np.zeros((CI, CDN), np.float32)     # channel        -> channel*state
    ec = np.zeros((CS, CDN), np.float32)     # state          -> channel*state
    for ch in range(n_chunks):
        for c in range(d_inner):
            for s in range(d_state):
                col = ch * DN + c * d_state + s
                es[ch * d_inner + c, col] = 1.0
                ec[ch * d_state + s, col] = 1.0
    red = jnp.asarray(es.T)                  # (CDN, CI): sum over d_state groups
    es = jnp.asarray(es)
    ec = jnp.asarray(ec)

    plist = [params["ln_g"], params["ln_b"], wx_blk, wz_blk, convw_t, convb_t,
             wxpdt_blk, wxpb_blk, wxpc_blk, wdt_blk, bdt_t, a_blk, dpar_t,
             wout_blk, params["skip"], wproj_pad, bproj_pad, es, ec, red]
    plist = [p.astype(F32) for p in plist]

    in_specs = [pl.BlockSpec((1, N, C), lambda b: (b, 0, 0))]
    in_specs += [pl.BlockSpec(p.shape, lambda b: (0, 0)) for p in plist]

    # VMEM budget from the actual footprint: double-buffered IO + weights plus
    # the scan-region temporaries (~a dozen live (N, CDN) f32 values), 2x margin.
    weight_bytes = sum(int(np.prod(p.shape)) * 4 for p in plist)
    est = (2 * N * C * 4 + 2 * N * Cout_pad * 4 + 2 * weight_bytes
           + 12 * N * CDN * 4)
    vmem_limit = int(min(112 * 2 ** 20, max(32 * 2 ** 20, 2 * est)))

    out = pl.pallas_call(
        _pvm_kernel,
        out_shape=jax.ShapeDtypeStruct((B, N, Cout_pad), F32),
        grid_spec=pltpu.PrefetchScalarGridSpec(
            num_scalar_prefetch=0,
            grid=(B,),
            in_specs=in_specs,
            out_specs=pl.BlockSpec((1, N, Cout_pad), lambda b: (b, 0, 0)),
        ),
        compiler_params=pltpu.CompilerParams(
            dimension_semantics=("parallel",),
            vmem_limit_bytes=vmem_limit),
    )(x_flat, *plist)

    out = out[..., :Cout]                                   # drop lane padding
    return jnp.transpose(out, (0, 2, 1)).reshape(B, Cout, H, W)


# ---------------- pure-JAX reference (correctness check) ----------------
# Matmuls use the same bf16-operand / f32-accumulate scheme as the kernel so
# the comparison isolates structural correctness.

def _bdot(a, b):
    return jnp.matmul(a.astype(BF16), b.astype(BF16), preferred_element_type=F32)


def _softplus(v):
    return jnp.where(v > 20.0, v, jnp.log1p(jnp.exp(jnp.minimum(v, 20.0))))


def mamba_ref(xc, p):
    Bb, N, _ = xc.shape
    K, d_inner = p["convw"].shape
    d_state = p["Wxp_B"].shape[1]
    xin = _bdot(xc, p["Wx_in"])
    z = _bdot(xc, p["Wz_in"])
    xpad = jnp.pad(xin, ((0, 0), (K - 1, 0), (0, 0)))
    conv = p["convb"][0]
    for k in range(K):
        conv = conv + p["convw"][k][None, None, :] * xpad[:, k:k + N, :]
    u = conv * jax.nn.sigmoid(conv)
    dt_low = _bdot(u, p["Wxp_dt"])
    Bm = _bdot(u, p["Wxp_B"])
    Cm = _bdot(u, p["Wxp_C"])
    delta = _softplus(_bdot(dt_low, p["Wdt"]) + p["bdt"][0])
    A = -jnp.exp(p["Alog"])

    def step(h, inp):
        dlt, uu, bb, cc = inp
        dA = jnp.exp(dlt[:, :, None] * A[None])
        dBu = dlt[:, :, None] * uu[:, :, None] * bb[:, None, :]
        h = dA * h + dBu
        y = jnp.sum(h * cc[:, None, :], axis=-1)
        return h, y

    h0 = jnp.zeros((Bb, d_inner, d_state), F32)
    _, ys = lax.scan(step, h0, (jnp.swapaxes(delta, 0, 1), jnp.swapaxes(u, 0, 1),
                                jnp.swapaxes(Bm, 0, 1), jnp.swapaxes(Cm, 0, 1)))
    y = jnp.swapaxes(ys, 0, 1) + u * p["Dp"][0]
    y = y * (z * jax.nn.sigmoid(z))
    return _bdot(y, p["Wout"])


def pvm_ref(x, p):
    B, C, H, W = x.shape
    N = H * W
    d_model = C // 4
    xf = jnp.transpose(x.reshape(B, C, N), (0, 2, 1))

    def ln(v):
        mu = v.mean(-1, keepdims=True)
        var = ((v - mu) ** 2).mean(-1, keepdims=True)
        return (v - mu) / jnp.sqrt(var + 1e-5) * p["ln_g"][0] + p["ln_b"][0]

    xn = ln(xf)
    outs = []
    for i in range(4):
        xc = xn[..., i * d_model:(i + 1) * d_model]
        outs.append(mamba_ref(xc, p) + p["skip"][0, 0] * xc)
    xm = ln(jnp.concatenate(outs, axis=-1))
    y = _bdot(xm, p["Wproj"]) + p["bproj"][0]
    return jnp.transpose(y, (0, 2, 1)).reshape(B, -1, H, W)


if __name__ == "__main__":
    input_dim, output_dim = 16, 16           # input_dim must be divisible by 4
    B, H, W = 2, 8, 8                        # n_tokens = 64
    key = jax.random.PRNGKey(0)
    kx, kp = jax.random.split(key)
    x = jax.random.normal(kx, (B, input_dim, H, W), dtype=F32)
    params = init_params(kp, input_dim, output_dim, d_state=16, d_conv=4, expand=2)

    out = jax.block_until_ready(pvm_layer_forward(x, params))
    assert out.shape == (B, output_dim, H, W)
    assert bool(jnp.all(jnp.isfinite(out)))

    ref = jax.block_until_ready(pvm_ref(x, params))
    np.testing.assert_allclose(np.asarray(out), np.asarray(ref), rtol=2e-2, atol=2e-2)

    print("KERNEL_OK")
</pallas_src>

<mosaic_0001>
module attributes {stable_mosaic.version = 11 : i64} {
  func.func @_pvm_kernel(%arg0: i32, %arg1: memref<1x64x16xf32, #tpu.memory_space<vmem>>, %arg2: memref<1x16xf32, #tpu.memory_space<vmem>>, %arg3: memref<1x16xf32, #tpu.memory_space<vmem>>, %arg4: memref<16x32xf32, #tpu.memory_space<vmem>>, %arg5: memref<16x32xf32, #tpu.memory_space<vmem>>, %arg6: memref<4x32xf32, #tpu.memory_space<vmem>>, %arg7: memref<1x32xf32, #tpu.memory_space<vmem>>, %arg8: memref<32x4xf32, #tpu.memory_space<vmem>>, %arg9: memref<32x64xf32, #tpu.memory_space<vmem>>, %arg10: memref<32x64xf32, #tpu.memory_space<vmem>>, %arg11: memref<4x32xf32, #tpu.memory_space<vmem>>, %arg12: memref<1x32xf32, #tpu.memory_space<vmem>>, %arg13: memref<1x512xf32, #tpu.memory_space<vmem>>, %arg14: memref<1x32xf32, #tpu.memory_space<vmem>>, %arg15: memref<32x16xf32, #tpu.memory_space<vmem>>, %arg16: memref<1x1xf32, #tpu.memory_space<vmem>>, %arg17: memref<16x128xf32, #tpu.memory_space<vmem>>, %arg18: memref<1x128xf32, #tpu.memory_space<vmem>>, %arg19: memref<32x512xf32, #tpu.memory_space<vmem>>, %arg20: memref<64x512xf32, #tpu.memory_space<vmem>>, %arg21: memref<512x32xf32, #tpu.memory_space<vmem>>, %arg22: memref<1x64x128xf32, #tpu.memory_space<vmem>>) attributes {dimension_semantics = [#tpu.dimension_semantics<parallel>], iteration_bounds = array<i64: 2>, scalar_prefetch = 0 : i64, scratch_operands = 0 : i64, tpu.core_type = #tpu.core_type<tc>, window_params = [{transform_indices = @transform_0, window_bounds = array<i64: 1, 64, 16>}, {pipeline_mode = #tpu.pipeline_mode<synchronous>, transform_indices = @transform_1, window_bounds = array<i64: 1, 16>}, {pipeline_mode = #tpu.pipeline_mode<synchronous>, transform_indices = @transform_2, window_bounds = array<i64: 1, 16>}, {pipeline_mode = #tpu.pipeline_mode<synchronous>, transform_indices = @transform_3, window_bounds = array<i64: 16, 32>}, {pipeline_mode = #tpu.pipeline_mode<synchronous>, transform_indices = @transform_4, window_bounds = array<i64: 16, 32>}, {pipeline_mode = #tpu.pipeline_mode<synchronous>, transform_indices = @transform_5, window_bounds = array<i64: 4, 32>}, {pipeline_mode = #tpu.pipeline_mode<synchronous>, transform_indices = @transform_6, window_bounds = array<i64: 1, 32>}, {pipeline_mode = #tpu.pipeline_mode<synchronous>, transform_indices = @transform_7, window_bounds = array<i64: 32, 4>}, {pipeline_mode = #tpu.pipeline_mode<synchronous>, transform_indices = @transform_8, window_bounds = array<i64: 32, 64>}, {pipeline_mode = #tpu.pipeline_mode<synchronous>, transform_indices = @transform_9, window_bounds = array<i64: 32, 64>}, {pipeline_mode = #tpu.pipeline_mode<synchronous>, transform_indices = @transform_10, window_bounds = array<i64: 4, 32>}, {pipeline_mode = #tpu.pipeline_mode<synchronous>, transform_indices = @transform_11, window_bounds = array<i64: 1, 32>}, {pipeline_mode = #tpu.pipeline_mode<synchronous>, transform_indices = @transform_12, window_bounds = array<i64: 1, 512>}, {pipeline_mode = #tpu.pipeline_mode<synchronous>, transform_indices = @transform_13, window_bounds = array<i64: 1, 32>}, {pipeline_mode = #tpu.pipeline_mode<synchronous>, transform_indices = @transform_14, window_bounds = array<i64: 32, 16>}, {pipeline_mode = #tpu.pipeline_mode<synchronous>, transform_indices = @transform_15, window_bounds = array<i64: 1, 1>}, {pipeline_mode = #tpu.pipeline_mode<synchronous>, transform_indices = @transform_16, window_bounds = array<i64: 16, 128>}, {pipeline_mode = #tpu.pipeline_mode<synchronous>, transform_indices = @transform_17, window_bounds = array<i64: 1, 128>}, {pipeline_mode = #tpu.pipeline_mode<synchronous>, transform_indices = @transform_18, window_bounds = array<i64: 32, 512>}, {pipeline_mode = #tpu.pipeline_mode<synchronous>, transform_indices = @transform_19, window_bounds = array<i64: 64, 512>}, {pipeline_mode = #tpu.pipeline_mode<synchronous>, transform_indices = @transform_20, window_bounds = array<i64: 512, 32>}, {transform_indices = @transform_21, window_bounds = array<i64: 1, 64, 128>}]} {
    %c0 = arith.constant 0 : index
    %c0_0 = arith.constant 0 : index
    %c0_1 = arith.constant 0 : index
    %0 = vector.load %arg1[%c0, %c0_0, %c0_1] : memref<1x64x16xf32, #tpu.memory_space<vmem>>, vector<1x64x16xf32>
    %1 = vector.shape_cast %0 : vector<1x64x16xf32> to vector<64x16xf32>
    %c0_2 = arith.constant 0 : index
    %c0_3 = arith.constant 0 : index
    %2 = vector.load %arg2[%c0_2, %c0_3] : memref<1x16xf32, #tpu.memory_space<vmem>>, vector<1x16xf32>
    %c0_4 = arith.constant 0 : index
    %c0_5 = arith.constant 0 : index
    %3 = vector.load %arg3[%c0_4, %c0_5] : memref<1x16xf32, #tpu.memory_space<vmem>>, vector<1x16xf32>
    %cst = arith.constant dense<0.000000e+00> : vector<64xf32>
    %4 = vector.multi_reduction <add>, %1, %cst [1] : vector<64x16xf32> to vector<64xf32>
    %5 = vector.shape_cast %4 : vector<64xf32> to vector<64x1xf32>
    %cst_6 = arith.constant 1.600000e+01 : f32
    %6 = vector.broadcast %cst_6 : f32 to vector<64x1xf32>
    %7 = arith.divf %5, %6 : vector<64x1xf32>
    %8 = vector.broadcast %7 : vector<64x1xf32> to vector<64x16xf32>
    %9 = arith.subf %1, %8 : vector<64x16xf32>
    %10 = vector.broadcast %7 : vector<64x1xf32> to vector<64x16xf32>
    %11 = arith.subf %1, %10 : vector<64x16xf32>
    %12 = arith.mulf %9, %11 : vector<64x16xf32>
    %cst_7 = arith.constant dense<0.000000e+00> : vector<64xf32>
    %13 = vector.multi_reduction <add>, %12, %cst_7 [1] : vector<64x16xf32> to vector<64xf32>
    %14 = vector.shape_cast %13 : vector<64xf32> to vector<64x1xf32>
    %cst_8 = arith.constant 1.600000e+01 : f32
    %15 = vector.broadcast %cst_8 : f32 to vector<64x1xf32>
    %16 = arith.divf %14, %15 : vector<64x1xf32>
    %17 = vector.broadcast %7 : vector<64x1xf32> to vector<64x16xf32>
    %18 = arith.subf %1, %17 : vector<64x16xf32>
    %cst_9 = arith.constant 9.99999974E-6 : f32
    %19 = vector.broadcast %cst_9 : f32 to vector<64x1xf32>
    %20 = arith.addf %16, %19 : vector<64x1xf32>
    %21 = math.rsqrt %20 : vector<64x1xf32>
    %22 = vector.broadcast %21 : vector<64x1xf32> to vector<64x16xf32>
    %23 = arith.mulf %18, %22 : vector<64x16xf32>
    %24 = vector.broadcast %2 : vector<1x16xf32> to vector<64x16xf32>
    %25 = arith.mulf %23, %24 : vector<64x16xf32>
    %26 = vector.broadcast %3 : vector<1x16xf32> to vector<64x16xf32>
    %27 = arith.addf %25, %26 : vector<64x16xf32>
    %c0_10 = arith.constant 0 : index
    %c0_11 = arith.constant 0 : index
    %28 = vector.load %arg4[%c0_10, %c0_11] : memref<16x32xf32, #tpu.memory_space<vmem>>, vector<16x32xf32>
    %29 = arith.truncf %27 : vector<64x16xf32> to vector<64x16xbf16>
    %30 = arith.truncf %28 : vector<16x32xf32> to vector<16x32xbf16>
    %cst_12 = arith.constant dense<0.000000e+00> : vector<64x32xf32>
    %31 = tpu.matmul %29, %30, %cst_12 {dimension_numbers = #tpu.dot_dimension_numbers<[1], [0], [0], [1], [0, 0, 1, 1], [], []>} : vector<64x16xbf16>, vector<16x32xbf16>, vector<64x32xf32> -> vector<64x32xf32>
    %c0_13 = arith.constant 0 : index
    %c0_14 = arith.constant 0 : index
    %32 = vector.load %arg5[%c0_13, %c0_14] : memref<16x32xf32, #tpu.memory_space<vmem>>, vector<16x32xf32>
    %33 = arith.truncf %27 : vector<64x16xf32> to vector<64x16xbf16>
    %34 = arith.truncf %32 : vector<16x32xf32> to vector<16x32xbf16>
    %cst_15 = arith.constant dense<0.000000e+00> : vector<64x32xf32>
    %35 = tpu.matmul %33, %34, %cst_15 {dimension_numbers = #tpu.dot_dimension_numbers<[1], [0], [0], [1], [0, 0, 1, 1], [], []>} : vector<64x16xbf16>, vector<16x32xbf16>, vector<64x32xf32> -> vector<64x32xf32>
    %c0_16 = arith.constant 0 : index
    %c0_17 = arith.constant 0 : index
    %36 = vector.load %arg6[%c0_16, %c0_17] : memref<4x32xf32, #tpu.memory_space<vmem>>, vector<4x32xf32>
    %c0_18 = arith.constant 0 : index
    %c0_19 = arith.constant 0 : index
    %37 = vector.load %arg7[%c0_18, %c0_19] : memref<1x32xf32, #tpu.memory_space<vmem>>, vector<1x32xf32>
    %38 = vector.shape_cast %37 : vector<1x32xf32> to vector<1x32xf32>
    %39 = vector.broadcast %38 : vector<1x32xf32> to vector<64x32xf32>
    %cst_20 = arith.constant 0.000000e+00 : f32
    %40 = vector.broadcast %cst_20 : f32 to vector<3x32xf32>
    %41 = vector.extract_strided_slice %31 {offsets = [0, 0], sizes = [61, 32], strides = [1, 1]} : vector<64x32xf32> to vector<61x32xf32>
    %42 = tpu.concatenate %40, %41 in 0 : vector<3x32xf32>, vector<61x32xf32> -> vector<64x32xf32>
    %43 = vector.extract_strided_slice %36 {offsets = [0, 0], sizes = [1, 32], strides = [1, 1]} : vector<4x32xf32> to vector<1x32xf32>
    %44 = vector.broadcast %43 : vector<1x32xf32> to vector<64x32xf32>
    %45 = arith.mulf %42, %44 : vector<64x32xf32>
    %46 = arith.addf %39, %45 : vector<64x32xf32>
    %cst_21 = arith.constant 0.000000e+00 : f32
    %47 = vector.broadcast %cst_21 : f32 to vector<2x32xf32>
    %48 = vector.extract_strided_slice %31 {offsets = [0, 0], sizes = [62, 32], strides = [1, 1]} : vector<64x32xf32> to vector<62x32xf32>
    %49 = tpu.concatenate %47, %48 in 0 : vector<2x32xf32>, vector<62x32xf32> -> vector<64x32xf32>
    %50 = vector.extract_strided_slice %36 {offsets = [1, 0], sizes = [1, 32], strides = [1, 1]} : vector<4x32xf32> to vector<1x32xf32>
    %51 = vector.broadcast %50 : vector<1x32xf32> to vector<64x32xf32>
    %52 = arith.mulf %49, %51 : vector<64x32xf32>
    %53 = arith.addf %46, %52 : vector<64x32xf32>
    %cst_22 = arith.constant 0.000000e+00 : f32
    %54 = vector.broadcast %cst_22 : f32 to vector<1x32xf32>
    %55 = vector.extract_strided_slice %31 {offsets = [0, 0], sizes = [63, 32], strides = [1, 1]} : vector<64x32xf32> to vector<63x32xf32>
    %56 = tpu.concatenate %54, %55 in 0 : vector<1x32xf32>, vector<63x32xf32> -> vector<64x32xf32>
    %57 = vector.extract_strided_slice %36 {offsets = [2, 0], sizes = [1, 32], strides = [1, 1]} : vector<4x32xf32> to vector<1x32xf32>
    %58 = vector.broadcast %57 : vector<1x32xf32> to vector<64x32xf32>
    %59 = arith.mulf %56, %58 : vector<64x32xf32>
    %60 = arith.addf %53, %59 : vector<64x32xf32>
    %61 = vector.extract_strided_slice %36 {offsets = [3, 0], sizes = [1, 32], strides = [1, 1]} : vector<4x32xf32> to vector<1x32xf32>
    %62 = vector.broadcast %61 : vector<1x32xf32> to vector<64x32xf32>
    %63 = arith.mulf %31, %62 : vector<64x32xf32>
    %64 = arith.addf %60, %63 : vector<64x32xf32>
    %cst_23 = arith.constant 5.000000e-01 : f32
    %65 = vector.broadcast %cst_23 : f32 to vector<64x32xf32>
    %66 = arith.mulf %65, %64 : vector<64x32xf32>
    %67 = math.tanh %66 : vector<64x32xf32>
    %cst_24 = arith.constant 1.000000e+00 : f32
    %68 = vector.broadcast %cst_24 : f32 to vector<64x32xf32>
    %69 = arith.addf %67, %68 : vector<64x32xf32>
    %cst_25 = arith.constant 5.000000e-01 : f32
    %70 = vector.broadcast %cst_25 : f32 to vector<64x32xf32>
    %71 = arith.mulf %70, %69 : vector<64x32xf32>
    %72 = arith.mulf %64, %71 : vector<64x32xf32>
    %c0_26 = arith.constant 0 : index
    %c0_27 = arith.constant 0 : index
    %73 = vector.load %arg8[%c0_26, %c0_27] : memref<32x4xf32, #tpu.memory_space<vmem>>, vector<32x4xf32>
    %74 = arith.truncf %72 : vector<64x32xf32> to vector<64x32xbf16>
    %75 = arith.truncf %73 : vector<32x4xf32> to vector<32x4xbf16>
    %cst_28 = arith.constant dense<0.000000e+00> : vector<64x4xf32>
    %76 = tpu.matmul %74, %75, %cst_28 {dimension_numbers = #tpu.dot_dimension_numbers<[1], [0], [0], [1], [0, 0, 1, 1], [], []>} : vector<64x32xbf16>, vector<32x4xbf16>, vector<64x4xf32> -> vector<64x4xf32>
    %c0_29 = arith.constant 0 : index
    %c0_30 = arith.constant 0 : index
    %77 = vector.load %arg9[%c0_29, %c0_30] : memref<32x64xf32, #tpu.memory_space<vmem>>, vector<32x64xf32>
    %78 = arith.truncf %72 : vector<64x32xf32> to vector<64x32xbf16>
    %79 = arith.truncf %77 : vector<32x64xf32> to vector<32x64xbf16>
    %cst_31 = arith.constant dense<0.000000e+00> : vector<64x64xf32>
    %80 = tpu.matmul %78, %79, %cst_31 {dimension_numbers = #tpu.dot_dimension_numbers<[1], [0], [0], [1], [0, 0, 1, 1], [], []>} : vector<64x32xbf16>, vector<32x64xbf16>, vector<64x64xf32> -> vector<64x64xf32>
    %c0_32 = arith.constant 0 : index
    %c0_33 = arith.constant 0 : index
    %81 = vector.load %arg10[%c0_32, %c0_33] : memref<32x64xf32, #tpu.memory_space<vmem>>, vector<32x64xf32>
    %82 = arith.truncf %72 : vector<64x32xf32> to vector<64x32xbf16>
    %83 = arith.truncf %81 : vector<32x64xf32> to vector<32x64xbf16>
    %cst_34 = arith.constant dense<0.000000e+00> : vector<64x64xf32>
    %84 = tpu.matmul %82, %83, %cst_34 {dimension_numbers = #tpu.dot_dimension_numbers<[1], [0], [0], [1], [0, 0, 1, 1], [], []>} : vector<64x32xbf16>, vector<32x64xbf16>, vector<64x64xf32> -> vector<64x64xf32>
    %c0_35 = arith.constant 0 : index
    %c0_36 = arith.constant 0 : index
    %85 = vector.load %arg11[%c0_35, %c0_36] : memref<4x32xf32, #tpu.memory_space<vmem>>, vector<4x32xf32>
    %86 = arith.truncf %76 : vector<64x4xf32> to vector<64x4xbf16>
    %87 = arith.truncf %85 : vector<4x32xf32> to vector<4x32xbf16>
    %cst_37 = arith.constant dense<0.000000e+00> : vector<64x32xf32>
    %88 = tpu.matmul %86, %87, %cst_37 {dimension_numbers = #tpu.dot_dimension_numbers<[1], [0], [0], [1], [0, 0, 1, 1], [], []>} : vector<64x4xbf16>, vector<4x32xbf16>, vector<64x32xf32> -> vector<64x32xf32>
    %c0_38 = arith.constant 0 : index
    %c0_39 = arith.constant 0 : index
    %89 = vector.load %arg12[%c0_38, %c0_39] : memref<1x32xf32, #tpu.memory_space<vmem>>, vector<1x32xf32>
    %90 = vector.broadcast %89 : vector<1x32xf32> to vector<64x32xf32>
    %91 = arith.addf %88, %90 : vector<64x32xf32>
    %cst_40 = arith.constant 2.000000e+01 : f32
    %92 = vector.broadcast %cst_40 : f32 to vector<64x32xf32>
    %93 = arith.cmpf ogt, %91, %92 : vector<64x32xf32>
    %cst_41 = arith.constant 2.000000e+01 : f32
    %94 = vector.broadcast %cst_41 : f32 to vector<64x32xf32>
    %95 = arith.minimumf %91, %94 : vector<64x32xf32>
    %96 = math.exp %95 : vector<64x32xf32>
    %cst_42 = arith.constant 1.000000e+00 : f32
    %97 = vector.broadcast %cst_42 : f32 to vector<64x32xf32>
    %98 = arith.addf %97, %96 : vector<64x32xf32>
    %99 = math.log %98 : vector<64x32xf32>
    %100 = arith.select %93, %91, %99 : vector<64x32xi1>, vector<64x32xf32>
    %c0_43 = arith.constant 0 : index
    %c0_44 = arith.constant 0 : index
    %101 = vector.load %arg19[%c0_43, %c0_44] : memref<32x512xf32, #tpu.memory_space<vmem>>, vector<32x512xf32>
    %c0_45 = arith.constant 0 : index
    %c0_46 = arith.constant 0 : index
    %102 = vector.load %arg20[%c0_45, %c0_46] : memref<64x512xf32, #tpu.memory_space<vmem>>, vector<64x512xf32>
    %cst_47 = arith.constant dense<0.000000e+00> : vector<64x512xf32>
    %103 = tpu.matmul %100, %101, %cst_47 {dimension_numbers = #tpu.dot_dimension_numbers<[1], [0], [0], [1], [0, 0, 1, 1], [], []>} : vector<64x32xf32>, vector<32x512xf32>, vector<64x512xf32> -> vector<64x512xf32>
    %104 = arith.mulf %100, %72 : vector<64x32xf32>
    %cst_48 = arith.constant dense<0.000000e+00> : vector<64x512xf32>
    %105 = tpu.matmul %104, %101, %cst_48 {dimension_numbers = #tpu.dot_dimension_numbers<[1], [0], [0], [1], [0, 0, 1, 1], [], []>} : vector<64x32xf32>, vector<32x512xf32>, vector<64x512xf32> -> vector<64x512xf32>
    %cst_49 = arith.constant dense<0.000000e+00> : vector<64x512xf32>
    %106 = tpu.matmul %80, %102, %cst_49 {dimension_numbers = #tpu.dot_dimension_numbers<[1], [0], [0], [1], [0, 0, 1, 1], [], []>} : vector<64x64xf32>, vector<64x512xf32>, vector<64x512xf32> -> vector<64x512xf32>
    %cst_50 = arith.constant dense<0.000000e+00> : vector<64x512xf32>
    %107 = tpu.matmul %84, %102, %cst_50 {dimension_numbers = #tpu.dot_dimension_numbers<[1], [0], [0], [1], [0, 0, 1, 1], [], []>} : vector<64x64xf32>, vector<64x512xf32>, vector<64x512xf32> -> vector<64x512xf32>
    %c0_51 = arith.constant 0 : index
    %c0_52 = arith.constant 0 : index
    %108 = vector.load %arg13[%c0_51, %c0_52] : memref<1x512xf32, #tpu.memory_space<vmem>>, vector<1x512xf32>
    %109 = vector.broadcast %108 : vector<1x512xf32> to vector<64x512xf32>
    %110 = arith.mulf %103, %109 : vector<64x512xf32>
    %111 = math.exp %110 : vector<64x512xf32>
    %112 = arith.mulf %105, %106 : vector<64x512xf32>
    %cst_53 = arith.constant 1.000000e+00 : f32
    %113 = vector.broadcast %cst_53 : f32 to vector<1x512xf32>
    %114 = vector.extract_strided_slice %111 {offsets = [0, 0], sizes = [63, 512], strides = [1, 1]} : vector<64x512xf32> to vector<63x512xf32>
    %115 = tpu.concatenate %113, %114 in 0 : vector<1x512xf32>, vector<63x512xf32> -> vector<64x512xf32>
    %cst_54 = arith.constant 0.000000e+00 : f32
    %116 = vector.broadcast %cst_54 : f32 to vector<1x512xf32>
    %117 = vector.extract_strided_slice %112 {offsets = [0, 0], sizes = [63, 512], strides = [1, 1]} : vector<64x512xf32> to vector<63x512xf32>
    %118 = tpu.concatenate %116, %117 in 0 : vector<1x512xf32>, vector<63x512xf32> -> vector<64x512xf32>
    %119 = arith.mulf %111, %118 : vector<64x512xf32>
    %120 = arith.addf %112, %119 : vector<64x512xf32>
    %121 = arith.mulf %111, %115 : vector<64x512xf32>
    %cst_55 = arith.constant 1.000000e+00 : f32
    %122 = vector.broadcast %cst_55 : f32 to vector<2x512xf32>
    %123 = vector.extract_strided_slice %121 {offsets = [0, 0], sizes = [62, 512], strides = [1, 1]} : vector<64x512xf32> to vector<62x512xf32>
    %124 = tpu.concatenate %122, %123 in 0 : vector<2x512xf32>, vector<62x512xf32> -> vector<64x512xf32>
    %cst_56 = arith.constant 0.000000e+00 : f32
    %125 = vector.broadcast %cst_56 : f32 to vector<2x512xf32>
    %126 = vector.extract_strided_slice %120 {offsets = [0, 0], sizes = [62, 512], strides = [1, 1]} : vector<64x512xf32> to vector<62x512xf32>
    %127 = tpu.concatenate %125, %126 in 0 : vector<2x512xf32>, vector<62x512xf32> -> vector<64x512xf32>
    %128 = arith.mulf %121, %127 : vector<64x512xf32>
    %129 = arith.addf %120, %128 : vector<64x512xf32>
    %130 = arith.mulf %121, %124 : vector<64x512xf32>
    %cst_57 = arith.constant 1.000000e+00 : f32
    %131 = vector.broadcast %cst_57 : f32 to vector<4x512xf32>
    %132 = vector.extract_strided_slice %130 {offsets = [0, 0], sizes = [60, 512], strides = [1, 1]} : vector<64x512xf32> to vector<60x512xf32>
    %133 = tpu.concatenate %131, %132 in 0 : vector<4x512xf32>, vector<60x512xf32> -> vector<64x512xf32>
    %cst_58 = arith.constant 0.000000e+00 : f32
    %134 = vector.broadcast %cst_58 : f32 to vector<4x512xf32>
    %135 = vector.extract_strided_slice %129 {offsets = [0, 0], sizes = [60, 512], strides = [1, 1]} : vector<64x512xf32> to vector<60x512xf32>
    %136 = tpu.concatenate %134, %135 in 0 : vector<4x512xf32>, vector<60x512xf32> -> vector<64x512xf32>
    %137 = arith.mulf %130, %136 : vector<64x512xf32>
    %138 = arith.addf %129, %137 : vector<64x512xf32>
    %139 = arith.mulf %130, %133 : vector<64x512xf32>
    %cst_59 = arith.constant 1.000000e+00 : f32
    %140 = vector.broadcast %cst_59 : f32 to vector<8x512xf32>
    %141 = vector.extract_strided_slice %139 {offsets = [0, 0], sizes = [56, 512], strides = [1, 1]} : vector<64x512xf32> to vector<56x512xf32>
    %142 = tpu.concatenate %140, %141 in 0 : vector<8x512xf32>, vector<56x512xf32> -> vector<64x512xf32>
    %cst_60 = arith.constant 0.000000e+00 : f32
    %143 = vector.broadcast %cst_60 : f32 to vector<8x512xf32>
    %144 = vector.extract_strided_slice %138 {offsets = [0, 0], sizes = [56, 512], strides = [1, 1]} : vector<64x512xf32> to vector<56x512xf32>
    %145 = tpu.concatenate %143, %144 in 0 : vector<8x512xf32>, vector<56x512xf32> -> vector<64x512xf32>
    %146 = arith.mulf %139, %145 : vector<64x512xf32>
    %147 = arith.addf %138, %146 : vector<64x512xf32>
    %148 = arith.mulf %139, %142 : vector<64x512xf32>
    %cst_61 = arith.constant 1.000000e+00 : f32
    %149 = vector.broadcast %cst_61 : f32 to vector<16x512xf32>
    %150 = vector.extract_strided_slice %148 {offsets = [0, 0], sizes = [48, 512], strides = [1, 1]} : vector<64x512xf32> to vector<48x512xf32>
    %151 = tpu.concatenate %149, %150 in 0 : vector<16x512xf32>, vector<48x512xf32> -> vector<64x512xf32>
    %cst_62 = arith.constant 0.000000e+00 : f32
    %152 = vector.broadcast %cst_62 : f32 to vector<16x512xf32>
    %153 = vector.extract_strided_slice %147 {offsets = [0, 0], sizes = [48, 512], strides = [1, 1]} : vector<64x512xf32> to vector<48x512xf32>
    %154 = tpu.concatenate %152, %153 in 0 : vector<16x512xf32>, vector<48x512xf32> -> vector<64x512xf32>
    %155 = arith.mulf %148, %154 : vector<64x512xf32>
    %156 = arith.addf %147, %155 : vector<64x512xf32>
    %157 = arith.mulf %148, %151 : vector<64x512xf32>
    %cst_63 = arith.constant 0.000000e+00 : f32
    %158 = vector.broadcast %cst_63 : f32 to vector<32x512xf32>
    %159 = vector.extract_strided_slice %156 {offsets = [0, 0], sizes = [32, 512], strides = [1, 1]} : vector<64x512xf32> to vector<32x512xf32>
    %160 = tpu.concatenate %158, %159 in 0 : vector<32x512xf32>, vector<32x512xf32> -> vector<64x512xf32>
    %161 = arith.mulf %157, %160 : vector<64x512xf32>
    %162 = arith.addf %156, %161 : vector<64x512xf32>
    %163 = arith.mulf %162, %107 : vector<64x512xf32>
    %c0_64 = arith.constant 0 : index
    %c0_65 = arith.constant 0 : index
    %164 = vector.load %arg21[%c0_64, %c0_65] : memref<512x32xf32, #tpu.memory_space<vmem>>, vector<512x32xf32>
    %cst_66 = arith.constant dense<0.000000e+00> : vector<64x32xf32>
    %165 = tpu.matmul %163, %164, %cst_66 {dimension_numbers = #tpu.dot_dimension_numbers<[1], [0], [0], [1], [0, 0, 1, 1], [], []>} : vector<64x512xf32>, vector<512x32xf32>, vector<64x32xf32> -> vector<64x32xf32>
    %c0_67 = arith.constant 0 : index
    %c0_68 = arith.constant 0 : index
    %166 = vector.load %arg14[%c0_67, %c0_68] : memref<1x32xf32, #tpu.memory_space<vmem>>, vector<1x32xf32>
    %167 = vector.broadcast %166 : vector<1x32xf32> to vector<64x32xf32>
    %168 = arith.mulf %72, %167 : vector<64x32xf32>
    %169 = arith.addf %165, %168 : vector<64x32xf32>
    %cst_69 = arith.constant 5.000000e-01 : f32
    %170 = vector.broadcast %cst_69 : f32 to vector<64x32xf32>
    %171 = arith.mulf %170, %35 : vector<64x32xf32>
    %172 = math.tanh %171 : vector<64x32xf32>
    %cst_70 = arith.constant 1.000000e+00 : f32
    %173 = vector.broadcast %cst_70 : f32 to vector<64x32xf32>
    %174 = arith.addf %172, %173 : vector<64x32xf32>
    %cst_71 = arith.constant 5.000000e-01 : f32
    %175 = vector.broadcast %cst_71 : f32 to vector<64x32xf32>
    %176 = arith.mulf %175, %174 : vector<64x32xf32>
    %177 = arith.mulf %35, %176 : vector<64x32xf32>
    %178 = arith.mulf %169, %177 : vector<64x32xf32>
    %c0_72 = arith.constant 0 : index
    %c0_73 = arith.constant 0 : index
    %179 = vector.load %arg15[%c0_72, %c0_73] : memref<32x16xf32, #tpu.memory_space<vmem>>, vector<32x16xf32>
    %180 = arith.truncf %178 : vector<64x32xf32> to vector<64x32xbf16>
    %181 = arith.truncf %179 : vector<32x16xf32> to vector<32x16xbf16>
    %cst_74 = arith.constant dense<0.000000e+00> : vector<64x16xf32>
    %182 = tpu.matmul %180, %181, %cst_74 {dimension_numbers = #tpu.dot_dimension_numbers<[1], [0], [0], [1], [0, 0, 1, 1], [], []>} : vector<64x32xbf16>, vector<32x16xbf16>, vector<64x16xf32> -> vector<64x16xf32>
    %c0_75 = arith.constant 0 : index
    %c0_76 = arith.constant 0 : index
    %183 = vector.load %arg16[%c0_75, %c0_76] : memref<1x1xf32, #tpu.memory_space<vmem>>, vector<1x1xf32>
    %184 = vector.broadcast %183 : vector<1x1xf32> to vector<64x16xf32>
    %185 = arith.mulf %184, %27 : vector<64x16xf32>
    %186 = arith.addf %182, %185 : vector<64x16xf32>
    %cst_77 = arith.constant dense<0.000000e+00> : vector<64xf32>
    %187 = vector.multi_reduction <add>, %186, %cst_77 [1] : vector<64x16xf32> to vector<64xf32>
    %188 = vector.shape_cast %187 : vector<64xf32> to vector<64x1xf32>
    %cst_78 = arith.constant 1.600000e+01 : f32
    %189 = vector.broadcast %cst_78 : f32 to vector<64x1xf32>
    %190 = arith.divf %188, %189 : vector<64x1xf32>
    %191 = vector.broadcast %190 : vector<64x1xf32> to vector<64x16xf32>
    %192 = arith.subf %186, %191 : vector<64x16xf32>
    %193 = vector.broadcast %190 : vector<64x1xf32> to vector<64x16xf32>
    %194 = arith.subf %186, %193 : vector<64x16xf32>
    %195 = arith.mulf %192, %194 : vector<64x16xf32>
    %cst_79 = arith.constant dense<0.000000e+00> : vector<64xf32>
    %196 = vector.multi_reduction <add>, %195, %cst_79 [1] : vector<64x16xf32> to vector<64xf32>
    %197 = vector.shape_cast %196 : vector<64xf32> to vector<64x1xf32>
    %cst_80 = arith.constant 1.600000e+01 : f32
    %198 = vector.broadcast %cst_80 : f32 to vector<64x1xf32>
    %199 = arith.divf %197, %198 : vector<64x1xf32>
    %200 = vector.broadcast %190 : vector<64x1xf32> to vector<64x16xf32>
    %201 = arith.subf %186, %200 : vector<64x16xf32>
    %cst_81 = arith.constant 9.99999974E-6 : f32
    %202 = vector.broadcast %cst_81 : f32 to vector<64x1xf32>
    %203 = arith.addf %199, %202 : vector<64x1xf32>
    %204 = math.rsqrt %203 : vector<64x1xf32>
    %205 = vector.broadcast %204 : vector<64x1xf32> to vector<64x16xf32>
    %206 = arith.mulf %201, %205 : vector<64x16xf32>
    %207 = vector.broadcast %2 : vector<1x16xf32> to vector<64x16xf32>
    %208 = arith.mulf %206, %207 : vector<64x16xf32>
    %209 = vector.broadcast %3 : vector<1x16xf32> to vector<64x16xf32>
    %210 = arith.addf %208, %209 : vector<64x16xf32>
    %c0_82 = arith.constant 0 : index
    %c0_83 = arith.constant 0 : index
    %211 = vector.load %arg17[%c0_82, %c0_83] : memref<16x128xf32, #tpu.memory_space<vmem>>, vector<16x128xf32>
    %212 = arith.truncf %210 : vector<64x16xf32> to vector<64x16xbf16>
    %213 = arith.truncf %211 : vector<16x128xf32> to vector<16x128xbf16>
    %cst_84 = arith.constant dense<0.000000e+00> : vector<64x128xf32>
    %214 = tpu.matmul %212, %213, %cst_84 {dimension_numbers = #tpu.dot_dimension_numbers<[1], [0], [0], [1], [0, 0, 1, 1], [], []>} : vector<64x16xbf16>, vector<16x128xbf16>, vector<64x128xf32> -> vector<64x128xf32>
    %c0_85 = arith.constant 0 : index
    %c0_86 = arith.constant 0 : index
    %215 = vector.load %arg18[%c0_85, %c0_86] : memref<1x128xf32, #tpu.memory_space<vmem>>, vector<1x128xf32>
    %216 = vector.broadcast %215 : vector<1x128xf32> to vector<64x128xf32>
    %217 = arith.addf %214, %216 : vector<64x128xf32>
    %c0_87 = arith.constant 0 : index
    %c0_88 = arith.constant 0 : index
    %c0_89 = arith.constant 0 : index
    %218 = vector.load %arg22[%c0_87, %c0_88, %c0_89] : memref<1x64x128xf32, #tpu.memory_space<vmem>>, vector<1x64x128xf32>
    %219 = vector.shape_cast %218 : vector<1x64x128xf32> to vector<64x128xf32>
    %220 = vector.shape_cast %217 : vector<64x128xf32> to vector<1x64x128xf32>
    tpu.vector_store %arg22[%c0_87, %c0_88, %c0_89], %220 {strides = array<i32>} : memref<1x64x128xf32, #tpu.memory_space<vmem>>, vector<1x64x128xf32>,
    return
  }
  func.func @transform_0(%arg0: i32) -> (i32, i32, i32) {
    %c0_i32 = arith.constant 0 : i32
    %c0_i32_0 = arith.constant 0 : i32
    %c0_i32_1 = arith.constant 0 : i32
    return %arg0, %c0_i32, %c0_i32_0 : i32, i32, i32
  }
  func.func @transform_1(%arg0: i32) -> (i32, i32) {
    %c0_i32 = arith.constant 0 : i32
    %c0_i32_0 = arith.constant 0 : i32
    %c0_i32_1 = arith.constant 0 : i32
    return %c0_i32, %c0_i32_0 : i32, i32
  }
  func.func @transform_2(%arg0: i32) -> (i32, i32) {
    %c0_i32 = arith.constant 0 : i32
    %c0_i32_0 = arith.constant 0 : i32
    %c0_i32_1 = arith.constant 0 : i32
    return %c0_i32, %c0_i32_0 : i32, i32
  }
  func.func @transform_3(%arg0: i32) -> (i32, i32) {
    %c0_i32 = arith.constant 0 : i32
    %c0_i32_0 = arith.constant 0 : i32
    %c0_i32_1 = arith.constant 0 : i32
    return %c0_i32, %c0_i32_0 : i32, i32
  }
  func.func @transform_4(%arg0: i32) -> (i32, i32) {
    %c0_i32 = arith.constant 0 : i32
    %c0_i32_0 = arith.constant 0 : i32
    %c0_i32_1 = arith.constant 0 : i32
    return %c0_i32, %c0_i32_0 : i32, i32
  }
  func.func @transform_5(%arg0: i32) -> (i32, i32) {
    %c0_i32 = arith.constant 0 : i32
    %c0_i32_0 = arith.constant 0 : i32
    %c0_i32_1 = arith.constant 0 : i32
    return %c0_i32, %c0_i32_0 : i32, i32
  }
  func.func @transform_6(%arg0: i32) -> (i32, i32) {
    %c0_i32 = arith.constant 0 : i32
    %c0_i32_0 = arith.constant 0 : i32
    %c0_i32_1 = arith.constant 0 : i32
    return %c0_i32, %c0_i32_0 : i32, i32
  }
  func.func @transform_7(%arg0: i32) -> (i32, i32) {
    %c0_i32 = arith.constant 0 : i32
    %c0_i32_0 = arith.constant 0 : i32
    %c0_i32_1 = arith.constant 0 : i32
    return %c0_i32, %c0_i32_0 : i32, i32
  }
  func.func @transform_8(%arg0: i32) -> (i32, i32) {
    %c0_i32 = arith.constant 0 : i32
    %c0_i32_0 = arith.constant 0 : i32
    %c0_i32_1 = arith.constant 0 : i32
    return %c0_i32, %c0_i32_0 : i32, i32
  }
  func.func @transform_9(%arg0: i32) -> (i32, i32) {
    %c0_i32 = arith.constant 0 : i32
    %c0_i32_0 = arith.constant 0 : i32
    %c0_i32_1 = arith.constant 0 : i32
    return %c0_i32, %c0_i32_0 : i32, i32
  }
  func.func @transform_10(%arg0: i32) -> (i32, i32) {
    %c0_i32 = arith.constant 0 : i32
    %c0_i32_0 = arith.constant 0 : i32
    %c0_i32_1 = arith.constant 0 : i32
    return %c0_i32, %c0_i32_0 : i32, i32
  }
  func.func @transform_11(%arg0: i32) -> (i32, i32) {
    %c0_i32 = arith.constant 0 : i32
    %c0_i32_0 = arith.constant 0 : i32
    %c0_i32_1 = arith.constant 0 : i32
    return %c0_i32, %c0_i32_0 : i32, i32
  }
  func.func @transform_12(%arg0: i32) -> (i32, i32) {
    %c0_i32 = arith.constant 0 : i32
    %c0_i32_0 = arith.constant 0 : i32
    %c0_i32_1 = arith.constant 0 : i32
    return %c0_i32, %c0_i32_0 : i32, i32
  }
  func.func @transform_13(%arg0: i32) -> (i32, i32) {
    %c0_i32 = arith.constant 0 : i32
    %c0_i32_0 = arith.constant 0 : i32
    %c0_i32_1 = arith.constant 0 : i32
    return %c0_i32, %c0_i32_0 : i32, i32
  }
  func.func @transform_14(%arg0: i32) -> (i32, i32) {
    %c0_i32 = arith.constant 0 : i32
    %c0_i32_0 = arith.constant 0 : i32
    %c0_i32_1 = arith.constant 0 : i32
    return %c0_i32, %c0_i32_0 : i32, i32
  }
  func.func @transform_15(%arg0: i32) -> (i32, i32) {
    %c0_i32 = arith.constant 0 : i32
    %c0_i32_0 = arith.constant 0 : i32
    %c0_i32_1 = arith.constant 0 : i32
    return %c0_i32, %c0_i32_0 : i32, i32
  }
  func.func @transform_16(%arg0: i32) -> (i32, i32) {
    %c0_i32 = arith.constant 0 : i32
    %c0_i32_0 = arith.constant 0 : i32
    %c0_i32_1 = arith.constant 0 : i32
    return %c0_i32, %c0_i32_0 : i32, i32
  }
  func.func @transform_17(%arg0: i32) -> (i32, i32) {
    %c0_i32 = arith.constant 0 : i32
    %c0_i32_0 = arith.constant 0 : i32
    %c0_i32_1 = arith.constant 0 : i32
    return %c0_i32, %c0_i32_0 : i32, i32
  }
  func.func @transform_18(%arg0: i32) -> (i32, i32) {
    %c0_i32 = arith.constant 0 : i32
    %c0_i32_0 = arith.constant 0 : i32
    %c0_i32_1 = arith.constant 0 : i32
    return %c0_i32, %c0_i32_0 : i32, i32
  }
  func.func @transform_19(%arg0: i32) -> (i32, i32) {
    %c0_i32 = arith.constant 0 : i32
    %c0_i32_0 = arith.constant 0 : i32
    %c0_i32_1 = arith.constant 0 : i32
    return %c0_i32, %c0_i32_0 : i32, i32
  }
  func.func @transform_20(%arg0: i32) -> (i32, i32) {
    %c0_i32 = arith.constant 0 : i32
    %c0_i32_0 = arith.constant 0 : i32
    %c0_i32_1 = arith.constant 0 : i32
    return %c0_i32, %c0_i32_0 : i32, i32
  }
  func.func @transform_21(%arg0: i32) -> (i32, i32, i32) {
    %c0_i32 = arith.constant 0 : i32
    %c0_i32_0 = arith.constant 0 : i32
    %c0_i32_1 = arith.constant 0 : i32
    return %arg0, %c0_i32, %c0_i32_0 : i32, i32, i32
  }
}

</mosaic_0001>

<llo_original>
// kernel: tpu_custom_call.1
$region0: #{tpu_custom_call.1}
  #allocation0 [shape = 'u32[]', space=smem, size = 0x4, offset = 0x4, fixed_abs, tag = 'smem constant byte address 0x4 - core index']
  #allocation1 [shape = 'u32[144,128]{1,0:T(1,128)}', space=vmem, size = 0x12000, scoped, tag = 'internal scratch']
  #allocation2 [shape = 'f32[1,1]{1,0:T(1,128)S(1)}', space=vmem, size = 0x200, scoped, tag = 'scoped memory for tpu_custom_call.1']
  %s0 = inlined_call_operand.vmem [shape: f32[2,64,16], index: 0, kind: input, shape index: {}]
  %s1 = inlined_call_operand.vmem [shape: f32[1,16], index: 1, kind: input, shape index: {}]
  %s2 = inlined_call_operand.vmem [shape: f32[1,16], index: 2, kind: input, shape index: {}]
  %s3 = inlined_call_operand.vmem [shape: f32[16,32], index: 3, kind: input, shape index: {}]
  %s4 = inlined_call_operand.vmem [shape: f32[16,32], index: 4, kind: input, shape index: {}]
  %s5 = inlined_call_operand.vmem [shape: f32[4,32], index: 5, kind: input, shape index: {}]
  %s6 = inlined_call_operand.vmem [shape: f32[1,32], index: 6, kind: input, shape index: {}]
  %s7 = inlined_call_operand.vmem [shape: f32[32,4], index: 7, kind: input, shape index: {}]
  %s8 = inlined_call_operand.vmem [shape: f32[32,64], index: 8, kind: input, shape index: {}]
  %s9 = inlined_call_operand.vmem [shape: f32[32,64], index: 9, kind: input, shape index: {}]
  %s10 = inlined_call_operand.vmem [shape: f32[4,32], index: 10, kind: input, shape index: {}]
  %s11 = inlined_call_operand.vmem [shape: f32[1,32], index: 11, kind: input, shape index: {}]
  %s12 = inlined_call_operand.vmem [shape: f32[1,512], index: 12, kind: input, shape index: {}]
  %s13 = inlined_call_operand.vmem [shape: f32[1,32], index: 13, kind: input, shape index: {}]
  %s14 = inlined_call_operand.vmem [shape: f32[32,16], index: 14, kind: input, shape index: {}]
  %s15 = inlined_call_operand.<no memory space> [shape: f32[1,1], index: 15, kind: input, shape index: {}]
  %s16 = inlined_call_operand.vmem [shape: f32[16,128], index: 16, kind: input, shape index: {}]
  %s17 = inlined_call_operand.vmem [shape: f32[1,128], index: 17, kind: input, shape index: {}]
  %s18 = inlined_call_operand.vmem [shape: f32[32,512], index: 18, kind: input, shape index: {}]
  %s19 = inlined_call_operand.vmem [shape: f32[64,512], index: 19, kind: input, shape index: {}]
  %s20 = inlined_call_operand.vmem [shape: f32[512,32], index: 20, kind: input, shape index: {}]
  %s21 = inlined_call_operand.hbm [shape: f32[2,64,128], index: 21, kind: output, shape index: {}]
  %s22 = sld [smem:[#allocation0]]
  $region117: #{tpu_custom_call.1} parent=0
    _
  %s24 = ssub.s32 1, %s22
  %s25 = scalar_select 0, %s24, %s22
  %v26 = vstv %s15
  %27 = vst [vmem:[#allocation2] sm:$0x1] %v26
  $region1: #{tpu_custom_call.1} parent=0
    #allocation3 [shape = 'u8[65536]{0}', space=vmem, size = 0x10000, scoped, tag = 'output window, operand 0']
    #allocation4 [shape = 's32[2]{0}', space=sflag, size = 0x8, scoped, tag = 'scoped memory for tpu_custom_call.1']
    %28 = vsyncpa [#allocation4], 0
    %s29 = scalar_lea.sflag [#allocation4], 1
    %30 = vsyncpa %s29, 0
    loop: start=0, step=1, limit=4
    $region2: #{tpu_custom_call.1} parent=1 // loop_pre_header
      _
    $region3: #{tpu_custom_call.1} parent=1 // loop_header
      %s32 = sphi 0, %s36
      %p33 = scmp.ge.s32.totalorder %s32, 4
      %s42 = sphi 0, %s44
      %s45 = sphi 0, %s42
      %s46 = sphi 0, %s45
      %s62 = sphi 0, %s46
      %s66 = sphi 0, %s66
      %s68 = sphi 0, %s66
      %s69 = sphi 0, %s68
      %s83 = sphi 0, %s69
      %s87 = sphi 0, %s87
      %s89 = sphi 0, %s87
      %s90 = sphi 0, %s89
      %s104 = sphi 0, %s90
      %s108 = sphi 0, %s108
      %s110 = sphi 0, %s108
      %s111 = sphi 0, %s110
      %s125 = sphi 0, %s111
      %s129 = sphi 0, %s129
      %s131 = sphi 0, %s129
      %s132 = sphi 0, %s131
      %s146 = sphi 0, %s132
      %s150 = sphi 0, %s150
      %s152 = sphi 0, %s150
      %s153 = sphi 0, %s152
      %s167 = sphi 0, %s153
      %s171 = sphi 0, %s171
      %s173 = sphi 0, %s171
      %s174 = sphi 0, %s173
      %s188 = sphi 0, %s174
      %s192 = sphi 0, %s192
      %s194 = sphi 0, %s192
      %s195 = sphi 0, %s194
      %s209 = sphi 0, %s195
      %s213 = sphi 0, %s213
      %s215 = sphi 0, %s213
      %s216 = sphi 0, %s215
      %s230 = sphi 0, %s216
      %s234 = sphi 0, %s234
      %s236 = sphi 0, %s234
      %s237 = sphi 0, %s236
      %s251 = sphi 0, %s237
      %s255 = sphi 0, %s255
      %s257 = sphi 0, %s255
      %s258 = sphi 0, %s257
      %s272 = sphi 0, %s258
      %s276 = sphi 0, %s276
      %s278 = sphi 0, %s276
      %s279 = sphi 0, %s278
      %s293 = sphi 0, %s279
      %s297 = sphi 0, %s297
      %s299 = sphi 0, %s297
      %s300 = sphi 0, %s299
      %s314 = sphi 0, %s300
      %s318 = sphi 0, %s318
      %s320 = sphi 0, %s318
      %s321 = sphi 0, %s320
      %s335 = sphi 0, %s321
      %s339 = sphi 0, %s339
      %s341 = sphi 0, %s339
      %s342 = sphi 0, %s341
      %s356 = sphi 0, %s342
      %s360 = sphi 0, %s360
      %s362 = sphi 0, %s360
      %s363 = sphi 0, %s362
      %s377 = sphi 0, %s363
      %s381 = sphi 0, %s381
      %s383 = sphi 0, %s381
      %s384 = sphi 0, %s383
      %s398 = sphi 0, %s384
      %s402 = sphi 0, %s402
      %s404 = sphi 0, %s402
      %s405 = sphi 0, %s404
      %s419 = sphi 0, %s405
      %s423 = sphi 0, %s423
      %s425 = sphi 0, %s423
      %s426 = sphi 0, %s425
      %s440 = sphi 0, %s426
      %s444 = sphi 0, %s444
      %s446 = sphi 0, %s444
      %s447 = sphi 0, %s446
      %s461 = sphi 0, %s447
      %s465 = sphi 0, %s465
      %s467 = sphi 0, %s465
      %s468 = sphi 0, %s467
      %s482 = sphi 0, %s468
      %s488 = sphi 0, %s490
      %s491 = sphi 0, %s488
      %s492 = sphi 0, %s491
      %s508 = sphi 0, %s492
    $region4: #{tpu_custom_call.1} parent=1 // loop_header_branch
      %35 = sbr.rel (%p33) target = $region8
    $region5: #{tpu_custom_call.1} parent=1 // loop_body
      %s37 = ssub.s32 %s32, 1
      %s38 = ssub.s32 %s32, 2
      %s39 = sadd.s32 %s32, 1
      %s40 = ssub.s32 %s32, %s39
      %p41 = scmp.eq.s32.totalorder %s40, 0
      %s43 = sadd.s32 %s42, 1
      %s44 = scalar_select %p41, %s42, %s43
      %p47 = pneg %p41
      %p48 = scmp.eq.s32.totalorder %s32, 1
      %p49 = por %p47, %p48
      %p50 = scmp.ne.s32.totalorder %s42, %s45
      %p51 = scmp.eq.s32.totalorder %s32, 0
      %p52 = por %p50, %p51
      %p53 = scmp.ne.s32.totalorder %s42, %s45
      %p54 = scmp.eq.s32.totalorder %s37, 1
      %p55 = por %p53, %p54
      %p56 = scmp.ne.s32.totalorder %s45, %s46
      %p57 = scmp.eq.s32.totalorder %s37, 0
      %p58 = por %p56, %p57
      %p59 = scmp.ne.s32.totalorder %s45, %s46
      %p60 = scmp.eq.s32.totalorder %s38, 1
      %p61 = por %p59, %p60
      %p63 = scmp.ne.s32.totalorder %s46, %s62
      %p64 = scmp.eq.s32.totalorder %s38, 0
      %p65 = por %p63, %p64
      %s67 = sadd.s32 %s66, 1
      %p70 = scmp.eq.s32.totalorder %s32, 1
      %p71 = scmp.ne.s32.totalorder %s66, %s68
      %p72 = scmp.eq.s32.totalorder %s32, 0
      %p73 = por %p71, %p72
      %p74 = scmp.ne.s32.totalorder %s66, %s68
      %p75 = scmp.eq.s32.totalorder %s37, 1
      %p76 = por %p74, %p75
      %p77 = scmp.ne.s32.totalorder %s68, %s69
      %p78 = scmp.eq.s32.totalorder %s37, 0
      %p79 = por %p77, %p78
      %p80 = scmp.ne.s32.totalorder %s68, %s69
      %p81 = scmp.eq.s32.totalorder %s38, 1
      %p82 = por %p80, %p81
      %p84 = scmp.ne.s32.totalorder %s69, %s83
      %p85 = scmp.eq.s32.totalorder %s38, 0
      %p86 = por %p84, %p85
      %s88 = sadd.s32 %s87, 1
      %p91 = scmp.eq.s32.totalorder %s32, 1
      %p92 = scmp.ne.s32.totalorder %s87, %s89
      %p93 = scmp.eq.s32.totalorder %s32, 0
      %p94 = por %p92, %p93
      %p95 = scmp.ne.s32.totalorder %s87, %s89
      %p96 = scmp.eq.s32.totalorder %s37, 1
      %p97 = por %p95, %p96
      %p98 = scmp.ne.s32.totalorder %s89, %s90
      %p99 = scmp.eq.s32.totalorder %s37, 0
      %p100 = por %p98, %p99
      %p101 = scmp.ne.s32.totalorder %s89, %s90
      %p102 = scmp.eq.s32.totalorder %s38, 1
      %p103 = por %p101, %p102
      %p105 = scmp.ne.s32.totalorder %s90, %s104
      %p106 = scmp.eq.s32.totalorder %s38, 0
      %p107 = por %p105, %p106
      %s109 = sadd.s32 %s108, 1
      %p112 = scmp.eq.s32.totalorder %s32, 1
      %p113 = scmp.ne.s32.totalorder %s108, %s110
      %p114 = scmp.eq.s32.totalorder %s32, 0
      %p115 = por %p113, %p114
      %p116 = scmp.ne.s32.totalorder %s108, %s110
      %p117 = scmp.eq.s32.totalorder %s37, 1
      %p118 = por %p116, %p117
      %p119 = scmp.ne.s32.totalorder %s110, %s111
      %p120 = scmp.eq.s32.totalorder %s37, 0
      %p121 = por %p119, %p120
      %p122 = scmp.ne.s32.totalorder %s110, %s111
      %p123 = scmp.eq.s32.totalorder %s38, 1
      %p124 = por %p122, %p123
      %p126 = scmp.ne.s32.totalorder %s111, %s125
      %p127 = scmp.eq.s32.totalorder %s38, 0
      %p128 = por %p126, %p127
      %s130 = sadd.s32 %s129, 1
      %p133 = scmp.eq.s32.totalorder %s32, 1
      %p134 = scmp.ne.s32.totalorder %s129, %s131
      %p135 = scmp.eq.s32.totalorder %s32, 0
      %p136 = por %p134, %p135
      %p137 = scmp.ne.s32.totalorder %s129, %s131
      %p138 = scmp.eq.s32.totalorder %s37, 1
      %p139 = por %p137, %p138
      %p140 = scmp.ne.s32.totalorder %s131, %s132
      %p141 = scmp.eq.s32.totalorder %s37, 0
      %p142 = por %p140, %p141
      %p143 = scmp.ne.s32.totalorder %s131, %s132
      %p144 = scmp.eq.s32.totalorder %s38, 1
      %p145 = por %p143, %p144
      %p147 = scmp.ne.s32.totalorder %s132, %s146
      %p148 = scmp.eq.s32.totalorder %s38, 0
      %p149 = por %p147, %p148
      %s151 = sadd.s32 %s150, 1
      %p154 = scmp.eq.s32.totalorder %s32, 1
      %p155 = scmp.ne.s32.totalorder %s150, %s152
      %p156 = scmp.eq.s32.totalorder %s32, 0
      %p157 = por %p155, %p156
      %p158 = scmp.ne.s32.totalorder %s150, %s152
      %p159 = scmp.eq.s32.totalorder %s37, 1
      %p160 = por %p158, %p159
      %p161 = scmp.ne.s32.totalorder %s152, %s153
      %p162 = scmp.eq.s32.totalorder %s37, 0
      %p163 = por %p161, %p162
      %p164 = scmp.ne.s32.totalorder %s152, %s153
      %p165 = scmp.eq.s32.totalorder %s38, 1
      %p166 = por %p164, %p165
      %p168 = scmp.ne.s32.totalorder %s153, %s167
      %p169 = scmp.eq.s32.totalorder %s38, 0
      %p170 = por %p168, %p169
      %s172 = sadd.s32 %s171, 1
      %p175 = scmp.eq.s32.totalorder %s32, 1
      %p176 = scmp.ne.s32.totalorder %s171, %s173
      %p177 = scmp.eq.s32.totalorder %s32, 0
      %p178 = por %p176, %p177
      %p179 = scmp.ne.s32.totalorder %s171, %s173
      %p180 = scmp.eq.s32.totalorder %s37, 1
      %p181 = por %p179, %p180
      %p182 = scmp.ne.s32.totalorder %s173, %s174
      %p183 = scmp.eq.s32.totalorder %s37, 0
      %p184 = por %p182, %p183
      %p185 = scmp.ne.s32.totalorder %s173, %s174
      %p186 = scmp.eq.s32.totalorder %s38, 1
      %p187 = por %p185, %p186
      %p189 = scmp.ne.s32.totalorder %s174, %s188
      %p190 = scmp.eq.s32.totalorder %s38, 0
      %p191 = por %p189, %p190
      %s193 = sadd.s32 %s192, 1
      %p196 = scmp.eq.s32.totalorder %s32, 1
      %p197 = scmp.ne.s32.totalorder %s192, %s194
      %p198 = scmp.eq.s32.totalorder %s32, 0
      %p199 = por %p197, %p198
      %p200 = scmp.ne.s32.totalorder %s192, %s194
      %p201 = scmp.eq.s32.totalorder %s37, 1
      %p202 = por %p200, %p201
      %p203 = scmp.ne.s32.totalorder %s194, %s195
      %p204 = scmp.eq.s32.totalorder %s37, 0
      %p205 = por %p203, %p204
      %p206 = scmp.ne.s32.totalorder %s194, %s195
      %p207 = scmp.eq.s32.totalorder %s38, 1
      %p208 = por %p206, %p207
      %p210 = scmp.ne.s32.totalorder %s195, %s209
      %p211 = scmp.eq.s32.totalorder %s38, 0
      %p212 = por %p210, %p211
      %s214 = sadd.s32 %s213, 1
      %p217 = scmp.eq.s32.totalorder %s32, 1
      %p218 = scmp.ne.s32.totalorder %s213, %s215
      %p219 = scmp.eq.s32.totalorder %s32, 0
      %p220 = por %p218, %p219
      %p221 = scmp.ne.s32.totalorder %s213, %s215
      %p222 = scmp.eq.s32.totalorder %s37, 1
      %p223 = por %p221, %p222
      %p224 = scmp.ne.s32.totalorder %s215, %s216
      %p225 = scmp.eq.s32.totalorder %s37, 0
      %p226 = por %p224, %p225
      %p227 = scmp.ne.s32.totalorder %s215, %s216
      %p228 = scmp.eq.s32.totalorder %s38, 1
      %p229 = por %p227, %p228
      %p231 = scmp.ne.s32.totalorder %s216, %s230
      %p232 = scmp.eq.s32.totalorder %s38, 0
      %p233 = por %p231, %p232
      %s235 = sadd.s32 %s234, 1
      %p238 = scmp.eq.s32.totalorder %s32, 1
      %p239 = scmp.ne.s32.totalorder %s234, %s236
      %p240 = scmp.eq.s32.totalorder %s32, 0
      %p241 = por %p239, %p240
      %p242 = scmp.ne.s32.totalorder %s234, %s236
      %p243 = scmp.eq.s32.totalorder %s37, 1
      %p244 = por %p242, %p243
      %p245 = scmp.ne.s32.totalorder %s236, %s237
      %p246 = scmp.eq.s32.totalorder %s37, 0
      %p247 = por %p245, %p246
      %p248 = scmp.ne.s32.totalorder %s236, %s237
      %p249 = scmp.eq.s32.totalorder %s38, 1
      %p250 = por %p248, %p249
      %p252 = scmp.ne.s32.totalorder %s237, %s251
      %p253 = scmp.eq.s32.totalorder %s38, 0
      %p254 = por %p252, %p253
      %s256 = sadd.s32 %s255, 1
      %p259 = scmp.eq.s32.totalorder %s32, 1
      %p260 = scmp.ne.s32.totalorder %s255, %s257
      %p261 = scmp.eq.s32.totalorder %s32, 0
      %p262 = por %p260, %p261
      %p263 = scmp.ne.s32.totalorder %s255, %s257
      %p264 = scmp.eq.s32.totalorder %s37, 1
      %p265 = por %p263, %p264
      %p266 = scmp.ne.s32.totalorder %s257, %s258
      %p267 = scmp.eq.s32.totalorder %s37, 0
      %p268 = por %p266, %p267
      %p269 = scmp.ne.s32.totalorder %s257, %s258
      %p270 = scmp.eq.s32.totalorder %s38, 1
      %p271 = por %p269, %p270
      %p273 = scmp.ne.s32.totalorder %s258, %s272
      %p274 = scmp.eq.s32.totalorder %s38, 0
      %p275 = por %p273, %p274
      %s277 = sadd.s32 %s276, 1
      %p280 = scmp.eq.s32.totalorder %s32, 1
      %p281 = scmp.ne.s32.totalorder %s276, %s278
      %p282 = scmp.eq.s32.totalorder %s32, 0
      %p283 = por %p281, %p282
      %p284 = scmp.ne.s32.totalorder %s276, %s278
      %p285 = scmp.eq.s32.totalorder %s37, 1
      %p286 = por %p284, %p285
      %p287 = scmp.ne.s32.totalorder %s278, %s279
      %p288 = scmp.eq.s32.totalorder %s37, 0
      %p289 = por %p287, %p288
      %p290 = scmp.ne.s32.totalorder %s278, %s279
      %p291 = scmp.eq.s32.totalorder %s38, 1
      %p292 = por %p290, %p291
      %p294 = scmp.ne.s32.totalorder %s279, %s293
      %p295 = scmp.eq.s32.totalorder %s38, 0
      %p296 = por %p294, %p295
      %s298 = sadd.s32 %s297, 1
      %p301 = scmp.eq.s32.totalorder %s32, 1
      %p302 = scmp.ne.s32.totalorder %s297, %s299
      %p303 = scmp.eq.s32.totalorder %s32, 0
      %p304 = por %p302, %p303
      %p305 = scmp.ne.s32.totalorder %s297, %s299
      %p306 = scmp.eq.s32.totalorder %s37, 1
      %p307 = por %p305, %p306
      %p308 = scmp.ne.s32.totalorder %s299, %s300
      %p309 = scmp.eq.s32.totalorder %s37, 0
      %p310 = por %p308, %p309
      %p311 = scmp.ne.s32.totalorder %s299, %s300
      %p312 = scmp.eq.s32.totalorder %s38, 1
      %p313 = por %p311, %p312
      %p315 = scmp.ne.s32.totalorder %s300, %s314
      %p316 = scmp.eq.s32.totalorder %s38, 0
      %p317 = por %p315, %p316
      %s319 = sadd.s32 %s318, 1
      %p322 = scmp.eq.s32.totalorder %s32, 1
      %p323 = scmp.ne.s32.totalorder %s318, %s320
      %p324 = scmp.eq.s32.totalorder %s32, 0
      %p325 = por %p323, %p324
      %p326 = scmp.ne.s32.totalorder %s318, %s320
      %p327 = scmp.eq.s32.totalorder %s37, 1
      %p328 = por %p326, %p327
      %p329 = scmp.ne.s32.totalorder %s320, %s321
      %p330 = scmp.eq.s32.totalorder %s37, 0
      %p331 = por %p329, %p330
      %p332 = scmp.ne.s32.totalorder %s320, %s321
      %p333 = scmp.eq.s32.totalorder %s38, 1
      %p334 = por %p332, %p333
      %p336 = scmp.ne.s32.totalorder %s321, %s335
      %p337 = scmp.eq.s32.totalorder %s38, 0
      %p338 = por %p336, %p337
      %s340 = sadd.s32 %s339, 1
      %p343 = scmp.eq.s32.totalorder %s32, 1
      %p344 = scmp.ne.s32.totalorder %s339, %s341
      %p345 = scmp.eq.s32.totalorder %s32, 0
      %p346 = por %p344, %p345
      %p347 = scmp.ne.s32.totalorder %s339, %s341
      %p348 = scmp.eq.s32.totalorder %s37, 1
      %p349 = por %p347, %p348
      %p350 = scmp.ne.s32.totalorder %s341, %s342
      %p351 = scmp.eq.s32.totalorder %s37, 0
      %p352 = por %p350, %p351
      %p353 = scmp.ne.s32.totalorder %s341, %s342
      %p354 = scmp.eq.s32.totalorder %s38, 1
      %p355 = por %p353, %p354
      %p357 = scmp.ne.s32.totalorder %s342, %s356
      %p358 = scmp.eq.s32.totalorder %s38, 0
      %p359 = por %p357, %p358
      %s361 = sadd.s32 %s360, 1
      %p364 = scmp.eq.s32.totalorder %s32, 1
      %p365 = scmp.ne.s32.totalorder %s360, %s362
      %p366 = scmp.eq.s32.totalorder %s32, 0
      %p367 = por %p365, %p366
      %p368 = scmp.ne.s32.totalorder %s360, %s362
      %p369 = scmp.eq.s32.totalorder %s37, 1
      %p370 = por %p368, %p369
      %p371 = scmp.ne.s32.totalorder %s362, %s363
      %p372 = scmp.eq.s32.totalorder %s37, 0
      %p373 = por %p371, %p372
      %p374 = scmp.ne.s32.totalorder %s362, %s363
      %p375 = scmp.eq.s32.totalorder %s38, 1
      %p376 = por %p374, %p375
      %p378 = scmp.ne.s32.totalorder %s363, %s377
      %p379 = scmp.eq.s32.totalorder %s38, 0
      %p380 = por %p378, %p379
      %s382 = sadd.s32 %s381, 1
      %p385 = scmp.eq.s32.totalorder %s32, 1
      %p386 = scmp.ne.s32.totalorder %s381, %s383
      %p387 = scmp.eq.s32.totalorder %s32, 0
      %p388 = por %p386, %p387
      %p389 = scmp.ne.s32.totalorder %s381, %s383
      %p390 = scmp.eq.s32.totalorder %s37, 1
      %p391 = por %p389, %p390
      %p392 = scmp.ne.s32.totalorder %s383, %s384
      %p393 = scmp.eq.s32.totalorder %s37, 0
      %p394 = por %p392, %p393
      %p395 = scmp.ne.s32.totalorder %s383, %s384
      %p396 = scmp.eq.s32.totalorder %s38, 1
      %p397 = por %p395, %p396
      %p399 = scmp.ne.s32.totalorder %s384, %s398
      %p400 = scmp.eq.s32.totalorder %s38, 0
      %p401 = por %p399, %p400
      %s403 = sadd.s32 %s402, 1
      %p406 = scmp.eq.s32.totalorder %s32, 1
      %p407 = scmp.ne.s32.totalorder %s402, %s404
      %p408 = scmp.eq.s32.totalorder %s32, 0
      %p409 = por %p407, %p408
      %p410 = scmp.ne.s32.totalorder %s402, %s404
      %p411 = scmp.eq.s32.totalorder %s37, 1
      %p412 = por %p410, %p411
      %p413 = scmp.ne.s32.totalorder %s404, %s405
      %p414 = scmp.eq.s32.totalorder %s37, 0
      %p415 = por %p413, %p414
      %p416 = scmp.ne.s32.totalorder %s404, %s405
      %p417 = scmp.eq.s32.totalorder %s38, 1
      %p418 = por %p416, %p417
      %p420 = scmp.ne.s32.totalorder %s405, %s419
      %p421 = scmp.eq.s32.totalorder %s38, 0
      %p422 = por %p420, %p421
      %s424 = sadd.s32 %s423, 1
      %p427 = scmp.eq.s32.totalorder %s32, 1
      %p428 = scmp.ne.s32.totalorder %s423, %s425
      %p429 = scmp.eq.s32.totalorder %s32, 0
      %p430 = por %p428, %p429
      %p431 = scmp.ne.s32.totalorder %s423, %s425
      %p432 = scmp.eq.s32.totalorder %s37, 1
      %p433 = por %p431, %p432
      %p434 = scmp.ne.s32.totalorder %s425, %s426
      %p435 = scmp.eq.s32.totalorder %s37, 0
      %p436 = por %p434, %p435
      %p437 = scmp.ne.s32.totalorder %s425, %s426
      %p438 = scmp.eq.s32.totalorder %s38, 1
      %p439 = por %p437, %p438
      %p441 = scmp.ne.s32.totalorder %s426, %s440
      %p442 = scmp.eq.s32.totalorder %s38, 0
      %p443 = por %p441, %p442
      %s445 = sadd.s32 %s444, 1
      %p448 = scmp.eq.s32.totalorder %s32, 1
      %p449 = scmp.ne.s32.totalorder %s444, %s446
      %p450 = scmp.eq.s32.totalorder %s32, 0
      %p451 = por %p449, %p450
      %p452 = scmp.ne.s32.totalorder %s444, %s446
      %p453 = scmp.eq.s32.totalorder %s37, 1
      %p454 = por %p452, %p453
      %p455 = scmp.ne.s32.totalorder %s446, %s447
      %p456 = scmp.eq.s32.totalorder %s37, 0
      %p457 = por %p455, %p456
      %p458 = scmp.ne.s32.totalorder %s446, %s447
      %p459 = scmp.eq.s32.totalorder %s38, 1
      %p460 = por %p458, %p459
      %p462 = scmp.ne.s32.totalorder %s447, %s461
      %p463 = scmp.eq.s32.totalorder %s38, 0
      %p464 = por %p462, %p463
      %s466 = sadd.s32 %s465, 1
      %p469 = scmp.eq.s32.totalorder %s32, 1
      %p470 = scmp.ne.s32.totalorder %s465, %s467
      %p471 = scmp.eq.s32.totalorder %s32, 0
      %p472 = por %p470, %p471
      %p473 = scmp.ne.s32.totalorder %s465, %s467
      %p474 = scmp.eq.s32.totalorder %s37, 1
      %p475 = por %p473, %p474
      %p476 = scmp.ne.s32.totalorder %s467, %s468
      %p477 = scmp.eq.s32.totalorder %s37, 0
      %p478 = por %p476, %p477
      %p479 = scmp.ne.s32.totalorder %s467, %s468
      %p480 = scmp.eq.s32.totalorder %s38, 1
      %p481 = por %p479, %p480
      %p483 = scmp.ne.s32.totalorder %s468, %s482
      %p484 = scmp.eq.s32.totalorder %s38, 0
      %p485 = por %p483, %p484
      %s486 = ssub.s32 %s32, %s39
      %p487 = scmp.eq.s32.totalorder %s486, 0
      %s489 = sadd.s32 %s488, 1
      %s490 = scalar_select %p487, %s488, %s489
      %p493 = pneg %p487
      %p494 = scmp.eq.s32.totalorder %s32, 1
      %p495 = por %p493, %p494
      %p496 = scmp.ne.s32.totalorder %s488, %s491
      %p497 = scmp.eq.s32.totalorder %s32, 0
      %p498 = por %p496, %p497
      %p499 = scmp.ne.s32.totalorder %s488, %s491
      %p500 = scmp.eq.s32.totalorder %s37, 1
      %p501 = por %p499, %p500
      %p502 = scmp.ne.s32.totalorder %s491, %s492
      %p503 = scmp.eq.s32.totalorder %s37, 0
      %p504 = por %p502, %p503
      %p505 = scmp.ne.s32.totalorder %s491, %s492
      %p506 = scmp.eq.s32.totalorder %s38, 1
      %p507 = por %p505, %p506
      %p509 = scmp.ne.s32.totalorder %s492, %s508
      %p510 = scmp.eq.s32.totalorder %s38, 0
      %p511 = por %p509, %p510
      %p512 = scmp.le.s32.totalorder 1, %s32
      %p513 = scmp.lt.s32.totalorder %s32, 3
      %p514 = pnand %p512, %p513
      %p515 = pneg %p514
      // Predicated region
      $region9: #{tpu_custom_call.1} parent=5 // pred_check
        _
      $region10: #{tpu_custom_call.1} parent=5 // pred_check_branch
        %517 = sbr.rel (%p514) target = $region12
      $region11: #{tpu_custom_call.1} parent=5 // pred_region
        %s518 = ssub.s32 %s32, 1
        // Predicated region
        $region13: #{tpu_custom_call.1} parent=11 // pred_check
          %p519 = pneg %p79
        $region14: #{tpu_custom_call.1} parent=11 // pred_check_branch
          %521 = sbr.rel (%p519) target = $region16
        $region15: #{tpu_custom_call.1} parent=11 // pred_region
          _
        $region16: #{tpu_custom_call.1} parent=11 // pred_fallthru
          _
        // Predicated region
        $region17: #{tpu_custom_call.1} parent=11 // pred_check
          %p522 = pneg %p100
        $region18: #{tpu_custom_call.1} parent=11 // pred_check_branch
          %524 = sbr.rel (%p522) target = $region20
        $region19: #{tpu_custom_call.1} parent=11 // pred_region
          _
        $region20: #{tpu_custom_call.1} parent=11 // pred_fallthru
          _
        // Predicated region
        $region21: #{tpu_custom_call.1} parent=11 // pred_check
          %p525 = pneg %p121
        $region22: #{tpu_custom_call.1} parent=11 // pred_check_branch
          %527 = sbr.rel (%p525) target = $region24
        $region23: #{tpu_custom_call.1} parent=11 // pred_region
          _
        $region24: #{tpu_custom_call.1} parent=11 // pred_fallthru
          _
        // Predicated region
        $region25: #{tpu_custom_call.1} parent=11 // pred_check
          %p528 = pneg %p142
        $region26: #{tpu_custom_call.1} parent=11 // pred_check_branch
          %530 = sbr.rel (%p528) target = $region28
        $region27: #{tpu_custom_call.1} parent=11 // pred_region
          _
        $region28: #{tpu_custom_call.1} parent=11 // pred_fallthru
          _
        // Predicated region
        $region29: #{tpu_custom_call.1} parent=11 // pred_check
          %p531 = pneg %p163
        $region30: #{tpu_custom_call.1} parent=11 // pred_check_branch
          %533 = sbr.rel (%p531) target = $region32
        $region31: #{tpu_custom_call.1} parent=11 // pred_region
          _
        $region32: #{tpu_custom_call.1} parent=11 // pred_fallthru
          _
        // Predicated region
        $region33: #{tpu_custom_call.1} parent=11 // pred_check
          %p534 = pneg %p184
        $region34: #{tpu_custom_call.1} parent=11 // pred_check_branch
          %536 = sbr.rel (%p534) target = $region36
        $region35: #{tpu_custom_call.1} parent=11 // pred_region
          _
        $region36: #{tpu_custom_call.1} parent=11 // pred_fallthru
          _
        // Predicated region
        $region37: #{tpu_custom_call.1} parent=11 // pred_check
          %p537 = pneg %p205
        $region38: #{tpu_custom_call.1} parent=11 // pred_check_branch
          %539 = sbr.rel (%p537) target = $region40
        $region39: #{tpu_custom_call.1} parent=11 // pred_region
          _
        $region40: #{tpu_custom_call.1} parent=11 // pred_fallthru
          _
        // Predicated region
        $region41: #{tpu_custom_call.1} parent=11 // pred_check
          %p540 = pneg %p226
        $region42: #{tpu_custom_call.1} parent=11 // pred_check_branch
          %542 = sbr.rel (%p540) target = $region44
        $region43: #{tpu_custom_call.1} parent=11 // pred_region
          _
        $region44: #{tpu_custom_call.1} parent=11 // pred_fallthru
          _
        // Predicated region
        $region45: #{tpu_custom_call.1} parent=11 // pred_check
          %p543 = pneg %p247
        $region46: #{tpu_custom_call.1} parent=11 // pred_check_branch
          %545 = sbr.rel (%p543) target = $region48
        $region47: #{tpu_custom_call.1} parent=11 // pred_region
          _
        $region48: #{tpu_custom_call.1} parent=11 // pred_fallthru
          _
        // Predicated region
        $region49: #{tpu_custom_call.1} parent=11 // pred_check
          %p546 = pneg %p268
        $region50: #{tpu_custom_call.1} parent=11 // pred_check_branch
          %548 = sbr.rel (%p546) target = $region52
        $region51: #{tpu_custom_call.1} parent=11 // pred_region
          _
        $region52: #{tpu_custom_call.1} parent=11 // pred_fallthru
          _
        // Predicated region
        $region53: #{tpu_custom_call.1} parent=11 // pred_check
          %p549 = pneg %p289
        $region54: #{tpu_custom_call.1} parent=11 // pred_check_branch
          %551 = sbr.rel (%p549) target = $region56
        $region55: #{tpu_custom_call.1} parent=11 // pred_region
          _
        $region56: #{tpu_custom_call.1} parent=11 // pred_fallthru
          _
        // Predicated region
        $region57: #{tpu_custom_call.1} parent=11 // pred_check
          %p552 = pneg %p310
        $region58: #{tpu_custom_call.1} parent=11 // pred_check_branch
          %554 = sbr.rel (%p552) target = $region60
        $region59: #{tpu_custom_call.1} parent=11 // pred_region
          _
        $region60: #{tpu_custom_call.1} parent=11 // pred_fallthru
          _
        // Predicated region
        $region61: #{tpu_custom_call.1} parent=11 // pred_check
          %p555 = pneg %p331
        $region62: #{tpu_custom_call.1} parent=11 // pred_check_branch
          %557 = sbr.rel (%p555) target = $region64
        $region63: #{tpu_custom_call.1} parent=11 // pred_region
          _
        $region64: #{tpu_custom_call.1} parent=11 // pred_fallthru
          _
        // Predicated region
        $region65: #{tpu_custom_call.1} parent=11 // pred_check
          %p558 = pneg %p352
        $region66: #{tpu_custom_call.1} parent=11 // pred_check_branch
          %560 = sbr.rel (%p558) target = $region68
        $region67: #{tpu_custom_call.1} parent=11 // pred_region
          _
        $region68: #{tpu_custom_call.1} parent=11 // pred_fallthru
          _
        // Predicated region
        $region69: #{tpu_custom_call.1} parent=11 // pred_check
          %p561 = pneg %p373
        $region70: #{tpu_custom_call.1} parent=11 // pred_check_branch
          %563 = sbr.rel (%p561) target = $region72
        $region71: #{tpu_custom_call.1} parent=11 // pred_region
          _
        $region72: #{tpu_custom_call.1} parent=11 // pred_fallthru
          _
        // Predicated region
        $region73: #{tpu_custom_call.1} parent=11 // pred_check
          %p564 = pneg %p394
        $region74: #{tpu_custom_call.1} parent=11 // pred_check_branch
          %566 = sbr.rel (%p564) target = $region76
        $region75: #{tpu_custom_call.1} parent=11 // pred_region
          _
        $region76: #{tpu_custom_call.1} parent=11 // pred_fallthru
          _
        // Predicated region
        $region77: #{tpu_custom_call.1} parent=11 // pred_check
          %p567 = pneg %p415
        $region78: #{tpu_custom_call.1} parent=11 // pred_check_branch
          %569 = sbr.rel (%p567) target = $region80
        $region79: #{tpu_custom_call.1} parent=11 // pred_region
          _
        $region80: #{tpu_custom_call.1} parent=11 // pred_fallthru
          _
        // Predicated region
        $region81: #{tpu_custom_call.1} parent=11 // pred_check
          %p570 = pneg %p436
        $region82: #{tpu_custom_call.1} parent=11 // pred_check_branch
          %572 = sbr.rel (%p570) target = $region84
        $region83: #{tpu_custom_call.1} parent=11 // pred_region
          _
        $region84: #{tpu_custom_call.1} parent=11 // pred_fallthru
          _
        // Predicated region
        $region85: #{tpu_custom_call.1} parent=11 // pred_check
          %p573 = pneg %p457
        $region86: #{tpu_custom_call.1} parent=11 // pred_check_branch
          %575 = sbr.rel (%p573) target = $region88
        $region87: #{tpu_custom_call.1} parent=11 // pred_region
          _
        $region88: #{tpu_custom_call.1} parent=11 // pred_fallthru
          _
        // Predicated region
        $region89: #{tpu_custom_call.1} parent=11 // pred_check
          %p576 = pneg %p478
        $region90: #{tpu_custom_call.1} parent=11 // pred_check_branch
          %578 = sbr.rel (%p576) target = $region92
        $region91: #{tpu_custom_call.1} parent=11 // pred_region
          _
        $region92: #{tpu_custom_call.1} parent=11 // pred_fallthru
          _
      $region12: #{tpu_custom_call.1} parent=5 // pred_fallthru
        _
      %p579 = scmp.lt.s32.totalorder %s32, 2
      // Predicated region
      $region93: #{tpu_custom_call.1} parent=5 // pred_check
        %p580 = pneg %p579
      $region94: #{tpu_custom_call.1} parent=5 // pred_check_branch
        %582 = sbr.rel (%p580) target = $region96
      $region95: #{tpu_custom_call.1} parent=5 // pred_region
        // Predicated region
        $region97: #{tpu_custom_call.1} parent=95 // pred_check
          %p583 = pneg %p52
        $region98: #{tpu_custom_call.1} parent=95 // pred_check_branch
          %585 = sbr.rel (%p583) target = $region100
        $region99: #{tpu_custom_call.1} parent=95 // pred_region
          %p586 = scmp.lt.s32.totalorder %s32, 1
          %s587 = scalar_select %p586, %s32, 1
          %s588 = smul.addr %s587, 8
          %s589 = smul.addr %s588, 8
          %s590 = scalar_lea.vmem %s0, %s589
        $region100: #{tpu_custom_call.1} parent=95 // pred_fallthru
          _
      $region96: #{tpu_custom_call.1} parent=5 // pred_fallthru
        _
      %p591 = scmp.le.s32.totalorder 1, %s32
      %p592 = scmp.lt.s32.totalorder %s32, 3
      %p593 = pnand %p591, %p592
      %p594 = pneg %p593
      // Predicated region
      $region101: #{tpu_custom_call.1} parent=5 // pred_check
        _
      $region102: #{tpu_custom_call.1} parent=5 // pred_check_branch
        %596 = sbr.rel (%p593) target = $region104
      $region103: #{tpu_custom_call.1} parent=5 // pred_region
        %s597 = ssub.s32 %s32, 1
        %p598 = scmp.lt.s32.totalorder %s37, 1
        %s599 = scalar_select %p598, %s37, 1
        %s600 = smul.addr %s599, 8
        %s601 = smul.addr %s600, 8
        %s602 = scalar_lea.vmem %s0, %s601
        %p603 = pneg %p58
        %p604 = pneg %p55
        %p605 = pneg %p79
        %p606 = pneg %p76
        %p607 = pneg %p100
        %p608 = pneg %p97
        %p609 = pneg %p121
        %p610 = pneg %p118
        %p611 = pneg %p142
        %p612 = pneg %p139
        %p613 = pneg %p163
        %p614 = pneg %p160
        %p615 = pneg %p184
        %p616 = pneg %p181
        %p617 = pneg %p205
        %p618 = pneg %p202
        %p619 = pneg %p226
        %p620 = pneg %p223
        %p621 = pneg %p247
        %p622 = pneg %p244
        %p623 = pneg %p268
        %p624 = pneg %p265
        %p625 = pneg %p289
        %p626 = pneg %p286
        %p627 = pneg %p310
        %p628 = pneg %p307
        %p629 = pneg %p331
        %p630 = pneg %p328
        %p631 = pneg %p352
        %p632 = pneg %p349
        %p633 = pneg %p373
        %p634 = pneg %p370
        %p635 = pneg %p394
        %p636 = pneg %p391
        %p637 = pneg %p415
        %p638 = pneg %p412
        %p639 = pneg %p436
        %p640 = pneg %p433
        %p641 = pneg %p457
        %p642 = pneg %p454
        %p643 = pneg %p478
        %p644 = pneg %p475
        %p645 = pneg %p504
        %p646 = pneg %p501
        %s647 = sand.u32 %s491, 1
        %s648 = scalar_lea.sflag [#allocation4], %s647
        %s649 = sand.u32 %s491, 1
        %s650 = smul.addr %s649, 64
        %s651 = scalar_lea.vmem [#allocation3], %s650
        %p652 = scmp.lt.s32.totalorder %s37, 1
        %s653 = scalar_select %p652, %s37, 1
        %s654 = smul.addr %s653, 8
        %s655 = smul.addr %s654, 8
        %s656 = scalar_lea.vmem %s0, %s655
        %v658 = vld [vmem:[%s656] sm:$0xff]
        %v659 = vld [vmem:[%s656 + $0x8] sm:$0xff]
        %v660 = vld [vmem:[%s656 + $0x10] sm:$0xff]
        %v661 = vld [vmem:[%s656 + $0x18] sm:$0xff]
        %v662 = vld [vmem:[%s656 + $0x20] sm:$0xff]
        %v663 = vld [vmem:[%s656 + $0x28] sm:$0xff]
        %v664 = vld [vmem:[%s656 + $0x30] sm:$0xff]
        %v665 = vld [vmem:[%s656 + $0x38] sm:$0xff]
        %v666 = vld [vmem:[%s1] sm:$0x1]
        %v667 = vld [vmem:[%s2] sm:$0x1]
        %vm668 = vcmask 130048
        %v669 = vsel %vm668, %v658, 0.0
        %670 = vadd.xlane.f32.xlu0 %v669
        %v671 = vpop.xlane.xlu0 %670
        %v672 = vsel %vm668, %v659, 0.0
        %673 = vadd.xlane.f32.xlu0 %v672
        %v674 = vpop.xlane.xlu0 %673
        %v675 = vsel %vm668, %v660, 0.0
        %676 = vadd.xlane.f32.xlu0 %v675
        %v677 = vpop.xlane.xlu0 %676
        %v678 = vsel %vm668, %v661, 0.0
        %679 = vadd.xlane.f32.xlu0 %v678
        %v680 = vpop.xlane.xlu0 %679
        %v681 = vsel %vm668, %v662, 0.0
        %682 = vadd.xlane.f32.xlu0 %v681
        %v683 = vpop.xlane.xlu0 %682
        %v684 = vsel %vm668, %v663, 0.0
        %685 = vadd.xlane.f32.xlu0 %v684
        %v686 = vpop.xlane.xlu0 %685
        %v687 = vsel %vm668, %v664, 0.0
        %688 = vadd.xlane.f32.xlu0 %v687
        %v689 = vpop.xlane.xlu0 %688
        %v690 = vsel %vm668, %v665, 0.0
        %691 = vadd.xlane.f32.xlu0 %v690
        %v692 = vpop.xlane.xlu0 %691
        %v693 = vrcp.pop 16.0
        %v694 = vmul.f32 %v671, %v693
        %v695 = vmul.f32 %v674, %v693
        %v696 = vmul.f32 %v677, %v693
        %v697 = vmul.f32 %v680, %v693
        %v698 = vmul.f32 %v683, %v693
        %v699 = vmul.f32 %v686, %v693
        %v700 = vmul.f32 %v689, %v693
        %v701 = vmul.f32 %v692, %v693
        %v702 = vsub.f32 %v658, %v694
        %v703 = vsub.f32 %v659, %v695
        %v704 = vsub.f32 %v660, %v696
        %v705 = vsub.f32 %v661, %v697
        %v706 = vsub.f32 %v662, %v698
        %v707 = vsub.f32 %v663, %v699
        %v708 = vsub.f32 %v664, %v700
        %v709 = vsub.f32 %v665, %v701
        %v710 = vmul.f32 %v702, %v702
        %v711 = vmul.f32 %v703, %v703
        %v712 = vmul.f32 %v704, %v704
        %v713 = vmul.f32 %v705, %v705
        %v714 = vmul.f32 %v706, %v706
        %v715 = vmul.f32 %v707, %v707
        %v716 = vmul.f32 %v708, %v708
        %v717 = vmul.f32 %v709, %v709
        %v718 = vsel %vm668, %v710, 0.0
        %719 = vadd.xlane.f32.xlu0 %v718
        %v720 = vpop.xlane.xlu0 %719
        %v721 = vsel %vm668, %v711, 0.0
        %722 = vadd.xlane.f32.xlu0 %v721
        %v723 = vpop.xlane.xlu0 %722
        %v724 = vsel %vm668, %v712, 0.0
        %725 = vadd.xlane.f32.xlu0 %v724
        %v726 = vpop.xlane.xlu0 %725
        %v727 = vsel %vm668, %v713, 0.0
        %728 = vadd.xlane.f32.xlu0 %v727
        %v729 = vpop.xlane.xlu0 %728
        %v730 = vsel %vm668, %v714, 0.0
        %731 = vadd.xlane.f32.xlu0 %v730
        %v732 = vpop.xlane.xlu0 %731
        %v733 = vsel %vm668, %v715, 0.0
        %734 = vadd.xlane.f32.xlu0 %v733
        %v735 = vpop.xlane.xlu0 %734
        %v736 = vsel %vm668, %v716, 0.0
        %737 = vadd.xlane.f32.xlu0 %v736
        %v738 = vpop.xlane.xlu0 %737
        %v739 = vsel %vm668, %v717, 0.0
        %740 = vadd.xlane.f32.xlu0 %v739
        %v741 = vpop.xlane.xlu0 %740
        %v742 = vmul.f32 %v720, %v693
        %v743 = vmul.f32 %v723, %v693
        %v744 = vmul.f32 %v726, %v693
        %v745 = vmul.f32 %v729, %v693
        %v746 = vmul.f32 %v732, %v693
        %v747 = vmul.f32 %v735, %v693
        %v748 = vmul.f32 %v738, %v693
        %v749 = vmul.f32 %v741, %v693
        %v750 = vadd.f32 %v742, 1e-05
        %v751 = vadd.f32 %v743, 1e-05
        %v752 = vadd.f32 %v744, 1e-05
        %v753 = vadd.f32 %v745, 1e-05
        %v754 = vadd.f32 %v746, 1e-05
        %v755 = vadd.f32 %v747, 1e-05
        %v756 = vadd.f32 %v748, 1e-05
        %v757 = vadd.f32 %v749, 1e-05
        %v758 = vrsqrt.pop %v750
        %v759 = vrsqrt.pop %v751
        %v760 = vrsqrt.pop %v752
        %v761 = vrsqrt.pop %v753
        %v762 = vrsqrt.pop %v754
        %v763 = vrsqrt.pop %v755
        %v764 = vrsqrt.pop %v756
        %v765 = vrsqrt.pop %v757
        %v766 = vmul.f32 %v702, %v758
        %v767 = vmul.f32 %v703, %v759
        %v768 = vmul.f32 %v704, %v760
        %v769 = vmul.f32 %v705, %v761
        %v770 = vmul.f32 %v706, %v762
        %v771 = vmul.f32 %v707, %v763
        %v772 = vmul.f32 %v708, %v764
        %v773 = vmul.f32 %v709, %v765
        %v775 = vlaneseq
        %v776 = vshrl.u32 %v775, 7
        %v777 = vsub.s32 0, %v776
        %v778 = vrot.slane %v666, %v777
        %v780 = vmul.f32 %v766, %v778
        %v781 = vmul.f32 %v767, %v778
        %v782 = vmul.f32 %v768, %v778
        %v783 = vmul.f32 %v769, %v778
        %v784 = vmul.f32 %v770, %v778
        %v785 = vmul.f32 %v771, %v778
        %v786 = vmul.f32 %v772, %v778
        %v787 = vmul.f32 %v773, %v778
        %v789 = vlaneseq
        %v790 = vshrl.u32 %v789, 7
        %v791 = vsub.s32 0, %v790
        %v792 = vrot.slane %v667, %v791
        %v794 = vadd.f32 %v780, %v792
        %v795 = vadd.f32 %v781, %v792
        %v796 = vadd.f32 %v782, %v792
        %v797 = vadd.f32 %v783, %v792
        %v798 = vadd.f32 %v784, %v792
        %v799 = vadd.f32 %v785, %v792
        %v800 = vadd.f32 %v786, %v792
        %v801 = vadd.f32 %v787, %v792
        %v802 = vld [vmem:[%s3] sm:$0xff]
        %v803 = vld [vmem:[%s3 + $0x8] sm:$0xff]
        %v804 = vpack.c.bf16 %v795, %v794
        %v805 = vpack.c.bf16 %v797, %v796
        %v806 = vpack.c.bf16 %v799, %v798
        %v807 = vpack.c.bf16 %v801, %v800
        %v808 = vpack.c.bf16 %v803, %v802
        %v810 = vsel %vm668, %v804, 0
        %v813 = vsel %vm668, %v805, 0
        %v816 = vsel %vm668, %v806, 0
        %v819 = vsel %vm668, %v807, 0
        %821 = vmatprep.subr.bf16.mxu0 0
        %822 = vmatpush1.bf16.msra.mxu0 %v808
        %823 = vmatprep.subr.bf16.mxu0 0
        %824 = vmatpush1.bf16.msra.mxu0 0
        %825 = vmatprep.subr.bf16.mxu0 0
        %826 = vmatpush1.bf16.msra.mxu0 0
        %827 = vmatprep.subr.bf16.mxu0 0
        %828 = vmatpush1.bf16.msra.mxu0 0
        %829 = vmatprep.subr.bf16.mxu0 0
        %830 = vmatpush1.bf16.msra.mxu0 0
        %831 = vmatprep.subr.bf16.mxu0 0
        %832 = vmatpush1.bf16.msra.mxu0 0
        %833 = vmatprep.subr.bf16.mxu0 0
        %834 = vmatpush1.bf16.msra.mxu0 0
        %835 = vmatprep.subr.bf16.mxu0 0
        %836 = vmatpush1.bf16.msra.mxu0 0
        %837 = vmatprep.subr.bf16.mxu0 0
        %838 = vmatpush1.bf16.msra.mxu0 0
        %839 = vmatprep.subr.bf16.mxu0 0
        %840 = vmatpush1.bf16.msra.mxu0 0
        %841 = vmatprep.subr.bf16.mxu0 0
        %842 = vmatpush1.bf16.msra.mxu0 0
        %843 = vmatprep.subr.bf16.mxu0 0
        %844 = vmatpush1.bf16.msra.mxu0 0
        %845 = vmatprep.subr.bf16.mxu0 0
        %846 = vmatpush1.bf16.msra.mxu0 0
        %847 = vmatprep.subr.bf16.mxu0 0
        %848 = vmatpush1.bf16.msra.mxu0 0
        %849 = vmatprep.subr.bf16.mxu0 0
        %850 = vmatpush1.bf16.msra.mxu0 0
        %851 = vmatprep.subr.bf16.mxu0 0
        %852 = vmatpush1.bf16.msra.mxu0 0
        %853 = vmatprep.mubr.bf16.mxu0 0
        %854 = vmatmul.mubr.bf16.gmra.mrb[0].mxu0 %v810
        %v855 = vpop.f32.mrb[0].mxu0
        %v856 = vadd.f32 0.0, %v855
        %v857 = vpop.f32.mrb[0].mxu0
        %v858 = vpop.f32.mrb[0].mxu0
        %v859 = vadd.f32 0.0, %v858
        %v860 = vpop.f32.mrb[0].mxu0
        %861 = vmatprep.mubr.bf16.mxu0 0
        %862 = vmatmul.mubr.bf16.gmra.mrb[0].mxu0 %v813
        %v863 = vpop.f32.mrb[0].mxu0
        %v864 = vadd.f32 0.0, %v863
        %v865 = vpop.f32.mrb[0].mxu0
        %v866 = vpop.f32.mrb[0].mxu0
        %v867 = vadd.f32 0.0, %v866
        %v868 = vpop.f32.mrb[0].mxu0
        %869 = vmatprep.mubr.bf16.mxu0 0
        %870 = vmatmul.mubr.bf16.gmra.mrb[0].mxu0 %v816
        %v871 = vpop.f32.mrb[0].mxu0
        %v872 = vadd.f32 0.0, %v871
        %v873 = vpop.f32.mrb[0].mxu0
        %v874 = vpop.f32.mrb[0].mxu0
        %v875 = vadd.f32 0.0, %v874
        %v876 = vpop.f32.mrb[0].mxu0
        %877 = vmatprep.mubr.bf16.mxu0 0
        %878 = vmatmul.mubr.bf16.gmra.mrb[0].mxu0 %v819
        %v879 = vpop.f32.mrb[0].mxu0
        %v880 = vadd.f32 0.0, %v879
        %v881 = vpop.f32.mrb[0].mxu0
        %v882 = vpop.f32.mrb[0].mxu0
        %v883 = vadd.f32 0.0, %v882
        %v884 = vpop.f32.mrb[0].mxu0
        %885 = vdwg.mxu0
        %v886 = vld [vmem:[%s4] sm:$0xff]
        %v887 = vld [vmem:[%s4 + $0x8] sm:$0xff]
        %v888 = vpack.c.bf16 %v887, %v886
        %889 = vmatprep.subr.bf16.mxu0 0
        %890 = vmatpush1.bf16.msra.mxu0 %v888
        %891 = vmatprep.subr.bf16.mxu0 0
        %892 = vmatpush1.bf16.msra.mxu0 0
        %893 = vmatprep.subr.bf16.mxu0 0
        %894 = vmatpush1.bf16.msra.mxu0 0
        %895 = vmatprep.subr.bf16.mxu0 0
        %896 = vmatpush1.bf16.msra.mxu0 0
        %897 = vmatprep.subr.bf16.mxu0 0
        %898 = vmatpush1.bf16.msra.mxu0 0
        %899 = vmatprep.subr.bf16.mxu0 0
        %900 = vmatpush1.bf16.msra.mxu0 0
        %901 = vmatprep.subr.bf16.mxu0 0
        %902 = vmatpush1.bf16.msra.mxu0 0
        %903 = vmatprep.subr.bf16.mxu0 0
        %904 = vmatpush1.bf16.msra.mxu0 0
        %905 = vmatprep.subr.bf16.mxu0 0
        %906 = vmatpush1.bf16.msra.mxu0 0
        %907 = vmatprep.subr.bf16.mxu0 0
        %908 = vmatpush1.bf16.msra.mxu0 0
        %909 = vmatprep.subr.bf16.mxu0 0
        %910 = vmatpush1.bf16.msra.mxu0 0
        %911 = vmatprep.subr.bf16.mxu0 0
        %912 = vmatpush1.bf16.msra.mxu0 0
        %913 = vmatprep.subr.bf16.mxu0 0
        %914 = vmatpush1.bf16.msra.mxu0 0
        %915 = vmatprep.subr.bf16.mxu0 0
        %916 = vmatpush1.bf16.msra.mxu0 0
        %917 = vmatprep.subr.bf16.mxu0 0
        %918 = vmatpush1.bf16.msra.mxu0 0
        %919 = vmatprep.subr.bf16.mxu0 0
        %920 = vmatpush1.bf16.msra.mxu0 0
        %921 = vmatprep.mubr.bf16.mxu0 0
        %922 = vmatmul.mubr.bf16.gmra.mrb[0].mxu0 %v810
        %v923 = vpop.f32.mrb[0].mxu0
        %v924 = vadd.f32 0.0, %v923
        %v925 = vpop.f32.mrb[0].mxu0
        %v926 = vpop.f32.mrb[0].mxu0
        %v927 = vadd.f32 0.0, %v926
        %v928 = vpop.f32.mrb[0].mxu0
        %929 = vmatprep.mubr.bf16.mxu0 0
        %930 = vmatmul.mubr.bf16.gmra.mrb[0].mxu0 %v813
        %v931 = vpop.f32.mrb[0].mxu0
        %v932 = vadd.f32 0.0, %v931
        %v933 = vpop.f32.mrb[0].mxu0
        %v934 = vpop.f32.mrb[0].mxu0
        %v935 = vadd.f32 0.0, %v934
        %v936 = vpop.f32.mrb[0].mxu0
        %937 = vmatprep.mubr.bf16.mxu0 0
        %938 = vmatmul.mubr.bf16.gmra.mrb[0].mxu0 %v816
        %v939 = vpop.f32.mrb[0].mxu0
        %v940 = vadd.f32 0.0, %v939
        %v941 = vpop.f32.mrb[0].mxu0
        %v942 = vpop.f32.mrb[0].mxu0
        %v943 = vadd.f32 0.0, %v942
        %v944 = vpop.f32.mrb[0].mxu0
        %945 = vmatprep.mubr.bf16.mxu0 0
        %946 = vmatmul.mubr.bf16.gmra.mrb[0].mxu0 %v819
        %v947 = vpop.f32.mrb[0].mxu0
        %v948 = vadd.f32 0.0, %v947
        %v949 = vpop.f32.mrb[0].mxu0
        %v950 = vpop.f32.mrb[0].mxu0
        %v951 = vadd.f32 0.0, %v950
        %v952 = vpop.f32.mrb[0].mxu0
        %953 = vdwg.mxu0
        %v954 = vld [vmem:[%s5] sm:$0xf]
        %v955 = vld [vmem:[%s6] sm:$0x1]
        %v957 = vlaneseq
        %v958 = vshrl.u32 %v957, 7
        %v959 = vsub.s32 0, %v958
        %v960 = vrot.slane %v955, %v959
        %vm970 = vcmask 1042432
        %v971 = vrot.slane %v856, 5
        %v972 = vrot.slane %v859, 5
        %v973 = vsel %vm970, %v971, %v972
        %v974 = vrot.slane %v864, 5
        %v975 = vsel %vm970, %v972, %v974
        %v976 = vrot.slane %v867, 5
        %v977 = vsel %vm970, %v974, %v976
        %v978 = vrot.slane %v872, 5
        %v979 = vsel %vm970, %v976, %v978
        %v980 = vrot.slane %v875, 5
        %v981 = vsel %vm970, %v978, %v980
        %v982 = vrot.slane %v880, 5
        %v983 = vsel %vm970, %v980, %v982
        %v984 = vrot.slane %v883, 5
        %v985 = vsel %vm970, %v982, %v984
        %v994 = vsel %vm970, 0.0, %v971
        %v995 = vlaneseq
        %v996 = vshrl.u32 %v995, 7
        %v997 = vsub.s32 0, %v996
        %v998 = vrot.slane %v954, %v997
        %v999 = vmul.f32 %v994, %v998
        %v1000 = vmul.f32 %v973, %v998
        %v1001 = vmul.f32 %v975, %v998
        %v1002 = vmul.f32 %v977, %v998
        %v1003 = vmul.f32 %v979, %v998
        %v1004 = vmul.f32 %v981, %v998
        %v1005 = vmul.f32 %v983, %v998
        %v1006 = vmul.f32 %v985, %v998
        %v1007 = vadd.f32 %v960, %v999
        %v1008 = vadd.f32 %v960, %v1000
        %v1009 = vadd.f32 %v960, %v1001
        %v1010 = vadd.f32 %v960, %v1002
        %v1011 = vadd.f32 %v960, %v1003
        %v1012 = vadd.f32 %v960, %v1004
        %v1013 = vadd.f32 %v960, %v1005
        %v1014 = vadd.f32 %v960, %v1006
        %vm1015 = vcmask 1041408
        %v1016 = vrot.slane %v856, 6
        %v1017 = vrot.slane %v859, 6
        %v1018 = vsel %vm1015, %v1016, %v1017
        %v1019 = vrot.slane %v864, 6
        %v1020 = vsel %vm1015, %v1017, %v1019
        %v1021 = vrot.slane %v867, 6
        %v1022 = vsel %vm1015, %v1019, %v1021
        %v1023 = vrot.slane %v872, 6
        %v1024 = vsel %vm1015, %v1021, %v1023
        %v1025 = vrot.slane %v875, 6
        %v1026 = vsel %vm1015, %v1023, %v1025
        %v1027 = vrot.slane %v880, 6
        %v1028 = vsel %vm1015, %v1025, %v1027
        %v1029 = vrot.slane %v883, 6
        %v1030 = vsel %vm1015, %v1027, %v1029
        %v1039 = vsel %vm1015, 0.0, %v1016
        %v1040 = vlaneseq
        %v1041 = vshrl.u32 %v1040, 7
        %v1042 = vsub.s32 1, %v1041
        %v1043 = vrot.slane %v954, %v1042
        %v1044 = vmul.f32 %v1039, %v1043
        %v1045 = vmul.f32 %v1018, %v1043
        %v1046 = vmul.f32 %v1020, %v1043
        %v1047 = vmul.f32 %v1022, %v1043
        %v1048 = vmul.f32 %v1024, %v1043
        %v1049 = vmul.f32 %v1026, %v1043
        %v1050 = vmul.f32 %v1028, %v1043
        %v1051 = vmul.f32 %v1030, %v1043
        %v1052 = vadd.f32 %v1007, %v1044
        %v1053 = vadd.f32 %v1008, %v1045
        %v1054 = vadd.f32 %v1009, %v1046
        %v1055 = vadd.f32 %v1010, %v1047
        %v1056 = vadd.f32 %v1011, %v1048
        %v1057 = vadd.f32 %v1012, %v1049
        %v1058 = vadd.f32 %v1013, %v1050
        %v1059 = vadd.f32 %v1014, %v1051
        %vm1060 = vcmask 1040384
        %v1061 = vrot.slane %v856, 7
        %v1062 = vrot.slane %v859, 7
        %v1063 = vsel %vm1060, %v1061, %v1062
        %v1064 = vrot.slane %v864, 7
        %v1065 = vsel %vm1060, %v1062, %v1064
        %v1066 = vrot.slane %v867, 7
        %v1067 = vsel %vm1060, %v1064, %v1066
        %v1068 = vrot.slane %v872, 7
        %v1069 = vsel %vm1060, %v1066, %v1068
        %v1070 = vrot.slane %v875, 7
        %v1071 = vsel %vm1060, %v1068, %v1070
        %v1072 = vrot.slane %v880, 7
        %v1073 = vsel %vm1060, %v1070, %v1072
        %v1074 = vrot.slane %v883, 7
        %v1075 = vsel %vm1060, %v1072, %v1074
        %v1084 = vsel %vm1060, 0.0, %v1061
        %v1085 = vlaneseq
        %v1086 = vshrl.u32 %v1085, 7
        %v1087 = vsub.s32 2, %v1086
        %v1088 = vrot.slane %v954, %v1087
        %v1089 = vmul.f32 %v1084, %v1088
        %v1090 = vmul.f32 %v1063, %v1088
        %v1091 = vmul.f32 %v1065, %v1088
        %v1092 = vmul.f32 %v1067, %v1088
        %v1093 = vmul.f32 %v1069, %v1088
        %v1094 = vmul.f32 %v1071, %v1088
        %v1095 = vmul.f32 %v1073, %v1088
        %v1096 = vmul.f32 %v1075, %v1088
        %v1097 = vadd.f32 %v1052, %v1089
        %v1098 = vadd.f32 %v1053, %v1090
        %v1099 = vadd.f32 %v1054, %v1091
        %v1100 = vadd.f32 %v1055, %v1092
        %v1101 = vadd.f32 %v1056, %v1093
        %v1102 = vadd.f32 %v1057, %v1094
        %v1103 = vadd.f32 %v1058, %v1095
        %v1104 = vadd.f32 %v1059, %v1096
        %v1105 = vlaneseq
        %v1106 = vshrl.u32 %v1105, 7
        %v1107 = vsub.s32 3, %v1106
        %v1108 = vrot.slane %v954, %v1107
        %v1109 = vmul.f32 %v856, %v1108
        %v1110 = vmul.f32 %v859, %v1108
        %v1111 = vmul.f32 %v864, %v1108
        %v1112 = vmul.f32 %v867, %v1108
        %v1113 = vmul.f32 %v872, %v1108
        %v1114 = vmul.f32 %v875, %v1108
        %v1115 = vmul.f32 %v880, %v1108
        %v1116 = vmul.f32 %v883, %v1108
        %v1117 = vadd.f32 %v1097, %v1109
        %v1118 = vadd.f32 %v1098, %v1110
        %v1119 = vadd.f32 %v1099, %v1111
        %v1120 = vadd.f32 %v1100, %v1112
        %v1121 = vadd.f32 %v1101, %v1113
        %v1122 = vadd.f32 %v1102, %v1114
        %v1123 = vadd.f32 %v1103, %v1115
        %v1124 = vadd.f32 %v1104, %v1116
        %v1125 = vmul.f32 %v1117, 0.5
        %v1126 = vmul.f32 %v1118, 0.5
        %v1127 = vmul.f32 %v1119, 0.5
        %v1128 = vmul.f32 %v1120, 0.5
        %v1129 = vmul.f32 %v1121, 0.5
        %v1130 = vmul.f32 %v1122, 0.5
        %v1131 = vmul.f32 %v1123, 0.5
        %v1132 = vmul.f32 %v1124, 0.5
        %v1133 = vtanh.pop %v1125
        %v1134 = vtanh.pop %v1126
        %v1135 = vtanh.pop %v1127
        %v1136 = vtanh.pop %v1128
        %v1137 = vtanh.pop %v1129
        %v1138 = vtanh.pop %v1130
        %v1139 = vtanh.pop %v1131
        %v1140 = vtanh.pop %v1132
        %v1141 = vadd.f32 %v1133, 1.0
        %v1142 = vadd.f32 %v1134, 1.0
        %v1143 = vadd.f32 %v1135, 1.0
        %v1144 = vadd.f32 %v1136, 1.0
        %v1145 = vadd.f32 %v1137, 1.0
        %v1146 = vadd.f32 %v1138, 1.0
        %v1147 = vadd.f32 %v1139, 1.0
        %v1148 = vadd.f32 %v1140, 1.0
        %v1149 = vmul.f32 %v1141, 0.5
        %v1150 = vmul.f32 %v1142, 0.5
        %v1151 = vmul.f32 %v1143, 0.5
        %v1152 = vmul.f32 %v1144, 0.5
        %v1153 = vmul.f32 %v1145, 0.5
        %v1154 = vmul.f32 %v1146, 0.5
        %v1155 = vmul.f32 %v1147, 0.5
        %v1156 = vmul.f32 %v1148, 0.5
        %v1157 = vmul.f32 %v1117, %v1149
        %v1158 = vmul.f32 %v1118, %v1150
        %v1159 = vmul.f32 %v1119, %v1151
        %v1160 = vmul.f32 %v1120, %v1152
        %v1161 = vmul.f32 %v1121, %v1153
        %v1162 = vmul.f32 %v1122, %v1154
        %v1163 = vmul.f32 %v1123, %v1155
        %v1164 = vmul.f32 %v1124, %v1156
        %v1165 = vld [vmem:[%s7] sm:$0xff]
        %v1166 = vld [vmem:[%s7 + $0x8] sm:$0xff]
        %v1167 = vld [vmem:[%s7 + $0x10] sm:$0xff]
        %v1168 = vld [vmem:[%s7 + $0x18] sm:$0xff]
        %v1169 = vpack.c.bf16 %v1158, %v1157
        %v1170 = vpack.c.bf16 %v1160, %v1159
        %v1171 = vpack.c.bf16 %v1162, %v1161
        %v1172 = vpack.c.bf16 %v1164, %v1163
        %v1173 = vpack.c.bf16 %v1166, %v1165
        %v1174 = vpack.c.bf16 %v1168, %v1167
        %vm1175 = vcmask 261120
        %v1177 = vsel %vm1175, %v1169, 0
        %v1180 = vsel %vm1175, %v1170, 0
        %v1183 = vsel %vm1175, %v1171, 0
        %v1186 = vsel %vm1175, %v1172, 0
        %1188 = vmatprep.subr.bf16.mxu0 0
        %1189 = vmatpush1.bf16.msra.mxu0 %v1173
        %1190 = vmatprep.subr.bf16.mxu0 0
        %1191 = vmatpush1.bf16.msra.mxu0 %v1174
        %1192 = vmatprep.subr.bf16.mxu0 0
        %1193 = vmatpush1.bf16.msra.mxu0 0
        %1194 = vmatprep.subr.bf16.mxu0 0
        %1195 = vmatpush1.bf16.msra.mxu0 0
        %1196 = vmatprep.subr.bf16.mxu0 0
        %1197 = vmatpush1.bf16.msra.mxu0 0
        %1198 = vmatprep.subr.bf16.mxu0 0
        %1199 = vmatpush1.bf16.msra.mxu0 0
        %1200 = vmatprep.subr.bf16.mxu0 0
        %1201 = vmatpush1.bf16.msra.mxu0 0
        %1202 = vmatprep.subr.bf16.mxu0 0
        %1203 = vmatpush1.bf16.msra.mxu0 0
        %1204 = vmatprep.subr.bf16.mxu0 0
        %1205 = vmatpush1.bf16.msra.mxu0 0
        %1206 = vmatprep.subr.bf16.mxu0 0
        %1207 = vmatpush1.bf16.msra.mxu0 0
        %1208 = vmatprep.subr.bf16.mxu0 0
        %1209 = vmatpush1.bf16.msra.mxu0 0
        %1210 = vmatprep.subr.bf16.mxu0 0
        %1211 = vmatpush1.bf16.msra.mxu0 0
        %1212 = vmatprep.subr.bf16.mxu0 0
        %1213 = vmatpush1.bf16.msra.mxu0 0
        %1214 = vmatprep.subr.bf16.mxu0 0
        %1215 = vmatpush1.bf16.msra.mxu0 0
        %1216 = vmatprep.subr.bf16.mxu0 0
        %1217 = vmatpush1.bf16.msra.mxu0 0
        %1218 = vmatprep.subr.bf16.mxu0 0
        %1219 = vmatpush1.bf16.msra.mxu0 0
        %1220 = vmatprep.mubr.bf16.mxu0 0
        %1221 = vmatmul.mubr.bf16.gmra.mrb[0].mxu0 %v1177
        %v1222 = vpop.f32.mrb[0].mxu0
        %v1223 = vadd.f32 0.0, %v1222
        %v1224 = vpop.f32.mrb[0].mxu0
        %v1225 = vpop.f32.mrb[0].mxu0
        %v1226 = vadd.f32 0.0, %v1225
        %v1227 = vpop.f32.mrb[0].mxu0
        %1228 = vmatprep.mubr.bf16.mxu0 0
        %1229 = vmatmul.mubr.bf16.gmra.mrb[0].mxu0 %v1180
        %v1230 = vpop.f32.mrb[0].mxu0
        %v1231 = vadd.f32 0.0, %v1230
        %v1232 = vpop.f32.mrb[0].mxu0
        %v1233 = vpop.f32.mrb[0].mxu0
        %v1234 = vadd.f32 0.0, %v1233
        %v1235 = vpop.f32.mrb[0].mxu0
        %1236 = vmatprep.mubr.bf16.mxu0 0
        %1237 = vmatmul.mubr.bf16.gmra.mrb[0].mxu0 %v1183
        %v1238 = vpop.f32.mrb[0].mxu0
        %v1239 = vadd.f32 0.0, %v1238
        %v1240 = vpop.f32.mrb[0].mxu0
        %v1241 = vpop.f32.mrb[0].mxu0
        %v1242 = vadd.f32 0.0, %v1241
        %v1243 = vpop.f32.mrb[0].mxu0
        %1244 = vmatprep.mubr.bf16.mxu0 0
        %1245 = vmatmul.mubr.bf16.gmra.mrb[0].mxu0 %v1186
        %v1246 = vpop.f32.mrb[0].mxu0
        %v1247 = vadd.f32 0.0, %v1246
        %v1248 = vpop.f32.mrb[0].mxu0
        %v1249 = vpop.f32.mrb[0].mxu0
        %v1250 = vadd.f32 0.0, %v1249
        %v1251 = vpop.f32.mrb[0].mxu0
        %1252 = vdwg.mxu0
        %v1253 = vld [vmem:[%s8] sm:$0xff]
        %v1254 = vld [vmem:[%s8 + $0x8] sm:$0xff]
        %v1255 = vld [vmem:[%s8 + $0x10] sm:$0xff]
        %v1256 = vld [vmem:[%s8 + $0x18] sm:$0xff]
        %v1257 = vpack.c.bf16 %v1254, %v1253
        %v1258 = vpack.c.bf16 %v1256, %v1255
        %1259 = vmatprep.subr.bf16.mxu0 0
        %1260 = vmatpush1.bf16.msra.mxu0 %v1257
        %1261 = vmatprep.subr.bf16.mxu0 0
        %1262 = vmatpush1.bf16.msra.mxu0 %v1258
        %1263 = vmatprep.subr.bf16.mxu0 0
        %1264 = vmatpush1.bf16.msra.mxu0 0
        %1265 = vmatprep.subr.bf16.mxu0 0
        %1266 = vmatpush1.bf16.msra.mxu0 0
        %1267 = vmatprep.subr.bf16.mxu0 0
        %1268 = vmatpush1.bf16.msra.mxu0 0
        %1269 = vmatprep.subr.bf16.mxu0 0
        %1270 = vmatpush1.bf16.msra.mxu0 0
        %1271 = vmatprep.subr.bf16.mxu0 0
        %1272 = vmatpush1.bf16.msra.mxu0 0
        %1273 = vmatprep.subr.bf16.mxu0 0
        %1274 = vmatpush1.bf16.msra.mxu0 0
        %1275 = vmatprep.subr.bf16.mxu0 0
        %1276 = vmatpush1.bf16.msra.mxu0 0
        %1277 = vmatprep.subr.bf16.mxu0 0
        %1278 = vmatpush1.bf16.msra.mxu0 0
        %1279 = vmatprep.subr.bf16.mxu0 0
        %1280 = vmatpush1.bf16.msra.mxu0 0
        %1281 = vmatprep.subr.bf16.mxu0 0
        %1282 = vmatpush1.bf16.msra.mxu0 0
        %1283 = vmatprep.subr.bf16.mxu0 0
        %1284 = vmatpush1.bf16.msra.mxu0 0
        %1285 = vmatprep.subr.bf16.mxu0 0
        %1286 = vmatpush1.bf16.msra.mxu0 0
        %1287 = vmatprep.subr.bf16.mxu0 0
        %1288 = vmatpush1.bf16.msra.mxu0 0
        %1289 = vmatprep.subr.bf16.mxu0 0
        %1290 = vmatpush1.bf16.msra.mxu0 0
        %1291 = vmatprep.mubr.bf16.mxu0 0
        %1292 = vmatmul.mubr.bf16.gmra.mrb[0].mxu0 %v1177
        %v1293 = vpop.f32.mrb[0].mxu0
        %v1294 = vadd.f32 0.0, %v1293
        %v1295 = vpop.f32.mrb[0].mxu0
        %v1296 = vpop.f32.mrb[0].mxu0
        %v1297 = vadd.f32 0.0, %v1296
        %v1298 = vpop.f32.mrb[0].mxu0
        %1299 = vmatprep.mubr.bf16.mxu0 0
        %1300 = vmatmul.mubr.bf16.gmra.mrb[0].mxu0 %v1180
        %v1301 = vpop.f32.mrb[0].mxu0
        %v1302 = vadd.f32 0.0, %v1301
        %v1303 = vpop.f32.mrb[0].mxu0
        %v1304 = vpop.f32.mrb[0].mxu0
        %v1305 = vadd.f32 0.0, %v1304
        %v1306 = vpop.f32.mrb[0].mxu0
        %1307 = vmatprep.mubr.bf16.mxu0 0
        %1308 = vmatmul.mubr.bf16.gmra.mrb[0].mxu0 %v1183
        %v1309 = vpop.f32.mrb[0].mxu0
        %v1310 = vadd.f32 0.0, %v1309
        %v1311 = vpop.f32.mrb[0].mxu0
        %v1312 = vpop.f32.mrb[0].mxu0
        %v1313 = vadd.f32 0.0, %v1312
        %v1314 = vpop.f32.mrb[0].mxu0
        %1315 = vmatprep.mubr.bf16.mxu0 0
        %1316 = vmatmul.mubr.bf16.gmra.mrb[0].mxu0 %v1186
        %v1317 = vpop.f32.mrb[0].mxu0
        %v1318 = vadd.f32 0.0, %v1317
        %v1319 = vpop.f32.mrb[0].mxu0
        %v1320 = vpop.f32.mrb[0].mxu0
        %v1321 = vadd.f32 0.0, %v1320
        %v1322 = vpop.f32.mrb[0].mxu0
        %1323 = vdwg.mxu0
        %v1324 = vld [vmem:[%s9] sm:$0xff]
        %v1325 = vld [vmem:[%s9 + $0x8] sm:$0xff]
        %v1326 = vld [vmem:[%s9 + $0x10] sm:$0xff]
        %v1327 = vld [vmem:[%s9 + $0x18] sm:$0xff]
        %v1328 = vpack.c.bf16 %v1325, %v1324
        %v1329 = vpack.c.bf16 %v1327, %v1326
        %1330 = vmatprep.subr.bf16.mxu0 0
        %1331 = vmatpush1.bf16.msra.mxu0 %v1328
        %1332 = vmatprep.subr.bf16.mxu0 0
        %1333 = vmatpush1.bf16.msra.mxu0 %v1329
        %1334 = vmatprep.subr.bf16.mxu0 0
        %1335 = vmatpush1.bf16.msra.mxu0 0
        %1336 = vmatprep.subr.bf16.mxu0 0
        %1337 = vmatpush1.bf16.msra.mxu0 0
        %1338 = vmatprep.subr.bf16.mxu0 0
        %1339 = vmatpush1.bf16.msra.mxu0 0
        %1340 = vmatprep.subr.bf16.mxu0 0
        %1341 = vmatpush1.bf16.msra.mxu0 0
        %1342 = vmatprep.subr.bf16.mxu0 0
        %1343 = vmatpush1.bf16.msra.mxu0 0
        %1344 = vmatprep.subr.bf16.mxu0 0
        %1345 = vmatpush1.bf16.msra.mxu0 0
        %1346 = vmatprep.subr.bf16.mxu0 0
        %1347 = vmatpush1.bf16.msra.mxu0 0
        %1348 = vmatprep.subr.bf16.mxu0 0
        %1349 = vmatpush1.bf16.msra.mxu0 0
        %1350 = vmatprep.subr.bf16.mxu0 0
        %1351 = vmatpush1.bf16.msra.mxu0 0
        %1352 = vmatprep.subr.bf16.mxu0 0
        %1353 = vmatpush1.bf16.msra.mxu0 0
        %1354 = vmatprep.subr.bf16.mxu0 0
        %1355 = vmatpush1.bf16.msra.mxu0 0
        %1356 = vmatprep.subr.bf16.mxu0 0
        %1357 = vmatpush1.bf16.msra.mxu0 0
        %1358 = vmatprep.subr.bf16.mxu0 0
        %1359 = vmatpush1.bf16.msra.mxu0 0
        %1360 = vmatprep.subr.bf16.mxu0 0
        %1361 = vmatpush1.bf16.msra.mxu0 0
        %1362 = vmatprep.mubr.bf16.mxu0 0
        %1363 = vmatmul.mubr.bf16.gmra.mrb[0].mxu0 %v1177
        %v1364 = vpop.f32.mrb[0].mxu0
        %v1365 = vadd.f32 0.0, %v1364
        %v1366 = vpop.f32.mrb[0].mxu0
        %v1367 = vpop.f32.mrb[0].mxu0
        %v1368 = vadd.f32 0.0, %v1367
        %v1369 = vpop.f32.mrb[0].mxu0
        %1370 = vmatprep.mubr.bf16.mxu0 0
        %1371 = vmatmul.mubr.bf16.gmra.mrb[0].mxu0 %v1180
        %v1372 = vpop.f32.mrb[0].mxu0
        %v1373 = vadd.f32 0.0, %v1372
        %v1374 = vpop.f32.mrb[0].mxu0
        %v1375 = vpop.f32.mrb[0].mxu0
        %v1376 = vadd.f32 0.0, %v1375
        %v1377 = vpop.f32.mrb[0].mxu0
        %1378 = vmatprep.mubr.bf16.mxu0 0
        %1379 = vmatmul.mubr.bf16.gmra.mrb[0].mxu0 %v1183
        %v1380 = vpop.f32.mrb[0].mxu0
        %v1381 = vadd.f32 0.0, %v1380
        %v1382 = vpop.f32.mrb[0].mxu0
        %v1383 = vpop.f32.mrb[0].mxu0
        %v1384 = vadd.f32 0.0, %v1383
        %v1385 = vpop.f32.mrb[0].mxu0
        %1386 = vmatprep.mubr.bf16.mxu0 0
        %1387 = vmatmul.mubr.bf16.gmra.mrb[0].mxu0 %v1186
        %v1388 = vpop.f32.mrb[0].mxu0
        %v1389 = vadd.f32 0.0, %v1388
        %v1390 = vpop.f32.mrb[0].mxu0
        %v1391 = vpop.f32.mrb[0].mxu0
        %v1392 = vadd.f32 0.0, %v1391
        %v1393 = vpop.f32.mrb[0].mxu0
        %1394 = vdwg.mxu0
        %v1395 = vld [vmem:[%s10] sm:$0xf]
        %v1396 = vpack.c.bf16 %v1226, %v1223
        %v1397 = vpack.c.bf16 %v1234, %v1231
        %v1398 = vpack.c.bf16 %v1242, %v1239
        %v1399 = vpack.c.bf16 %v1250, %v1247
        %v1400 = vpack.c.bf16 %v1395, %v1395
        %v1401 = vld [vmem:[%s11] sm:$0x1]
        %v1403 = vlaneseq
        %v1404 = vshrl.u32 %v1403, 7
        %v1405 = vsub.s32 0, %v1404
        %v1406 = vrot.slane %v1401, %v1405
        %vm1408 = vcmask 31744
        %v1410 = vsel %vm1408, %v1396, 0
        %v1413 = vsel %vm1408, %v1397, 0
        %v1416 = vsel %vm1408, %v1398, 0
        %v1419 = vsel %vm1408, %v1399, 0
        %v1422 = vsel %vm1015, %v1400, 0
        %1424 = vmatprep.subr.bf16.mxu0 0
        %1425 = vmatpush1.bf16.msra.mxu0 %v1422
        %1426 = vmatprep.subr.bf16.mxu0 0
        %1427 = vmatpush1.bf16.msra.mxu0 0
        %1428 = vmatprep.subr.bf16.mxu0 0
        %1429 = vmatpush1.bf16.msra.mxu0 0
        %1430 = vmatprep.subr.bf16.mxu0 0
        %1431 = vmatpush1.bf16.msra.mxu0 0
        %1432 = vmatprep.subr.bf16.mxu0 0
        %1433 = vmatpush1.bf16.msra.mxu0 0
        %1434 = vmatprep.subr.bf16.mxu0 0
        %1435 = vmatpush1.bf16.msra.mxu0 0
        %1436 = vmatprep.subr.bf16.mxu0 0
        %1437 = vmatpush1.bf16.msra.mxu0 0
        %1438 = vmatprep.subr.bf16.mxu0 0
        %1439 = vmatpush1.bf16.msra.mxu0 0
        %1440 = vmatprep.subr.bf16.mxu0 0
        %1441 = vmatpush1.bf16.msra.mxu0 0
        %1442 = vmatprep.subr.bf16.mxu0 0
        %1443 = vmatpush1.bf16.msra.mxu0 0
        %1444 = vmatprep.subr.bf16.mxu0 0
        %1445 = vmatpush1.bf16.msra.mxu0 0
        %1446 = vmatprep.subr.bf16.mxu0 0
        %1447 = vmatpush1.bf16.msra.mxu0 0
        %1448 = vmatprep.subr.bf16.mxu0 0
        %1449 = vmatpush1.bf16.msra.mxu0 0
        %1450 = vmatprep.subr.bf16.mxu0 0
        %1451 = vmatpush1.bf16.msra.mxu0 0
        %1452 = vmatprep.subr.bf16.mxu0 0
        %1453 = vmatpush1.bf16.msra.mxu0 0
        %1454 = vmatprep.subr.bf16.mxu0 0
        %1455 = vmatpush1.bf16.msra.mxu0 0
        %1456 = vmatprep.mubr.bf16.mxu0 0
        %1457 = vmatmul.mubr.bf16.gmra.mrb[0].mxu0 %v1410
        %v1458 = vpop.f32.mrb[0].mxu0
        %v1459 = vadd.f32 %v1406, %v1458
        %v1460 = vpop.f32.mrb[0].mxu0
        %v1461 = vpop.f32.mrb[0].mxu0
        %v1462 = vadd.f32 %v1406, %v1461
        %v1463 = vpop.f32.mrb[0].mxu0
        %1464 = vmatprep.mubr.bf16.mxu0 0
        %1465 = vmatmul.mubr.bf16.gmra.mrb[0].mxu0 %v1413
        %v1466 = vpop.f32.mrb[0].mxu0
        %v1467 = vadd.f32 %v1406, %v1466
        %v1468 = vpop.f32.mrb[0].mxu0
        %v1469 = vpop.f32.mrb[0].mxu0
        %v1470 = vadd.f32 %v1406, %v1469
        %v1471 = vpop.f32.mrb[0].mxu0
        %1472 = vmatprep.mubr.bf16.mxu0 0
        %1473 = vmatmul.mubr.bf16.gmra.mrb[0].mxu0 %v1416
        %v1474 = vpop.f32.mrb[0].mxu0
        %v1475 = vadd.f32 %v1406, %v1474
        %v1476 = vpop.f32.mrb[0].mxu0
        %v1477 = vpop.f32.mrb[0].mxu0
        %v1478 = vadd.f32 %v1406, %v1477
        %v1479 = vpop.f32.mrb[0].mxu0
        %1480 = vmatprep.mubr.bf16.mxu0 0
        %1481 = vmatmul.mubr.bf16.gmra.mrb[0].mxu0 %v1419
        %v1482 = vpop.f32.mrb[0].mxu0
        %v1483 = vadd.f32 %v1406, %v1482
        %v1484 = vpop.f32.mrb[0].mxu0
        %v1485 = vpop.f32.mrb[0].mxu0
        %v1486 = vadd.f32 %v1406, %v1485
        %v1487 = vpop.f32.mrb[0].mxu0
        %1488 = vdwg.mxu0
        %vm1489 = vcmp.gt.f32.partialorder %v1459, 20.0
        %vm1490 = vcmp.gt.f32.partialorder %v1462, 20.0
        %vm1491 = vcmp.gt.f32.partialorder %v1467, 20.0
        %vm1492 = vcmp.gt.f32.partialorder %v1470, 20.0
        %vm1493 = vcmp.gt.f32.partialorder %v1475, 20.0
        %vm1494 = vcmp.gt.f32.partialorder %v1478, 20.0
        %vm1495 = vcmp.gt.f32.partialorder %v1483, 20.0
        %vm1496 = vcmp.gt.f32.partialorder %v1486, 20.0
        %v1497 = vmin.f32 %v1459, 20.0
        %v1498 = vmin.f32 %v1462, 20.0
        %v1499 = vmin.f32 %v1467, 20.0
        %v1500 = vmin.f32 %v1470, 20.0
        %v1501 = vmin.f32 %v1475, 20.0
        %v1502 = vmin.f32 %v1478, 20.0
        %v1503 = vmin.f32 %v1483, 20.0
        %v1504 = vmin.f32 %v1486, 20.0
        %v1505 = vmul.f32 %v1497, 1.442695
        %v1506 = vpow.pop %v1505
        %v1507 = vmul.f32 %v1498, 1.442695
        %v1508 = vpow.pop %v1507
        %v1509 = vmul.f32 %v1499, 1.442695
        %v1510 = vpow.pop %v1509
        %v1511 = vmul.f32 %v1500, 1.442695
        %v1512 = vpow.pop %v1511
        %v1513 = vmul.f32 %v1501, 1.442695
        %v1514 = vpow.pop %v1513
        %v1515 = vmul.f32 %v1502, 1.442695
        %v1516 = vpow.pop %v1515
        %v1517 = vmul.f32 %v1503, 1.442695
        %v1518 = vpow.pop %v1517
        %v1519 = vmul.f32 %v1504, 1.442695
        %v1520 = vpow.pop %v1519
        %v1521 = vadd.f32 %v1506, 1.0
        %v1522 = vadd.f32 %v1508, 1.0
        %v1523 = vadd.f32 %v1510, 1.0
        %v1524 = vadd.f32 %v1512, 1.0
        %v1525 = vadd.f32 %v1514, 1.0
        %v1526 = vadd.f32 %v1516, 1.0
        %v1527 = vadd.f32 %v1518, 1.0
        %v1528 = vadd.f32 %v1520, 1.0
        %v1529 = vlog2.pop %v1521
        %v1530 = vmul.f32 %v1529, 0.6931472
        %v1531 = vlog2.pop %v1522
        %v1532 = vmul.f32 %v1531, 0.6931472
        %v1533 = vlog2.pop %v1523
        %v1534 = vmul.f32 %v1533, 0.6931472
        %v1535 = vlog2.pop %v1524
        %v1536 = vmul.f32 %v1535, 0.6931472
        %v1537 = vlog2.pop %v1525
        %v1538 = vmul.f32 %v1537, 0.6931472
        %v1539 = vlog2.pop %v1526
        %v1540 = vmul.f32 %v1539, 0.6931472
        %v1541 = vlog2.pop %v1527
        %v1542 = vmul.f32 %v1541, 0.6931472
        %v1543 = vlog2.pop %v1528
        %v1544 = vmul.f32 %v1543, 0.6931472
        %v1545 = vsel %vm1489, %v1459, %v1530
        %v1546 = vsel %vm1490, %v1462, %v1532
        %v1547 = vsel %vm1491, %v1467, %v1534
        %v1548 = vsel %vm1492, %v1470, %v1536
        %v1549 = vsel %vm1493, %v1475, %v1538
        %v1550 = vsel %vm1494, %v1478, %v1540
        %v1551 = vsel %vm1495, %v1483, %v1542
        %v1552 = vsel %vm1496, %v1486, %v1544
        %v1553 = vld [vmem:[%s18] sm:$0xff]
        %v1554 = vld [vmem:[%s18 + $0x8] sm:$0xff]
        %v1555 = vld [vmem:[%s18 + $0x10] sm:$0xff]
        %v1556 = vld [vmem:[%s18 + $0x18] sm:$0xff]
        %v1557 = vld [vmem:[%s18 + $0x20] sm:$0xff]
        %v1558 = vld [vmem:[%s18 + $0x28] sm:$0xff]
        %v1559 = vld [vmem:[%s18 + $0x30] sm:$0xff]
        %v1560 = vld [vmem:[%s18 + $0x38] sm:$0xff]
        %v1561 = vld [vmem:[%s18 + $0x40] sm:$0xff]
        %v1562 = vld [vmem:[%s18 + $0x48] sm:$0xff]
        %v1563 = vld [vmem:[%s18 + $0x50] sm:$0xff]
        %v1564 = vld [vmem:[%s18 + $0x58] sm:$0xff]
        %v1565 = vld [vmem:[%s18 + $0x60] sm:$0xff]
        %v1566 = vld [vmem:[%s18 + $0x68] sm:$0xff]
        %v1567 = vld [vmem:[%s18 + $0x70] sm:$0xff]
        %v1568 = vld [vmem:[%s18 + $0x78] sm:$0xff]
        %v1569 = vld [vmem:[%s19] sm:$0xff]
        %v1570 = vld [vmem:[%s19 + $0x8] sm:$0xff]
        %v1571 = vld [vmem:[%s19 + $0x10] sm:$0xff]
        %v1572 = vld [vmem:[%s19 + $0x18] sm:$0xff]
        %v1573 = vld [vmem:[%s19 + $0x20] sm:$0xff]
        %v1574 = vld [vmem:[%s19 + $0x28] sm:$0xff]
        %v1575 = vld [vmem:[%s19 + $0x30] sm:$0xff]
        %v1576 = vld [vmem:[%s19 + $0x38] sm:$0xff]
        %v1577 = vld [vmem:[%s19 + $0x40] sm:$0xff]
        %v1578 = vld [vmem:[%s19 + $0x48] sm:$0xff]
        %v1579 = vld [vmem:[%s19 + $0x50] sm:$0xff]
        %v1580 = vld [vmem:[%s19 + $0x58] sm:$0xff]
        %v1581 = vld [vmem:[%s19 + $0x60] sm:$0xff]
        %v1582 = vld [vmem:[%s19 + $0x68] sm:$0xff]
        %v1583 = vld [vmem:[%s19 + $0x70] sm:$0xff]
        %v1584 = vld [vmem:[%s19 + $0x78] sm:$0xff]
        %v1585 = vld [vmem:[%s19 + $0x80] sm:$0xff]
        %v1586 = vld [vmem:[%s19 + $0x88] sm:$0xff]
        %v1587 = vld [vmem:[%s19 + $0x90] sm:$0xff]
        %v1588 = vld [vmem:[%s19 + $0x98] sm:$0xff]
        %v1589 = vld [vmem:[%s19 + $0xa0] sm:$0xff]
        %v1590 = vld [vmem:[%s19 + $0xa8] sm:$0xff]
        %v1591 = vld [vmem:[%s19 + $0xb0] sm:$0xff]
        %v1592 = vld [vmem:[%s19 + $0xb8] sm:$0xff]
        %v1593 = vld [vmem:[%s19 + $0xc0] sm:$0xff]
        %v1594 = vld [vmem:[%s19 + $0xc8] sm:$0xff]
        %v1595 = vld [vmem:[%s19 + $0xd0] sm:$0xff]
        %v1596 = vld [vmem:[%s19 + $0xd8] sm:$0xff]
        %v1597 = vld [vmem:[%s19 + $0xe0] sm:$0xff]
        %v1598 = vld [vmem:[%s19 + $0xe8] sm:$0xff]
        %v1599 = vld [vmem:[%s19 + $0xf0] sm:$0xff]
        %v1600 = vld [vmem:[%s19 + $0xf8] sm:$0xff]
        %v1602 = vsel %vm1175, %v1545, 0
        %v1605 = vsel %vm1175, %v1546, 0
        %v1608 = vsel %vm1175, %v1547, 0
        %v1611 = vsel %vm1175, %v1548, 0
        %v1614 = vsel %vm1175, %v1549, 0
        %v1617 = vsel %vm1175, %v1550, 0
        %v1620 = vsel %vm1175, %v1551, 0
        %v1623 = vsel %vm1175, %v1552, 0
        %1625 = vmatprep.subr.mxu0 %v1554
        %1626 = vmatpush1.msra.mxu0 %v1553
        %1627 = vmatprep.subr.mxu0 %v1558
        %1628 = vmatpush1.msra.mxu0 %v1557
        %1629 = vmatprep.subr.mxu0 %v1562
        %1630 = vmatpush1.msra.mxu0 %v1561
        %1631 = vmatprep.subr.mxu0 %v1566
        %1632 = vmatpush1.msra.mxu0 %v1565
        %1633 = vmatprep.subr.mxu0 0.0
        %1634 = vmatpush1.msra.mxu0 0.0
        %1635 = vmatprep.subr.mxu0 0.0
        %1636 = vmatpush1.msra.mxu0 0.0
        %1637 = vmatprep.subr.mxu0 0.0
        %1638 = vmatpush1.msra.mxu0 0.0
        %1639 = vmatprep.subr.mxu0 0.0
        %1640 = vmatpush1.msra.mxu0 0.0
        %1641 = vmatprep.subr.mxu0 0.0
        %1642 = vmatpush1.msra.mxu0 0.0
        %1643 = vmatprep.subr.mxu0 0.0
        %1644 = vmatpush1.msra.mxu0 0.0
        %1645 = vmatprep.subr.mxu0 0.0
        %1646 = vmatpush1.msra.mxu0 0.0
        %1647 = vmatprep.subr.mxu0 0.0
        %1648 = vmatpush1.msra.mxu0 0.0
        %1649 = vmatprep.subr.mxu0 0.0
        %1650 = vmatpush1.msra.mxu0 0.0
        %1651 = vmatprep.subr.mxu0 0.0
        %1652 = vmatpush1.msra.mxu0 0.0
        %1653 = vmatprep.subr.mxu0 0.0
        %1654 = vmatpush1.msra.mxu0 0.0
        %1655 = vmatprep.subr.mxu0 0.0
        %1656 = vmatpush1.msra.mxu0 0.0
        %1657 = vmatprep.subr.mxu0 0.0
        %1658 = vmatpush1.msra.mxu0 0.0
        %1659 = vmatprep.subr.mxu0 0.0
        %1660 = vmatpush1.msra.mxu0 0.0
        %1661 = vmatprep.subr.mxu0 0.0
        %1662 = vmatpush1.msra.mxu0 0.0
        %1663 = vmatprep.subr.mxu0 0.0
        %1664 = vmatpush1.msra.mxu0 0.0
        %1665 = vmatprep.subr.mxu0 0.0
        %1666 = vmatpush1.msra.mxu0 0.0
        %1667 = vmatprep.subr.mxu0 0.0
        %1668 = vmatpush1.msra.mxu0 0.0
        %1669 = vmatprep.subr.mxu0 0.0
        %1670 = vmatpush1.msra.mxu0 0.0
        %1671 = vmatprep.subr.mxu0 0.0
        %1672 = vmatpush1.msra.mxu0 0.0
        %1673 = vmatprep.subr.mxu0 0.0
        %1674 = vmatpush1.msra.mxu0 0.0
        %1675 = vmatprep.subr.mxu0 0.0
        %1676 = vmatpush1.msra.mxu0 0.0
        %1677 = vmatprep.subr.mxu0 0.0
        %1678 = vmatpush1.msra.mxu0 0.0
        %1679 = vmatprep.subr.mxu0 0.0
        %1680 = vmatpush1.msra.mxu0 0.0
        %1681 = vmatprep.subr.mxu0 0.0
        %1682 = vmatpush1.msra.mxu0 0.0
        %1683 = vmatprep.subr.mxu0 0.0
        %1684 = vmatpush1.msra.mxu0 0.0
        %1685 = vmatprep.subr.mxu0 0.0
        %1686 = vmatpush1.msra.mxu0 0.0
        %1687 = vmatprep.subr.mxu0 0.0
        %1688 = vmatpush1.msra.mxu0 0.0
        %1689 = vmatprep.mubr.f32.mxu0 0.0
        %1690 = vmatmul.mubr.f32.gmra.mrb[0].mxu0 %v1602
        %v1691 = vpop.f32.mrb[0].mxu0
        %v1692 = vadd.f32 0.0, %v1691
        %v1693 = vpop.f32.mrb[0].mxu0
        %v1694 = vadd.f32 0.0, %v1693
        %1695 = vmatprep.mubr.f32.mxu0 0.0
        %1696 = vmatmul.mubr.f32.gmra.mrb[0].mxu0 %v1605
        %v1697 = vpop.f32.mrb[0].mxu0
        %v1698 = vadd.f32 0.0, %v1697
        %v1699 = vpop.f32.mrb[0].mxu0
        %v1700 = vadd.f32 0.0, %v1699
        %1701 = vmatprep.mubr.f32.mxu0 0.0
        %1702 = vmatmul.mubr.f32.gmra.mrb[0].mxu0 %v1608
        %v1703 = vpop.f32.mrb[0].mxu0
        %v1704 = vadd.f32 0.0, %v1703
        %v1705 = vpop.f32.mrb[0].mxu0
        %v1706 = vadd.f32 0.0, %v1705
        %1707 = vmatprep.mubr.f32.mxu0 0.0
        %1708 = vmatmul.mubr.f32.gmra.mrb[0].mxu0 %v1611
        %v1709 = vpop.f32.mrb[0].mxu0
        %v1710 = vadd.f32 0.0, %v1709
        %v1711 = vpop.f32.mrb[0].mxu0
        %v1712 = vadd.f32 0.0, %v1711
        %1713 = vmatprep.mubr.f32.mxu0 0.0
        %1714 = vmatmul.mubr.f32.gmra.mrb[0].mxu0 %v1614
        %v1715 = vpop.f32.mrb[0].mxu0
        %v1716 = vadd.f32 0.0, %v1715
        %v1717 = vpop.f32.mrb[0].mxu0
        %v1718 = vadd.f32 0.0, %v1717
        %1719 = vmatprep.mubr.f32.mxu0 0.0
        %1720 = vmatmul.mubr.f32.gmra.mrb[0].mxu0 %v1617
        %v1721 = vpop.f32.mrb[0].mxu0
        %v1722 = vadd.f32 0.0, %v1721
        %v1723 = vpop.f32.mrb[0].mxu0
        %v1724 = vadd.f32 0.0, %v1723
        %1725 = vmatprep.mubr.f32.mxu0 0.0
        %1726 = vmatmul.mubr.f32.gmra.mrb[0].mxu0 %v1620
        %v1727 = vpop.f32.mrb[0].mxu0
        %v1728 = vadd.f32 0.0, %v1727
        %v1729 = vpop.f32.mrb[0].mxu0
        %v1730 = vadd.f32 0.0, %v1729
        %1731 = vmatprep.mubr.f32.mxu0 0.0
        %1732 = vmatmul.mubr.f32.gmra.mrb[0].mxu0 %v1623
        %v1733 = vpop.f32.mrb[0].mxu0
        %v1734 = vadd.f32 0.0, %v1733
        %v1735 = vpop.f32.mrb[0].mxu0
        %v1736 = vadd.f32 0.0, %v1735
        %1737 = vdwg.mxu0
        %1738 = vmatprep.subr.mxu0 %v1556
        %1739 = vmatpush1.msra.mxu0 %v1555
        %1740 = vmatprep.subr.mxu0 %v1560
        %1741 = vmatpush1.msra.mxu0 %v1559
        %1742 = vmatprep.subr.mxu0 %v1564
        %1743 = vmatpush1.msra.mxu0 %v1563
        %1744 = vmatprep.subr.mxu0 %v1568
        %1745 = vmatpush1.msra.mxu0 %v1567
        %1746 = vmatprep.subr.mxu0 0.0
        %1747 = vmatpush1.msra.mxu0 0.0
        %1748 = vmatprep.subr.mxu0 0.0
        %1749 = vmatpush1.msra.mxu0 0.0
        %1750 = vmatprep.subr.mxu0 0.0
        %1751 = vmatpush1.msra.mxu0 0.0
        %1752 = vmatprep.subr.mxu0 0.0
        %1753 = vmatpush1.msra.mxu0 0.0
        %1754 = vmatprep.subr.mxu0 0.0
        %1755 = vmatpush1.msra.mxu0 0.0
        %1756 = vmatprep.subr.mxu0 0.0
        %1757 = vmatpush1.msra.mxu0 0.0
        %1758 = vmatprep.subr.mxu0 0.0
        %1759 = vmatpush1.msra.mxu0 0.0
        %1760 = vmatprep.subr.mxu0 0.0
        %1761 = vmatpush1.msra.mxu0 0.0
        %1762 = vmatprep.subr.mxu0 0.0
        %1763 = vmatpush1.msra.mxu0 0.0
        %1764 = vmatprep.subr.mxu0 0.0
        %1765 = vmatpush1.msra.mxu0 0.0
        %1766 = vmatprep.subr.mxu0 0.0
        %1767 = vmatpush1.msra.mxu0 0.0
        %1768 = vmatprep.subr.mxu0 0.0
        %1769 = vmatpush1.msra.mxu0 0.0
        %1770 = vmatprep.subr.mxu0 0.0
        %1771 = vmatpush1.msra.mxu0 0.0
        %1772 = vmatprep.subr.mxu0 0.0
        %1773 = vmatpush1.msra.mxu0 0.0
        %1774 = vmatprep.subr.mxu0 0.0
        %1775 = vmatpush1.msra.mxu0 0.0
        %1776 = vmatprep.subr.mxu0 0.0
        %1777 = vmatpush1.msra.mxu0 0.0
        %1778 = vmatprep.subr.mxu0 0.0
        %1779 = vmatpush1.msra.mxu0 0.0
        %1780 = vmatprep.subr.mxu0 0.0
        %1781 = vmatpush1.msra.mxu0 0.0
        %1782 = vmatprep.subr.mxu0 0.0
        %1783 = vmatpush1.msra.mxu0 0.0
        %1784 = vmatprep.subr.mxu0 0.0
        %1785 = vmatpush1.msra.mxu0 0.0
        %1786 = vmatprep.subr.mxu0 0.0
        %1787 = vmatpush1.msra.mxu0 0.0
        %1788 = vmatprep.subr.mxu0 0.0
        %1789 = vmatpush1.msra.mxu0 0.0
        %1790 = vmatprep.subr.mxu0 0.0
        %1791 = vmatpush1.msra.mxu0 0.0
        %1792 = vmatprep.subr.mxu0 0.0
        %1793 = vmatpush1.msra.mxu0 0.0
        %1794 = vmatprep.subr.mxu0 0.0
        %1795 = vmatpush1.msra.mxu0 0.0
        %1796 = vmatprep.subr.mxu0 0.0
        %1797 = vmatpush1.msra.mxu0 0.0
        %1798 = vmatprep.subr.mxu0 0.0
        %1799 = vmatpush1.msra.mxu0 0.0
        %1800 = vmatprep.subr.mxu0 0.0
        %1801 = vmatpush1.msra.mxu0 0.0
        %1802 = vmatprep.mubr.f32.mxu0 0.0
        %1803 = vmatmul.mubr.f32.gmra.mrb[0].mxu0 %v1602
        %v1804 = vpop.f32.mrb[0].mxu0
        %v1805 = vadd.f32 0.0, %v1804
        %v1806 = vpop.f32.mrb[0].mxu0
        %v1807 = vadd.f32 0.0, %v1806
        %1808 = vmatprep.mubr.f32.mxu0 0.0
        %1809 = vmatmul.mubr.f32.gmra.mrb[0].mxu0 %v1605
        %v1810 = vpop.f32.mrb[0].mxu0
        %v1811 = vadd.f32 0.0, %v1810
        %v1812 = vpop.f32.mrb[0].mxu0
        %v1813 = vadd.f32 0.0, %v1812
        %1814 = vmatprep.mubr.f32.mxu0 0.0
        %1815 = vmatmul.mubr.f32.gmra.mrb[0].mxu0 %v1608
        %v1816 = vpop.f32.mrb[0].mxu0
        %v1817 = vadd.f32 0.0, %v1816
        %v1818 = vpop.f32.mrb[0].mxu0
        %v1819 = vadd.f32 0.0, %v1818
        %1820 = vmatprep.mubr.f32.mxu0 0.0
        %1821 = vmatmul.mubr.f32.gmra.mrb[0].mxu0 %v1611
        %v1822 = vpop.f32.mrb[0].mxu0
        %v1823 = vadd.f32 0.0, %v1822
        %v1824 = vpop.f32.mrb[0].mxu0
        %v1825 = vadd.f32 0.0, %v1824
        %1826 = vmatprep.mubr.f32.mxu0 0.0
        %1827 = vmatmul.mubr.f32.gmra.mrb[0].mxu0 %v1614
        %v1828 = vpop.f32.mrb[0].mxu0
        %v1829 = vadd.f32 0.0, %v1828
        %v1830 = vpop.f32.mrb[0].mxu0
        %v1831 = vadd.f32 0.0, %v1830
        %1832 = vmatprep.mubr.f32.mxu0 0.0
        %1833 = vmatmul.mubr.f32.gmra.mrb[0].mxu0 %v1617
        %v1834 = vpop.f32.mrb[0].mxu0
        %v1835 = vadd.f32 0.0, %v1834
        %v1836 = vpop.f32.mrb[0].mxu0
        %v1837 = vadd.f32 0.0, %v1836
        %1838 = vmatprep.mubr.f32.mxu0 0.0
        %1839 = vmatmul.mubr.f32.gmra.mrb[0].mxu0 %v1620
        %v1840 = vpop.f32.mrb[0].mxu0
        %v1841 = vadd.f32 0.0, %v1840
        %v1842 = vpop.f32.mrb[0].mxu0
        %v1843 = vadd.f32 0.0, %v1842
        %1844 = vmatprep.mubr.f32.mxu0 0.0
        %1845 = vmatmul.mubr.f32.gmra.mrb[0].mxu0 %v1623
        %v1846 = vpop.f32.mrb[0].mxu0
        %v1847 = vadd.f32 0.0, %v1846
        %v1848 = vpop.f32.mrb[0].mxu0
        %v1849 = vadd.f32 0.0, %v1848
        %1850 = vdwg.mxu0
        %v1851 = vmul.f32 %v1545, %v1157
        %v1852 = vmul.f32 %v1546, %v1158
        %v1853 = vmul.f32 %v1547, %v1159
        %v1854 = vmul.f32 %v1548, %v1160
        %v1855 = vmul.f32 %v1549, %v1161
        %v1856 = vmul.f32 %v1550, %v1162
        %v1857 = vmul.f32 %v1551, %v1163
        %v1858 = vmul.f32 %v1552, %v1164
        %v1860 = vsel %vm1175, %v1851, 0
        %v1863 = vsel %vm1175, %v1852, 0
        %v1866 = vsel %vm1175, %v1853, 0
        %v1869 = vsel %vm1175, %v1854, 0
        %v1872 = vsel %vm1175, %v1855, 0
        %v1875 = vsel %vm1175, %v1856, 0
        %v1878 = vsel %vm1175, %v1857, 0
        %v1881 = vsel %vm1175, %v1858, 0
        %1883 = vmatprep.subr.mxu0 %v1554
        %1884 = vmatpush1.msra.mxu0 %v1553
        %1885 = vmatprep.subr.mxu0 %v1558
        %1886 = vmatpush1.msra.mxu0 %v1557
        %1887 = vmatprep.subr.mxu0 %v1562
        %1888 = vmatpush1.msra.mxu0 %v1561
        %1889 = vmatprep.subr.mxu0 %v1566
        %1890 = vmatpush1.msra.mxu0 %v1565
        %1891 = vmatprep.subr.mxu0 0.0
        %1892 = vmatpush1.msra.mxu0 0.0
        %1893 = vmatprep.subr.mxu0 0.0
        %1894 = vmatpush1.msra.mxu0 0.0
        %1895 = vmatprep.subr.mxu0 0.0
        %1896 = vmatpush1.msra.mxu0 0.0
        %1897 = vmatprep.subr.mxu0 0.0
        %1898 = vmatpush1.msra.mxu0 0.0
        %1899 = vmatprep.subr.mxu0 0.0
        %1900 = vmatpush1.msra.mxu0 0.0
        %1901 = vmatprep.subr.mxu0 0.0
        %1902 = vmatpush1.msra.mxu0 0.0
        %1903 = vmatprep.subr.mxu0 0.0
        %1904 = vmatpush1.msra.mxu0 0.0
        %1905 = vmatprep.subr.mxu0 0.0
        %1906 = vmatpush1.msra.mxu0 0.0
        %1907 = vmatprep.subr.mxu0 0.0
        %1908 = vmatpush1.msra.mxu0 0.0
        %1909 = vmatprep.subr.mxu0 0.0
        %1910 = vmatpush1.msra.mxu0 0.0
        %1911 = vmatprep.subr.mxu0 0.0
        %1912 = vmatpush1.msra.mxu0 0.0
        %1913 = vmatprep.subr.mxu0 0.0
        %1914 = vmatpush1.msra.mxu0 0.0
        %1915 = vmatprep.subr.mxu0 0.0
        %1916 = vmatpush1.msra.mxu0 0.0
        %1917 = vmatprep.subr.mxu0 0.0
        %1918 = vmatpush1.msra.mxu0 0.0
        %1919 = vmatprep.subr.mxu0 0.0
        %1920 = vmatpush1.msra.mxu0 0.0
        %1921 = vmatprep.subr.mxu0 0.0
        %1922 = vmatpush1.msra.mxu0 0.0
        %1923 = vmatprep.subr.mxu0 0.0
        %1924 = vmatpush1.msra.mxu0 0.0
        %1925 = vmatprep.subr.mxu0 0.0
        %1926 = vmatpush1.msra.mxu0 0.0
        %1927 = vmatprep.subr.mxu0 0.0
        %1928 = vmatpush1.msra.mxu0 0.0
        %1929 = vmatprep.subr.mxu0 0.0
        %1930 = vmatpush1.msra.mxu0 0.0
        %1931 = vmatprep.subr.mxu0 0.0
        %1932 = vmatpush1.msra.mxu0 0.0
        %1933 = vmatprep.subr.mxu0 0.0
        %1934 = vmatpush1.msra.mxu0 0.0
        %1935 = vmatprep.subr.mxu0 0.0
        %1936 = vmatpush1.msra.mxu0 0.0
        %1937 = vmatprep.subr.mxu0 0.0
        %1938 = vmatpush1.msra.mxu0 0.0
        %1939 = vmatprep.subr.mxu0 0.0
        %1940 = vmatpush1.msra.mxu0 0.0
        %1941 = vmatprep.subr.mxu0 0.0
        %1942 = vmatpush1.msra.mxu0 0.0
        %1943 = vmatprep.subr.mxu0 0.0
        %1944 = vmatpush1.msra.mxu0 0.0
        %1945 = vmatprep.subr.mxu0 0.0
        %1946 = vmatpush1.msra.mxu0 0.0
        %1947 = vmatprep.mubr.f32.mxu0 0.0
        %1948 = vmatmul.mubr.f32.gmra.mrb[0].mxu0 %v1860
        %v1949 = vpop.f32.mrb[0].mxu0
        %v1950 = vadd.f32 0.0, %v1949
        %v1951 = vpop.f32.mrb[0].mxu0
        %v1952 = vadd.f32 0.0, %v1951
        %1953 = vmatprep.mubr.f32.mxu0 0.0
        %1954 = vmatmul.mubr.f32.gmra.mrb[0].mxu0 %v1863
        %v1955 = vpop.f32.mrb[0].mxu0
        %v1956 = vadd.f32 0.0, %v1955
        %v1957 = vpop.f32.mrb[0].mxu0
        %v1958 = vadd.f32 0.0, %v1957
        %1959 = vmatprep.mubr.f32.mxu0 0.0
        %1960 = vmatmul.mubr.f32.gmra.mrb[0].mxu0 %v1866
        %v1961 = vpop.f32.mrb[0].mxu0
        %v1962 = vadd.f32 0.0, %v1961
        %v1963 = vpop.f32.mrb[0].mxu0
        %v1964 = vadd.f32 0.0, %v1963
        %1965 = vmatprep.mubr.f32.mxu0 0.0
        %1966 = vmatmul.mubr.f32.gmra.mrb[0].mxu0 %v1869
        %v1967 = vpop.f32.mrb[0].mxu0
        %v1968 = vadd.f32 0.0, %v1967
        %v1969 = vpop.f32.mrb[0].mxu0
        %v1970 = vadd.f32 0.0, %v1969
        %1971 = vmatprep.mubr.f32.mxu0 0.0
        %1972 = vmatmul.mubr.f32.gmra.mrb[0].mxu0 %v1872
        %v1973 = vpop.f32.mrb[0].mxu0
        %v1974 = vadd.f32 0.0, %v1973
        %v1975 = vpop.f32.mrb[0].mxu0
        %v1976 = vadd.f32 0.0, %v1975
        %1977 = vmatprep.mubr.f32.mxu0 0.0
        %1978 = vmatmul.mubr.f32.gmra.mrb[0].mxu0 %v1875
        %v1979 = vpop.f32.mrb[0].mxu0
        %v1980 = vadd.f32 0.0, %v1979
        %v1981 = vpop.f32.mrb[0].mxu0
        %v1982 = vadd.f32 0.0, %v1981
        %1983 = vmatprep.mubr.f32.mxu0 0.0
        %1984 = vmatmul.mubr.f32.gmra.mrb[0].mxu0 %v1878
        %v1985 = vpop.f32.mrb[0].mxu0
        %v1986 = vadd.f32 0.0, %v1985
        %v1987 = vpop.f32.mrb[0].mxu0
        %v1988 = vadd.f32 0.0, %v1987
        %1989 = vmatprep.mubr.f32.mxu0 0.0
        %1990 = vmatmul.mubr.f32.gmra.mrb[0].mxu0 %v1881
        %v1991 = vpop.f32.mrb[0].mxu0
        %v1992 = vadd.f32 0.0, %v1991
        %v1993 = vpop.f32.mrb[0].mxu0
        %v1994 = vadd.f32 0.0, %v1993
        %1995 = vdwg.mxu0
        %1996 = vmatprep.subr.mxu0 %v1556
        %1997 = vmatpush1.msra.mxu0 %v1555
        %1998 = vmatprep.subr.mxu0 %v1560
        %1999 = vmatpush1.msra.mxu0 %v1559
        %2000 = vmatprep.subr.mxu0 %v1564
        %2001 = vmatpush1.msra.mxu0 %v1563
        %2002 = vmatprep.subr.mxu0 %v1568
        %2003 = vmatpush1.msra.mxu0 %v1567
        %2004 = vmatprep.subr.mxu0 0.0
        %2005 = vmatpush1.msra.mxu0 0.0
        %2006 = vmatprep.subr.mxu0 0.0
        %2007 = vmatpush1.msra.mxu0 0.0
        %2008 = vmatprep.subr.mxu0 0.0
        %2009 = vmatpush1.msra.mxu0 0.0
        %2010 = vmatprep.subr.mxu0 0.0
        %2011 = vmatpush1.msra.mxu0 0.0
        %2012 = vmatprep.subr.mxu0 0.0
        %2013 = vmatpush1.msra.mxu0 0.0
        %2014 = vmatprep.subr.mxu0 0.0
        %2015 = vmatpush1.msra.mxu0 0.0
        %2016 = vmatprep.subr.mxu0 0.0
        %2017 = vmatpush1.msra.mxu0 0.0
        %2018 = vmatprep.subr.mxu0 0.0
        %2019 = vmatpush1.msra.mxu0 0.0
        %2020 = vmatprep.subr.mxu0 0.0
        %2021 = vmatpush1.msra.mxu0 0.0
        %2022 = vmatprep.subr.mxu0 0.0
        %2023 = vmatpush1.msra.mxu0 0.0
        %2024 = vmatprep.subr.mxu0 0.0
        %2025 = vmatpush1.msra.mxu0 0.0
        %2026 = vmatprep.subr.mxu0 0.0
        %2027 = vmatpush1.msra.mxu0 0.0
        %2028 = vmatprep.subr.mxu0 0.0
        %2029 = vmatpush1.msra.mxu0 0.0
        %2030 = vmatprep.subr.mxu0 0.0
        %2031 = vmatpush1.msra.mxu0 0.0
        %2032 = vmatprep.subr.mxu0 0.0
        %2033 = vmatpush1.msra.mxu0 0.0
        %2034 = vmatprep.subr.mxu0 0.0
        %2035 = vmatpush1.msra.mxu0 0.0
        %2036 = vmatprep.subr.mxu0 0.0
        %2037 = vmatpush1.msra.mxu0 0.0
        %2038 = vmatprep.subr.mxu0 0.0
        %2039 = vmatpush1.msra.mxu0 0.0
        %2040 = vmatprep.subr.mxu0 0.0
        %2041 = vmatpush1.msra.mxu0 0.0
        %2042 = vmatprep.subr.mxu0 0.0
        %2043 = vmatpush1.msra.mxu0 0.0
        %2044 = vmatprep.subr.mxu0 0.0
        %2045 = vmatpush1.msra.mxu0 0.0
        %2046 = vmatprep.subr.mxu0 0.0
        %2047 = vmatpush1.msra.mxu0 0.0
        %2048 = vmatprep.subr.mxu0 0.0
        %2049 = vmatpush1.msra.mxu0 0.0
        %2050 = vmatprep.subr.mxu0 0.0
        %2051 = vmatpush1.msra.mxu0 0.0
        %2052 = vmatprep.subr.mxu0 0.0
        %2053 = vmatpush1.msra.mxu0 0.0
        %2054 = vmatprep.subr.mxu0 0.0
        %2055 = vmatpush1.msra.mxu0 0.0
        %2056 = vmatprep.subr.mxu0 0.0
        %2057 = vmatpush1.msra.mxu0 0.0
        %2058 = vmatprep.subr.mxu0 0.0
        %2059 = vmatpush1.msra.mxu0 0.0
        %2060 = vmatprep.mubr.f32.mxu0 0.0
        %2061 = vmatmul.mubr.f32.gmra.mrb[0].mxu0 %v1860
        %v2062 = vpop.f32.mrb[0].mxu0
        %v2063 = vadd.f32 0.0, %v2062
        %v2064 = vpop.f32.mrb[0].mxu0
        %v2065 = vadd.f32 0.0, %v2064
        %2066 = vmatprep.mubr.f32.mxu0 0.0
        %2067 = vmatmul.mubr.f32.gmra.mrb[0].mxu0 %v1863
        %v2068 = vpop.f32.mrb[0].mxu0
        %v2069 = vadd.f32 0.0, %v2068
        %v2070 = vpop.f32.mrb[0].mxu0
        %v2071 = vadd.f32 0.0, %v2070
        %2072 = vmatprep.mubr.f32.mxu0 0.0
        %2073 = vmatmul.mubr.f32.gmra.mrb[0].mxu0 %v1866
        %v2074 = vpop.f32.mrb[0].mxu0
        %v2075 = vadd.f32 0.0, %v2074
        %v2076 = vpop.f32.mrb[0].mxu0
        %v2077 = vadd.f32 0.0, %v2076
        %2078 = vmatprep.mubr.f32.mxu0 0.0
        %2079 = vmatmul.mubr.f32.gmra.mrb[0].mxu0 %v1869
        %v2080 = vpop.f32.mrb[0].mxu0
        %v2081 = vadd.f32 0.0, %v2080
        %v2082 = vpop.f32.mrb[0].mxu0
        %v2083 = vadd.f32 0.0, %v2082
        %2084 = vmatprep.mubr.f32.mxu0 0.0
        %2085 = vmatmul.mubr.f32.gmra.mrb[0].mxu0 %v1872
        %v2086 = vpop.f32.mrb[0].mxu0
        %v2087 = vadd.f32 0.0, %v2086
        %v2088 = vpop.f32.mrb[0].mxu0
        %v2089 = vadd.f32 0.0, %v2088
        %2090 = vmatprep.mubr.f32.mxu0 0.0
        %2091 = vmatmul.mubr.f32.gmra.mrb[0].mxu0 %v1875
        %v2092 = vpop.f32.mrb[0].mxu0
        %v2093 = vadd.f32 0.0, %v2092
        %v2094 = vpop.f32.mrb[0].mxu0
        %v2095 = vadd.f32 0.0, %v2094
        %2096 = vmatprep.mubr.f32.mxu0 0.0
        %2097 = vmatmul.mubr.f32.gmra.mrb[0].mxu0 %v1878
        %v2098 = vpop.f32.mrb[0].mxu0
        %v2099 = vadd.f32 0.0, %v2098
        %v2100 = vpop.f32.mrb[0].mxu0
        %v2101 = vadd.f32 0.0, %v2100
        %2102 = vmatprep.mubr.f32.mxu0 0.0
        %2103 = vmatmul.mubr.f32.gmra.mrb[0].mxu0 %v1881
        %v2104 = vpop.f32.mrb[0].mxu0
        %v2105 = vadd.f32 0.0, %v2104
        %v2106 = vpop.f32.mrb[0].mxu0
        %v2107 = vadd.f32 0.0, %v2106
        %2108 = vdwg.mxu0
        %vm2109 = vcmask 523264
        %v2111 = vsel %vm2109, %v1294, 0
        %v2114 = vsel %vm2109, %v1297, 0
        %v2117 = vsel %vm2109, %v1302, 0
        %v2120 = vsel %vm2109, %v1305, 0
        %v2123 = vsel %vm2109, %v1310, 0
        %v2126 = vsel %vm2109, %v1313, 0
        %v2129 = vsel %vm2109, %v1318, 0
        %v2132 = vsel %vm2109, %v1321, 0
        %2134 = vmatprep.subr.mxu0 %v1570
        %2135 = vmatpush1.msra.mxu0 %v1569
        %2136 = vmatprep.subr.mxu0 %v1574
        %2137 = vmatpush1.msra.mxu0 %v1573
        %2138 = vmatprep.subr.mxu0 %v1578
        %2139 = vmatpush1.msra.mxu0 %v1577
        %2140 = vmatprep.subr.mxu0 %v1582
        %2141 = vmatpush1.msra.mxu0 %v1581
        %2142 = vmatprep.subr.mxu0 %v1586
        %2143 = vmatpush1.msra.mxu0 %v1585
        %2144 = vmatprep.subr.mxu0 %v1590
        %2145 = vmatpush1.msra.mxu0 %v1589
        %2146 = vmatprep.subr.mxu0 %v1594
        %2147 = vmatpush1.msra.mxu0 %v1593
        %2148 = vmatprep.subr.mxu0 %v1598
        %2149 = vmatpush1.msra.mxu0 %v1597
        %2150 = vmatprep.subr.mxu0 0.0
        %2151 = vmatpush1.msra.mxu0 0.0
        %2152 = vmatprep.subr.mxu0 0.0
        %2153 = vmatpush1.msra.mxu0 0.0
        %2154 = vmatprep.subr.mxu0 0.0
        %2155 = vmatpush1.msra.mxu0 0.0
        %2156 = vmatprep.subr.mxu0 0.0
        %2157 = vmatpush1.msra.mxu0 0.0
        %2158 = vmatprep.subr.mxu0 0.0
        %2159 = vmatpush1.msra.mxu0 0.0
        %2160 = vmatprep.subr.mxu0 0.0
        %2161 = vmatpush1.msra.mxu0 0.0
        %2162 = vmatprep.subr.mxu0 0.0
        %2163 = vmatpush1.msra.mxu0 0.0
        %2164 = vmatprep.subr.mxu0 0.0
        %2165 = vmatpush1.msra.mxu0 0.0
        %2166 = vmatprep.subr.mxu0 0.0
        %2167 = vmatpush1.msra.mxu0 0.0
        %2168 = vmatprep.subr.mxu0 0.0
        %2169 = vmatpush1.msra.mxu0 0.0
        %2170 = vmatprep.subr.mxu0 0.0
        %2171 = vmatpush1.msra.mxu0 0.0
        %2172 = vmatprep.subr.mxu0 0.0
        %2173 = vmatpush1.msra.mxu0 0.0
        %2174 = vmatprep.subr.mxu0 0.0
        %2175 = vmatpush1.msra.mxu0 0.0
        %2176 = vmatprep.subr.mxu0 0.0
        %2177 = vmatpush1.msra.mxu0 0.0
        %2178 = vmatprep.subr.mxu0 0.0
        %2179 = vmatpush1.msra.mxu0 0.0
        %2180 = vmatprep.subr.mxu0 0.0
        %2181 = vmatpush1.msra.mxu0 0.0
        %2182 = vmatprep.subr.mxu0 0.0
        %2183 = vmatpush1.msra.mxu0 0.0
        %2184 = vmatprep.subr.mxu0 0.0
        %2185 = vmatpush1.msra.mxu0 0.0
        %2186 = vmatprep.subr.mxu0 0.0
        %2187 = vmatpush1.msra.mxu0 0.0
        %2188 = vmatprep.subr.mxu0 0.0
        %2189 = vmatpush1.msra.mxu0 0.0
        %2190 = vmatprep.subr.mxu0 0.0
        %2191 = vmatpush1.msra.mxu0 0.0
        %2192 = vmatprep.subr.mxu0 0.0
        %2193 = vmatpush1.msra.mxu0 0.0
        %2194 = vmatprep.subr.mxu0 0.0
        %2195 = vmatpush1.msra.mxu0 0.0
        %2196 = vmatprep.subr.mxu0 0.0
        %2197 = vmatpush1.msra.mxu0 0.0
        %2198 = vmatprep.mubr.f32.mxu0 0.0
        %2199 = vmatmul.mubr.f32.gmra.mrb[0].mxu0 %v2111
        %v2200 = vpop.f32.mrb[0].mxu0
        %v2201 = vadd.f32 0.0, %v2200
        %v2202 = vpop.f32.mrb[0].mxu0
        %v2203 = vadd.f32 0.0, %v2202
        %2204 = vmatprep.mubr.f32.mxu0 0.0
        %2205 = vmatmul.mubr.f32.gmra.mrb[0].mxu0 %v2114
        %v2206 = vpop.f32.mrb[0].mxu0
        %v2207 = vadd.f32 0.0, %v2206
        %v2208 = vpop.f32.mrb[0].mxu0
        %v2209 = vadd.f32 0.0, %v2208
        %2210 = vmatprep.mubr.f32.mxu0 0.0
        %2211 = vmatmul.mubr.f32.gmra.mrb[0].mxu0 %v2117
        %v2212 = vpop.f32.mrb[0].mxu0
        %v2213 = vadd.f32 0.0, %v2212
        %v2214 = vpop.f32.mrb[0].mxu0
        %v2215 = vadd.f32 0.0, %v2214
        %2216 = vmatprep.mubr.f32.mxu0 0.0
        %2217 = vmatmul.mubr.f32.gmra.mrb[0].mxu0 %v2120
        %v2218 = vpop.f32.mrb[0].mxu0
        %v2219 = vadd.f32 0.0, %v2218
        %v2220 = vpop.f32.mrb[0].mxu0
        %v2221 = vadd.f32 0.0, %v2220
        %2222 = vmatprep.mubr.f32.mxu0 0.0
        %2223 = vmatmul.mubr.f32.gmra.mrb[0].mxu0 %v2123
        %v2224 = vpop.f32.mrb[0].mxu0
        %v2225 = vadd.f32 0.0, %v2224
        %v2226 = vpop.f32.mrb[0].mxu0
        %v2227 = vadd.f32 0.0, %v2226
        %2228 = vmatprep.mubr.f32.mxu0 0.0
        %2229 = vmatmul.mubr.f32.gmra.mrb[0].mxu0 %v2126
        %v2230 = vpop.f32.mrb[0].mxu0
        %v2231 = vadd.f32 0.0, %v2230
        %v2232 = vpop.f32.mrb[0].mxu0
        %v2233 = vadd.f32 0.0, %v2232
        %2234 = vmatprep.mubr.f32.mxu0 0.0
        %2235 = vmatmul.mubr.f32.gmra.mrb[0].mxu0 %v2129
        %v2236 = vpop.f32.mrb[0].mxu0
        %v2237 = vadd.f32 0.0, %v2236
        %v2238 = vpop.f32.mrb[0].mxu0
        %v2239 = vadd.f32 0.0, %v2238
        %2240 = vmatprep.mubr.f32.mxu0 0.0
        %2241 = vmatmul.mubr.f32.gmra.mrb[0].mxu0 %v2132
        %v2242 = vpop.f32.mrb[0].mxu0
        %v2243 = vadd.f32 0.0, %v2242
        %v2244 = vpop.f32.mrb[0].mxu0
        %v2245 = vadd.f32 0.0, %v2244
        %2246 = vdwg.mxu0
        %2247 = vmatprep.subr.mxu0 %v1572
        %2248 = vmatpush1.msra.mxu0 %v1571
        %2249 = vmatprep.subr.mxu0 %v1576
        %2250 = vmatpush1.msra.mxu0 %v1575
        %2251 = vmatprep.subr.mxu0 %v1580
        %2252 = vmatpush1.msra.mxu0 %v1579
        %2253 = vmatprep.subr.mxu0 %v1584
        %2254 = vmatpush1.msra.mxu0 %v1583
        %2255 = vmatprep.subr.mxu0 %v1588
        %2256 = vmatpush1.msra.mxu0 %v1587
        %2257 = vmatprep.subr.mxu0 %v1592
        %2258 = vmatpush1.msra.mxu0 %v1591
        %2259 = vmatprep.subr.mxu0 %v1596
        %2260 = vmatpush1.msra.mxu0 %v1595
        %2261 = vmatprep.subr.mxu0 %v1600
        %2262 = vmatpush1.msra.mxu0 %v1599
        %2263 = vmatprep.subr.mxu0 0.0
        %2264 = vmatpush1.msra.mxu0 0.0
        %2265 = vmatprep.subr.mxu0 0.0
        %2266 = vmatpush1.msra.mxu0 0.0
        %2267 = vmatprep.subr.mxu0 0.0
        %2268 = vmatpush1.msra.mxu0 0.0
        %2269 = vmatprep.subr.mxu0 0.0
        %2270 = vmatpush1.msra.mxu0 0.0
        %2271 = vmatprep.subr.mxu0 0.0
        %2272 = vmatpush1.msra.mxu0 0.0
        %2273 = vmatprep.subr.mxu0 0.0
        %2274 = vmatpush1.msra.mxu0 0.0
        %2275 = vmatprep.subr.mxu0 0.0
        %2276 = vmatpush1.msra.mxu0 0.0
        %2277 = vmatprep.subr.mxu0 0.0
        %2278 = vmatpush1.msra.mxu0 0.0
        %2279 = vmatprep.subr.mxu0 0.0
        %2280 = vmatpush1.msra.mxu0 0.0
        %2281 = vmatprep.subr.mxu0 0.0
        %2282 = vmatpush1.msra.mxu0 0.0
        %2283 = vmatprep.subr.mxu0 0.0
        %2284 = vmatpush1.msra.mxu0 0.0
        %2285 = vmatprep.subr.mxu0 0.0
        %2286 = vmatpush1.msra.mxu0 0.0
        %2287 = vmatprep.subr.mxu0 0.0
        %2288 = vmatpush1.msra.mxu0 0.0
        %2289 = vmatprep.subr.mxu0 0.0
        %2290 = vmatpush1.msra.mxu0 0.0
        %2291 = vmatprep.subr.mxu0 0.0
        %2292 = vmatpush1.msra.mxu0 0.0
        %2293 = vmatprep.subr.mxu0 0.0
        %2294 = vmatpush1.msra.mxu0 0.0
        %2295 = vmatprep.subr.mxu0 0.0
        %2296 = vmatpush1.msra.mxu0 0.0
        %2297 = vmatprep.subr.mxu0 0.0
        %2298 = vmatpush1.msra.mxu0 0.0
        %2299 = vmatprep.subr.mxu0 0.0
        %2300 = vmatpush1.msra.mxu0 0.0
        %2301 = vmatprep.subr.mxu0 0.0
        %2302 = vmatpush1.msra.mxu0 0.0
        %2303 = vmatprep.subr.mxu0 0.0
        %2304 = vmatpush1.msra.mxu0 0.0
        %2305 = vmatprep.subr.mxu0 0.0
        %2306 = vmatpush1.msra.mxu0 0.0
        %2307 = vmatprep.subr.mxu0 0.0
        %2308 = vmatpush1.msra.mxu0 0.0
        %2309 = vmatprep.subr.mxu0 0.0
        %2310 = vmatpush1.msra.mxu0 0.0
        %2311 = vmatprep.mubr.f32.mxu0 0.0
        %2312 = vmatmul.mubr.f32.gmra.mrb[0].mxu0 %v2111
        %v2313 = vpop.f32.mrb[0].mxu0
        %v2314 = vadd.f32 0.0, %v2313
        %v2315 = vpop.f32.mrb[0].mxu0
        %v2316 = vadd.f32 0.0, %v2315
        %2317 = vmatprep.mubr.f32.mxu0 0.0
        %2318 = vmatmul.mubr.f32.gmra.mrb[0].mxu0 %v2114
        %v2319 = vpop.f32.mrb[0].mxu0
        %v2320 = vadd.f32 0.0, %v2319
        %v2321 = vpop.f32.mrb[0].mxu0
        %v2322 = vadd.f32 0.0, %v2321
        %2323 = vmatprep.mubr.f32.mxu0 0.0
        %2324 = vmatmul.mubr.f32.gmra.mrb[0].mxu0 %v2117
        %v2325 = vpop.f32.mrb[0].mxu0
        %v2326 = vadd.f32 0.0, %v2325
        %v2327 = vpop.f32.mrb[0].mxu0
        %v2328 = vadd.f32 0.0, %v2327
        %2329 = vmatprep.mubr.f32.mxu0 0.0
        %2330 = vmatmul.mubr.f32.gmra.mrb[0].mxu0 %v2120
        %v2331 = vpop.f32.mrb[0].mxu0
        %v2332 = vadd.f32 0.0, %v2331
        %v2333 = vpop.f32.mrb[0].mxu0
        %v2334 = vadd.f32 0.0, %v2333
        %2335 = vmatprep.mubr.f32.mxu0 0.0
        %2336 = vmatmul.mubr.f32.gmra.mrb[0].mxu0 %v2123
        %v2337 = vpop.f32.mrb[0].mxu0
        %v2338 = vadd.f32 0.0, %v2337
        %v2339 = vpop.f32.mrb[0].mxu0
        %v2340 = vadd.f32 0.0, %v2339
        %2341 = vmatprep.mubr.f32.mxu0 0.0
        %2342 = vmatmul.mubr.f32.gmra.mrb[0].mxu0 %v2126
        %v2343 = vpop.f32.mrb[0].mxu0
        %v2344 = vadd.f32 0.0, %v2343
        %v2345 = vpop.f32.mrb[0].mxu0
        %v2346 = vadd.f32 0.0, %v2345
        %2347 = vmatprep.mubr.f32.mxu0 0.0
        %2348 = vmatmul.mubr.f32.gmra.mrb[0].mxu0 %v2129
        %v2349 = vpop.f32.mrb[0].mxu0
        %v2350 = vadd.f32 0.0, %v2349
        %v2351 = vpop.f32.mrb[0].mxu0
        %v2352 = vadd.f32 0.0, %v2351
        %2353 = vmatprep.mubr.f32.mxu0 0.0
        %2354 = vmatmul.mubr.f32.gmra.mrb[0].mxu0 %v2132
        %v2355 = vpop.f32.mrb[0].mxu0
        %v2356 = vadd.f32 0.0, %v2355
        %v2357 = vpop.f32.mrb[0].mxu0
        %v2358 = vadd.f32 0.0, %v2357
        %2359 = vdwg.mxu0
        %v2361 = vsel %vm2109, %v1365, 0
        %v2364 = vsel %vm2109, %v1368, 0
        %v2367 = vsel %vm2109, %v1373, 0
        %v2370 = vsel %vm2109, %v1376, 0
        %v2373 = vsel %vm2109, %v1381, 0
        %v2376 = vsel %vm2109, %v1384, 0
        %v2379 = vsel %vm2109, %v1389, 0
        %v2382 = vsel %vm2109, %v1392, 0
        %2384 = vmatprep.subr.mxu0 %v1570
        %2385 = vmatpush1.msra.mxu0 %v1569
        %2386 = vmatprep.subr.mxu0 %v1574
        %2387 = vmatpush1.msra.mxu0 %v1573
        %2388 = vmatprep.subr.mxu0 %v1578
        %2389 = vmatpush1.msra.mxu0 %v1577
        %2390 = vmatprep.subr.mxu0 %v1582
        %2391 = vmatpush1.msra.mxu0 %v1581
        %2392 = vmatprep.subr.mxu0 %v1586
        %2393 = vmatpush1.msra.mxu0 %v1585
        %2394 = vmatprep.subr.mxu0 %v1590
        %2395 = vmatpush1.msra.mxu0 %v1589
        %2396 = vmatprep.subr.mxu0 %v1594
        %2397 = vmatpush1.msra.mxu0 %v1593
        %2398 = vmatprep.subr.mxu0 %v1598
        %2399 = vmatpush1.msra.mxu0 %v1597
        %2400 = vmatprep.subr.mxu0 0.0
        %2401 = vmatpush1.msra.mxu0 0.0
        %2402 = vmatprep.subr.mxu0 0.0
        %2403 = vmatpush1.msra.mxu0 0.0
        %2404 = vmatprep.subr.mxu0 0.0
        %2405 = vmatpush1.msra.mxu0 0.0
        %2406 = vmatprep.subr.mxu0 0.0
        %2407 = vmatpush1.msra.mxu0 0.0
        %2408 = vmatprep.subr.mxu0 0.0
        %2409 = vmatpush1.msra.mxu0 0.0
        %2410 = vmatprep.subr.mxu0 0.0
        %2411 = vmatpush1.msra.mxu0 0.0
        %2412 = vmatprep.subr.mxu0 0.0
        %2413 = vmatpush1.msra.mxu0 0.0
        %2414 = vmatprep.subr.mxu0 0.0
        %2415 = vmatpush1.msra.mxu0 0.0
        %2416 = vmatprep.subr.mxu0 0.0
        %2417 = vmatpush1.msra.mxu0 0.0
        %2418 = vmatprep.subr.mxu0 0.0
        %2419 = vmatpush1.msra.mxu0 0.0
        %2420 = vmatprep.subr.mxu0 0.0
        %2421 = vmatpush1.msra.mxu0 0.0
        %2422 = vmatprep.subr.mxu0 0.0
        %2423 = vmatpush1.msra.mxu0 0.0
        %2424 = vmatprep.subr.mxu0 0.0
        %2425 = vmatpush1.msra.mxu0 0.0
        %2426 = vmatprep.subr.mxu0 0.0
        %2427 = vmatpush1.msra.mxu0 0.0
        %2428 = vmatprep.subr.mxu0 0.0
        %2429 = vmatpush1.msra.mxu0 0.0
        %2430 = vmatprep.subr.mxu0 0.0
        %2431 = vmatpush1.msra.mxu0 0.0
        %2432 = vmatprep.subr.mxu0 0.0
        %2433 = vmatpush1.msra.mxu0 0.0
        %2434 = vmatprep.subr.mxu0 0.0
        %2435 = vmatpush1.msra.mxu0 0.0
        %2436 = vmatprep.subr.mxu0 0.0
        %2437 = vmatpush1.msra.mxu0 0.0
        %2438 = vmatprep.subr.mxu0 0.0
        %2439 = vmatpush1.msra.mxu0 0.0
        %2440 = vmatprep.subr.mxu0 0.0
        %2441 = vmatpush1.msra.mxu0 0.0
        %2442 = vmatprep.subr.mxu0 0.0
        %2443 = vmatpush1.msra.mxu0 0.0
        %2444 = vmatprep.subr.mxu0 0.0
        %2445 = vmatpush1.msra.mxu0 0.0
        %2446 = vmatprep.subr.mxu0 0.0
        %2447 = vmatpush1.msra.mxu0 0.0
        %2448 = vmatprep.mubr.f32.mxu0 0.0
        %2449 = vmatmul.mubr.f32.gmra.mrb[0].mxu0 %v2361
        %v2450 = vpop.f32.mrb[0].mxu0
        %v2451 = vadd.f32 0.0, %v2450
        %v2452 = vpop.f32.mrb[0].mxu0
        %v2453 = vadd.f32 0.0, %v2452
        %2454 = vmatprep.mubr.f32.mxu0 0.0
        %2455 = vmatmul.mubr.f32.gmra.mrb[0].mxu0 %v2364
        %v2456 = vpop.f32.mrb[0].mxu0
        %v2457 = vadd.f32 0.0, %v2456
        %v2458 = vpop.f32.mrb[0].mxu0
        %v2459 = vadd.f32 0.0, %v2458
        %2460 = vmatprep.mubr.f32.mxu0 0.0
        %2461 = vmatmul.mubr.f32.gmra.mrb[0].mxu0 %v2367
        %v2462 = vpop.f32.mrb[0].mxu0
        %v2463 = vadd.f32 0.0, %v2462
        %v2464 = vpop.f32.mrb[0].mxu0
        %v2465 = vadd.f32 0.0, %v2464
        %2466 = vmatprep.mubr.f32.mxu0 0.0
        %2467 = vmatmul.mubr.f32.gmra.mrb[0].mxu0 %v2370
        %v2468 = vpop.f32.mrb[0].mxu0
        %v2469 = vadd.f32 0.0, %v2468
        %v2470 = vpop.f32.mrb[0].mxu0
        %v2471 = vadd.f32 0.0, %v2470
        %2472 = vmatprep.mubr.f32.mxu0 0.0
        %2473 = vmatmul.mubr.f32.gmra.mrb[0].mxu0 %v2373
        %v2474 = vpop.f32.mrb[0].mxu0
        %v2475 = vadd.f32 0.0, %v2474
        %v2476 = vpop.f32.mrb[0].mxu0
        %v2477 = vadd.f32 0.0, %v2476
        %2478 = vmatprep.mubr.f32.mxu0 0.0
        %2479 = vmatmul.mubr.f32.gmra.mrb[0].mxu0 %v2376
        %v2480 = vpop.f32.mrb[0].mxu0
        %v2481 = vadd.f32 0.0, %v2480
        %v2482 = vpop.f32.mrb[0].mxu0
        %v2483 = vadd.f32 0.0, %v2482
        %2484 = vmatprep.mubr.f32.mxu0 0.0
        %2485 = vmatmul.mubr.f32.gmra.mrb[0].mxu0 %v2379
        %v2486 = vpop.f32.mrb[0].mxu0
        %v2487 = vadd.f32 0.0, %v2486
        %v2488 = vpop.f32.mrb[0].mxu0
        %v2489 = vadd.f32 0.0, %v2488
        %2490 = vmatprep.mubr.f32.mxu0 0.0
        %2491 = vmatmul.mubr.f32.gmra.mrb[0].mxu0 %v2382
        %v2492 = vpop.f32.mrb[0].mxu0
        %v2493 = vadd.f32 0.0, %v2492
        %v2494 = vpop.f32.mrb[0].mxu0
        %v2495 = vadd.f32 0.0, %v2494
        %2496 = vdwg.mxu0
        %2497 = vmatprep.subr.mxu0 %v1572
        %2498 = vmatpush1.msra.mxu0 %v1571
        %2499 = vmatprep.subr.mxu0 %v1576
        %2500 = vmatpush1.msra.mxu0 %v1575
        %2501 = vmatprep.subr.mxu0 %v1580
        %2502 = vmatpush1.msra.mxu0 %v1579
        %2503 = vmatprep.subr.mxu0 %v1584
        %2504 = vmatpush1.msra.mxu0 %v1583
        %2505 = vmatprep.subr.mxu0 %v1588
        %2506 = vmatpush1.msra.mxu0 %v1587
        %2507 = vmatprep.subr.mxu0 %v1592
        %2508 = vmatpush1.msra.mxu0 %v1591
        %2509 = vmatprep.subr.mxu0 %v1596
        %2510 = vmatpush1.msra.mxu0 %v1595
        %2511 = vmatprep.subr.mxu0 %v1600
        %2512 = vmatpush1.msra.mxu0 %v1599
        %2513 = vmatprep.subr.mxu0 0.0
        %2514 = vmatpush1.msra.mxu0 0.0
        %2515 = vmatprep.subr.mxu0 0.0
        %2516 = vmatpush1.msra.mxu0 0.0
        %2517 = vmatprep.subr.mxu0 0.0
        %2518 = vmatpush1.msra.mxu0 0.0
        %2519 = vmatprep.subr.mxu0 0.0
        %2520 = vmatpush1.msra.mxu0 0.0
        %2521 = vmatprep.subr.mxu0 0.0
        %2522 = vmatpush1.msra.mxu0 0.0
        %2523 = vmatprep.subr.mxu0 0.0
        %2524 = vmatpush1.msra.mxu0 0.0
        %2525 = vmatprep.subr.mxu0 0.0
        %2526 = vmatpush1.msra.mxu0 0.0
        %2527 = vmatprep.subr.mxu0 0.0
        %2528 = vmatpush1.msra.mxu0 0.0
        %2529 = vmatprep.subr.mxu0 0.0
        %2530 = vmatpush1.msra.mxu0 0.0
        %2531 = vmatprep.subr.mxu0 0.0
        %2532 = vmatpush1.msra.mxu0 0.0
        %2533 = vmatprep.subr.mxu0 0.0
        %2534 = vmatpush1.msra.mxu0 0.0
        %2535 = vmatprep.subr.mxu0 0.0
        %2536 = vmatpush1.msra.mxu0 0.0
        %2537 = vmatprep.subr.mxu0 0.0
        %2538 = vmatpush1.msra.mxu0 0.0
        %2539 = vmatprep.subr.mxu0 0.0
        %2540 = vmatpush1.msra.mxu0 0.0
        %2541 = vmatprep.subr.mxu0 0.0
        %2542 = vmatpush1.msra.mxu0 0.0
        %2543 = vmatprep.subr.mxu0 0.0
        %2544 = vmatpush1.msra.mxu0 0.0
        %2545 = vmatprep.subr.mxu0 0.0
        %2546 = vmatpush1.msra.mxu0 0.0
        %2547 = vmatprep.subr.mxu0 0.0
        %2548 = vmatpush1.msra.mxu0 0.0
        %2549 = vmatprep.subr.mxu0 0.0
        %2550 = vmatpush1.msra.mxu0 0.0
        %2551 = vmatprep.subr.mxu0 0.0
        %2552 = vmatpush1.msra.mxu0 0.0
        %2553 = vmatprep.subr.mxu0 0.0
        %2554 = vmatpush1.msra.mxu0 0.0
        %2555 = vmatprep.subr.mxu0 0.0
        %2556 = vmatpush1.msra.mxu0 0.0
        %2557 = vmatprep.subr.mxu0 0.0
        %2558 = vmatpush1.msra.mxu0 0.0
        %2559 = vmatprep.subr.mxu0 0.0
        %2560 = vmatpush1.msra.mxu0 0.0
        %2561 = vmatprep.mubr.f32.mxu0 0.0
        %2562 = vmatmul.mubr.f32.gmra.mrb[0].mxu0 %v2361
        %v2563 = vpop.f32.mrb[0].mxu0
        %v2564 = vadd.f32 0.0, %v2563
        %v2565 = vpop.f32.mrb[0].mxu0
        %v2566 = vadd.f32 0.0, %v2565
        %2567 = vmatprep.mubr.f32.mxu0 0.0
        %2568 = vmatmul.mubr.f32.gmra.mrb[0].mxu0 %v2364
        %v2569 = vpop.f32.mrb[0].mxu0
        %v2570 = vadd.f32 0.0, %v2569
        %v2571 = vpop.f32.mrb[0].mxu0
        %v2572 = vadd.f32 0.0, %v2571
        %2573 = vmatprep.mubr.f32.mxu0 0.0
        %2574 = vmatmul.mubr.f32.gmra.mrb[0].mxu0 %v2367
        %v2575 = vpop.f32.mrb[0].mxu0
        %v2576 = vadd.f32 0.0, %v2575
        %v2577 = vpop.f32.mrb[0].mxu0
        %v2578 = vadd.f32 0.0, %v2577
        %2579 = vmatprep.mubr.f32.mxu0 0.0
        %2580 = vmatmul.mubr.f32.gmra.mrb[0].mxu0 %v2370
        %v2581 = vpop.f32.mrb[0].mxu0
        %v2582 = vadd.f32 0.0, %v2581
        %v2583 = vpop.f32.mrb[0].mxu0
        %v2584 = vadd.f32 0.0, %v2583
        %2585 = vmatprep.mubr.f32.mxu0 0.0
        %2586 = vmatmul.mubr.f32.gmra.mrb[0].mxu0 %v2373
        %v2587 = vpop.f32.mrb[0].mxu0
        %v2588 = vadd.f32 0.0, %v2587
        %v2589 = vpop.f32.mrb[0].mxu0
        %v2590 = vadd.f32 0.0, %v2589
        %2591 = vmatprep.mubr.f32.mxu0 0.0
        %2592 = vmatmul.mubr.f32.gmra.mrb[0].mxu0 %v2376
        %v2593 = vpop.f32.mrb[0].mxu0
        %v2594 = vadd.f32 0.0, %v2593
        %v2595 = vpop.f32.mrb[0].mxu0
        %v2596 = vadd.f32 0.0, %v2595
        %2597 = vmatprep.mubr.f32.mxu0 0.0
        %2598 = vmatmul.mubr.f32.gmra.mrb[0].mxu0 %v2379
        %v2599 = vpop.f32.mrb[0].mxu0
        %v2600 = vadd.f32 0.0, %v2599
        %v2601 = vpop.f32.mrb[0].mxu0
        %v2602 = vadd.f32 0.0, %v2601
        %2603 = vmatprep.mubr.f32.mxu0 0.0
        %2604 = vmatmul.mubr.f32.gmra.mrb[0].mxu0 %v2382
        %v2605 = vpop.f32.mrb[0].mxu0
        %v2606 = vadd.f32 0.0, %v2605
        %v2607 = vpop.f32.mrb[0].mxu0
        %v2608 = vadd.f32 0.0, %v2607
        %2609 = vdwg.mxu0
        %v2610 = vld [vmem:[%s12] sm:$0xf]
        %v2612 = vlaneseq
        %v2613 = vshrl.u32 %v2612, 7
        %v2614 = vsub.s32 0, %v2613
        %v2615 = vrot.slane %v2610, %v2614
        %v2616 = vlaneseq
        %v2617 = vshrl.u32 %v2616, 7
        %v2618 = vsub.s32 1, %v2617
        %v2619 = vrot.slane %v2610, %v2618
        %v2620 = vlaneseq
        %v2621 = vshrl.u32 %v2620, 7
        %v2622 = vsub.s32 2, %v2621
        %v2623 = vrot.slane %v2610, %v2622
        %v2624 = vlaneseq
        %v2625 = vshrl.u32 %v2624, 7
        %v2626 = vsub.s32 3, %v2625
        %v2627 = vrot.slane %v2610, %v2626
        %v2632 = vmul.f32 %v1692, %v2615
        %v2633 = vmul.f32 %v1694, %v2619
        %v2634 = vmul.f32 %v1805, %v2623
        %v2635 = vmul.f32 %v1807, %v2627
        %v2636 = vmul.f32 %v1698, %v2615
        %v2637 = vmul.f32 %v1700, %v2619
        %v2638 = vmul.f32 %v1811, %v2623
        %v2639 = vmul.f32 %v1813, %v2627
        %v2640 = vmul.f32 %v1704, %v2615
        %v2641 = vmul.f32 %v1706, %v2619
        %v2642 = vmul.f32 %v1817, %v2623
        %v2643 = vmul.f32 %v1819, %v2627
        %v2644 = vmul.f32 %v1710, %v2615
        %v2645 = vmul.f32 %v1712, %v2619
        %v2646 = vmul.f32 %v1823, %v2623
        %v2647 = vmul.f32 %v1825, %v2627
        %v2648 = vmul.f32 %v1716, %v2615
        %v2649 = vmul.f32 %v1718, %v2619
        %v2650 = vmul.f32 %v1829, %v2623
        %v2651 = vmul.f32 %v1831, %v2627
        %v2652 = vmul.f32 %v1722, %v2615
        %v2653 = vmul.f32 %v1724, %v2619
        %v2654 = vmul.f32 %v1835, %v2623
        %v2655 = vmul.f32 %v1837, %v2627
        %v2656 = vmul.f32 %v1728, %v2615
        %v2657 = vmul.f32 %v1730, %v2619
        %v2658 = vmul.f32 %v1841, %v2623
        %v2659 = vmul.f32 %v1843, %v2627
        %v2660 = vmul.f32 %v1734, %v2615
        %v2661 = vmul.f32 %v1736, %v2619
        %v2662 = vmul.f32 %v1847, %v2623
        %v2663 = vmul.f32 %v1849, %v2627
        %v2664 = vmul.f32 %v2632, 1.442695
        %v2665 = vpow.pop %v2664
        %v2666 = vmul.f32 %v2633, 1.442695
        %v2667 = vpow.pop %v2666
        %v2668 = vmul.f32 %v2634, 1.442695
        %v2669 = vpow.pop %v2668
        %v2670 = vmul.f32 %v2635, 1.442695
        %v2671 = vpow.pop %v2670
        %v2672 = vmul.f32 %v2636, 1.442695
        %v2673 = vpow.pop %v2672
        %v2674 = vmul.f32 %v2637, 1.442695
        %v2675 = vpow.pop %v2674
        %v2676 = vmul.f32 %v2638, 1.442695
        %v2677 = vpow.pop %v2676
        %v2678 = vmul.f32 %v2639, 1.442695
        %v2679 = vpow.pop %v2678
        %v2680 = vmul.f32 %v2640, 1.442695
        %v2681 = vpow.pop %v2680
        %v2682 = vmul.f32 %v2641, 1.442695
        %v2683 = vpow.pop %v2682
        %v2684 = vmul.f32 %v2642, 1.442695
        %v2685 = vpow.pop %v2684
        %v2686 = vmul.f32 %v2643, 1.442695
        %v2687 = vpow.pop %v2686
        %v2688 = vmul.f32 %v2644, 1.442695
        %v2689 = vpow.pop %v2688
        %v2690 = vmul.f32 %v2645, 1.442695
        %v2691 = vpow.pop %v2690
        %v2692 = vmul.f32 %v2646, 1.442695
        %v2693 = vpow.pop %v2692
        %v2694 = vmul.f32 %v2647, 1.442695
        %v2695 = vpow.pop %v2694
        %v2696 = vmul.f32 %v2648, 1.442695
        %v2697 = vpow.pop %v2696
        %v2698 = vmul.f32 %v2649, 1.442695
        %v2699 = vpow.pop %v2698
        %v2700 = vmul.f32 %v2650, 1.442695
        %v2701 = vpow.pop %v2700
        %v2702 = vmul.f32 %v2651, 1.442695
        %v2703 = vpow.pop %v2702
        %v2704 = vmul.f32 %v2652, 1.442695
        %v2705 = vpow.pop %v2704
        %v2706 = vmul.f32 %v2653, 1.442695
        %v2707 = vpow.pop %v2706
        %v2708 = vmul.f32 %v2654, 1.442695
        %v2709 = vpow.pop %v2708
        %v2710 = vmul.f32 %v2655, 1.442695
        %v2711 = vpow.pop %v2710
        %v2712 = vmul.f32 %v2656, 1.442695
        %v2713 = vpow.pop %v2712
        %v2714 = vmul.f32 %v2657, 1.442695
        %v2715 = vpow.pop %v2714
        %v2716 = vmul.f32 %v2658, 1.442695
        %v2717 = vpow.pop %v2716
        %v2718 = vmul.f32 %v2659, 1.442695
        %v2719 = vpow.pop %v2718
        %v2720 = vmul.f32 %v2660, 1.442695
        %v2721 = vpow.pop %v2720
        %v2722 = vmul.f32 %v2661, 1.442695
        %v2723 = vpow.pop %v2722
        %v2724 = vmul.f32 %v2662, 1.442695
        %v2725 = vpow.pop %v2724
        %v2726 = vmul.f32 %v2663, 1.442695
        %v2727 = vpow.pop %v2726
        %v2728 = vmul.f32 %v1950, %v2201
        %v2729 = vmul.f32 %v1952, %v2203
        %v2730 = vmul.f32 %v2063, %v2314
        %v2731 = vmul.f32 %v2065, %v2316
        %v2732 = vmul.f32 %v1956, %v2207
        %v2733 = vmul.f32 %v1958, %v2209
        %v2734 = vmul.f32 %v2069, %v2320
        %v2735 = vmul.f32 %v2071, %v2322
        %v2736 = vmul.f32 %v1962, %v2213
        %v2737 = vmul.f32 %v1964, %v2215
        %v2738 = vmul.f32 %v2075, %v2326
        %v2739 = vmul.f32 %v2077, %v2328
        %v2740 = vmul.f32 %v1968, %v2219
        %v2741 = vmul.f32 %v1970, %v2221
        %v2742 = vmul.f32 %v2081, %v2332
        %v2743 = vmul.f32 %v2083, %v2334
        %v2744 = vmul.f32 %v1974, %v2225
        %v2745 = vmul.f32 %v1976, %v2227
        %v2746 = vmul.f32 %v2087, %v2338
        %v2747 = vmul.f32 %v2089, %v2340
        %v2748 = vmul.f32 %v1980, %v2231
        %v2749 = vmul.f32 %v1982, %v2233
        %v2750 = vmul.f32 %v2093, %v2344
        %v2751 = vmul.f32 %v2095, %v2346
        %v2752 = vmul.f32 %v1986, %v2237
        %v2753 = vmul.f32 %v1988, %v2239
        %v2754 = vmul.f32 %v2099, %v2350
        %v2755 = vmul.f32 %v2101, %v2352
        %v2756 = vmul.f32 %v1992, %v2243
        %v2757 = vmul.f32 %v1994, %v2245
        %v2758 = vmul.f32 %v2105, %v2356
        %v2759 = vmul.f32 %v2107, %v2358
        %v2792 = vrot.slane %v2665, 7
        %v2793 = vrot.slane %v2667, 7
        %v2794 = vrot.slane %v2669, 7
        %v2795 = vrot.slane %v2671, 7
        %v2796 = vrot.slane %v2673, 7
        %v2797 = vsel %vm1060, %v2792, %v2796
        %v2798 = vrot.slane %v2675, 7
        %v2799 = vsel %vm1060, %v2793, %v2798
        %v2800 = vrot.slane %v2677, 7
        %v2801 = vsel %vm1060, %v2794, %v2800
        %v2802 = vrot.slane %v2679, 7
        %v2803 = vsel %vm1060, %v2795, %v2802
        %v2804 = vrot.slane %v2681, 7
        %v2805 = vsel %vm1060, %v2796, %v2804
        %v2806 = vrot.slane %v2683, 7
        %v2807 = vsel %vm1060, %v2798, %v2806
        %v2808 = vrot.slane %v2685, 7
        %v2809 = vsel %vm1060, %v2800, %v2808
        %v2810 = vrot.slane %v2687, 7
        %v2811 = vsel %vm1060, %v2802, %v2810
        %v2812 = vrot.slane %v2689, 7
        %v2813 = vsel %vm1060, %v2804, %v2812
        %v2814 = vrot.slane %v2691, 7
        %v2815 = vsel %vm1060, %v2806, %v2814
        %v2816 = vrot.slane %v2693, 7
        %v2817 = vsel %vm1060, %v2808, %v2816
        %v2818 = vrot.slane %v2695, 7
        %v2819 = vsel %vm1060, %v2810, %v2818
        %v2820 = vrot.slane %v2697, 7
        %v2821 = vsel %vm1060, %v2812, %v2820
        %v2822 = vrot.slane %v2699, 7
        %v2823 = vsel %vm1060, %v2814, %v2822
        %v2824 = vrot.slane %v2701, 7
        %v2825 = vsel %vm1060, %v2816, %v2824
        %v2826 = vrot.slane %v2703, 7
        %v2827 = vsel %vm1060, %v2818, %v2826
        %v2828 = vrot.slane %v2705, 7
        %v2829 = vsel %vm1060, %v2820, %v2828
        %v2830 = vrot.slane %v2707, 7
        %v2831 = vsel %vm1060, %v2822, %v2830
        %v2832 = vrot.slane %v2709, 7
        %v2833 = vsel %vm1060, %v2824, %v2832
        %v2834 = vrot.slane %v2711, 7
        %v2835 = vsel %vm1060, %v2826, %v2834
        %v2836 = vrot.slane %v2713, 7
        %v2837 = vsel %vm1060, %v2828, %v2836
        %v2838 = vrot.slane %v2715, 7
        %v2839 = vsel %vm1060, %v2830, %v2838
        %v2840 = vrot.slane %v2717, 7
        %v2841 = vsel %vm1060, %v2832, %v2840
        %v2842 = vrot.slane %v2719, 7
        %v2843 = vsel %vm1060, %v2834, %v2842
        %v2844 = vrot.slane %v2721, 7
        %v2845 = vsel %vm1060, %v2836, %v2844
        %v2846 = vrot.slane %v2723, 7
        %v2847 = vsel %vm1060, %v2838, %v2846
        %v2848 = vrot.slane %v2725, 7
        %v2849 = vsel %vm1060, %v2840, %v2848
        %v2850 = vrot.slane %v2727, 7
        %v2851 = vsel %vm1060, %v2842, %v2850
        %v2884 = vsel %vm1060, 1.0, %v2792
        %v2885 = vsel %vm1060, 1.0, %v2793
        %v2886 = vsel %vm1060, 1.0, %v2794
        %v2887 = vsel %vm1060, 1.0, %v2795
        %v2920 = vrot.slane %v2728, 7
        %v2921 = vrot.slane %v2729, 7
        %v2922 = vrot.slane %v2730, 7
        %v2923 = vrot.slane %v2731, 7
        %v2924 = vrot.slane %v2732, 7
        %v2925 = vsel %vm1060, %v2920, %v2924
        %v2926 = vrot.slane %v2733, 7
        %v2927 = vsel %vm1060, %v2921, %v2926
        %v2928 = vrot.slane %v2734, 7
        %v2929 = vsel %vm1060, %v2922, %v2928
        %v2930 = vrot.slane %v2735, 7
        %v2931 = vsel %vm1060, %v2923, %v2930
        %v2932 = vrot.slane %v2736, 7
        %v2933 = vsel %vm1060, %v2924, %v2932
        %v2934 = vrot.slane %v2737, 7
        %v2935 = vsel %vm1060, %v2926, %v2934
        %v2936 = vrot.slane %v2738, 7
        %v2937 = vsel %vm1060, %v2928, %v2936
        %v2938 = vrot.slane %v2739, 7
        %v2939 = vsel %vm1060, %v2930, %v2938
        %v2940 = vrot.slane %v2740, 7
        %v2941 = vsel %vm1060, %v2932, %v2940
        %v2942 = vrot.slane %v2741, 7
        %v2943 = vsel %vm1060, %v2934, %v2942
        %v2944 = vrot.slane %v2742, 7
        %v2945 = vsel %vm1060, %v2936, %v2944
        %v2946 = vrot.slane %v2743, 7
        %v2947 = vsel %vm1060, %v2938, %v2946
        %v2948 = vrot.slane %v2744, 7
        %v2949 = vsel %vm1060, %v2940, %v2948
        %v2950 = vrot.slane %v2745, 7
        %v2951 = vsel %vm1060, %v2942, %v2950
        %v2952 = vrot.slane %v2746, 7
        %v2953 = vsel %vm1060, %v2944, %v2952
        %v2954 = vrot.slane %v2747, 7
        %v2955 = vsel %vm1060, %v2946, %v2954
        %v2956 = vrot.slane %v2748, 7
        %v2957 = vsel %vm1060, %v2948, %v2956
        %v2958 = vrot.slane %v2749, 7
        %v2959 = vsel %vm1060, %v2950, %v2958
        %v2960 = vrot.slane %v2750, 7
        %v2961 = vsel %vm1060, %v2952, %v2960
        %v2962 = vrot.slane %v2751, 7
        %v2963 = vsel %vm1060, %v2954, %v2962
        %v2964 = vrot.slane %v2752, 7
        %v2965 = vsel %vm1060, %v2956, %v2964
        %v2966 = vrot.slane %v2753, 7
        %v2967 = vsel %vm1060, %v2958, %v2966
        %v2968 = vrot.slane %v2754, 7
        %v2969 = vsel %vm1060, %v2960, %v2968
        %v2970 = vrot.slane %v2755, 7
        %v2971 = vsel %vm1060, %v2962, %v2970
        %v2972 = vrot.slane %v2756, 7
        %v2973 = vsel %vm1060, %v2964, %v2972
        %v2974 = vrot.slane %v2757, 7
        %v2975 = vsel %vm1060, %v2966, %v2974
        %v2976 = vrot.slane %v2758, 7
        %v2977 = vsel %vm1060, %v2968, %v2976
        %v2978 = vrot.slane %v2759, 7
        %v2979 = vsel %vm1060, %v2970, %v2978
        %v3012 = vsel %vm1060, 0.0, %v2920
        %v3013 = vsel %vm1060, 0.0, %v2921
        %v3014 = vsel %vm1060, 0.0, %v2922
        %v3015 = vsel %vm1060, 0.0, %v2923
        %v3016 = vmul.f32 %v2665, %v3012
        %v3017 = vmul.f32 %v2667, %v3013
        %v3018 = vmul.f32 %v2669, %v3014
        %v3019 = vmul.f32 %v2671, %v3015
        %v3020 = vmul.f32 %v2673, %v2925
        %v3021 = vmul.f32 %v2675, %v2927
        %v3022 = vmul.f32 %v2677, %v2929
        %v3023 = vmul.f32 %v2679, %v2931
        %v3024 = vmul.f32 %v2681, %v2933
        %v3025 = vmul.f32 %v2683, %v2935
        %v3026 = vmul.f32 %v2685, %v2937
        %v3027 = vmul.f32 %v2687, %v2939
        %v3028 = vmul.f32 %v2689, %v2941
        %v3029 = vmul.f32 %v2691, %v2943
        %v3030 = vmul.f32 %v2693, %v2945
        %v3031 = vmul.f32 %v2695, %v2947
        %v3032 = vmul.f32 %v2697, %v2949
        %v3033 = vmul.f32 %v2699, %v2951
        %v3034 = vmul.f32 %v2701, %v2953
        %v3035 = vmul.f32 %v2703, %v2955
        %v3036 = vmul.f32 %v2705, %v2957
        %v3037 = vmul.f32 %v2707, %v2959
        %v3038 = vmul.f32 %v2709, %v2961
        %v3039 = vmul.f32 %v2711, %v2963
        %v3040 = vmul.f32 %v2713, %v2965
        %v3041 = vmul.f32 %v2715, %v2967
        %v3042 = vmul.f32 %v2717, %v2969
        %v3043 = vmul.f32 %v2719, %v2971
        %v3044 = vmul.f32 %v2721, %v2973
        %v3045 = vmul.f32 %v2723, %v2975
        %v3046 = vmul.f32 %v2725, %v2977
        %v3047 = vmul.f32 %v2727, %v2979
        %v3048 = vadd.f32 %v2728, %v3016
        %v3049 = vadd.f32 %v2729, %v3017
        %v3050 = vadd.f32 %v2730, %v3018
        %v3051 = vadd.f32 %v2731, %v3019
        %v3052 = vadd.f32 %v2732, %v3020
        %v3053 = vadd.f32 %v2733, %v3021
        %v3054 = vadd.f32 %v2734, %v3022
        %v3055 = vadd.f32 %v2735, %v3023
        %v3056 = vadd.f32 %v2736, %v3024
        %v3057 = vadd.f32 %v2737, %v3025
        %v3058 = vadd.f32 %v2738, %v3026
        %v3059 = vadd.f32 %v2739, %v3027
        %v3060 = vadd.f32 %v2740, %v3028
        %v3061 = vadd.f32 %v2741, %v3029
        %v3062 = vadd.f32 %v2742, %v3030
        %v3063 = vadd.f32 %v2743, %v3031
        %v3064 = vadd.f32 %v2744, %v3032
        %v3065 = vadd.f32 %v2745, %v3033
        %v3066 = vadd.f32 %v2746, %v3034
        %v3067 = vadd.f32 %v2747, %v3035
        %v3068 = vadd.f32 %v2748, %v3036
        %v3069 = vadd.f32 %v2749, %v3037
        %v3070 = vadd.f32 %v2750, %v3038
        %v3071 = vadd.f32 %v2751, %v3039
        %v3072 = vadd.f32 %v2752, %v3040
        %v3073 = vadd.f32 %v2753, %v3041
        %v3074 = vadd.f32 %v2754, %v3042
        %v3075 = vadd.f32 %v2755, %v3043
        %v3076 = vadd.f32 %v2756, %v3044
        %v3077 = vadd.f32 %v2757, %v3045
        %v3078 = vadd.f32 %v2758, %v3046
        %v3079 = vadd.f32 %v2759, %v3047
        %v3080 = vmul.f32 %v2665, %v2884
        %v3081 = vmul.f32 %v2667, %v2885
        %v3082 = vmul.f32 %v2669, %v2886
        %v3083 = vmul.f32 %v2671, %v2887
        %v3084 = vmul.f32 %v2673, %v2797
        %v3085 = vmul.f32 %v2675, %v2799
        %v3086 = vmul.f32 %v2677, %v2801
        %v3087 = vmul.f32 %v2679, %v2803
        %v3088 = vmul.f32 %v2681, %v2805
        %v3089 = vmul.f32 %v2683, %v2807
        %v3090 = vmul.f32 %v2685, %v2809
        %v3091 = vmul.f32 %v2687, %v2811
        %v3092 = vmul.f32 %v2689, %v2813
        %v3093 = vmul.f32 %v2691, %v2815
        %v3094 = vmul.f32 %v2693, %v2817
        %v3095 = vmul.f32 %v2695, %v2819
        %v3096 = vmul.f32 %v2697, %v2821
        %v3097 = vmul.f32 %v2699, %v2823
        %v3098 = vmul.f32 %v2701, %v2825
        %v3099 = vmul.f32 %v2703, %v2827
        %v3100 = vmul.f32 %v2705, %v2829
        %v3101 = vmul.f32 %v2707, %v2831
        %v3102 = vmul.f32 %v2709, %v2833
        %v3103 = vmul.f32 %v2711, %v2835
        %v3104 = vmul.f32 %v2713, %v2837
        %v3105 = vmul.f32 %v2715, %v2839
        %v3106 = vmul.f32 %v2717, %v2841
        %v3107 = vmul.f32 %v2719, %v2843
        %v3108 = vmul.f32 %v2721, %v2845
        %v3109 = vmul.f32 %v2723, %v2847
        %v3110 = vmul.f32 %v2725, %v2849
        %v3111 = vmul.f32 %v2727, %v2851
        %v3144 = vrot.slane %v3080, 6
        %v3145 = vrot.slane %v3081, 6
        %v3146 = vrot.slane %v3082, 6
        %v3147 = vrot.slane %v3083, 6
        %v3148 = vrot.slane %v3084, 6
        %v3149 = vsel %vm1015, %v3144, %v3148
        %v3150 = vrot.slane %v3085, 6
        %v3151 = vsel %vm1015, %v3145, %v3150
        %v3152 = vrot.slane %v3086, 6
        %v3153 = vsel %vm1015, %v3146, %v3152
        %v3154 = vrot.slane %v3087, 6
        %v3155 = vsel %vm1015, %v3147, %v3154
        %v3156 = vrot.slane %v3088, 6
        %v3157 = vsel %vm1015, %v3148, %v3156
        %v3158 = vrot.slane %v3089, 6
        %v3159 = vsel %vm1015, %v3150, %v3158
        %v3160 = vrot.slane %v3090, 6
        %v3161 = vsel %vm1015, %v3152, %v3160
        %v3162 = vrot.slane %v3091, 6
        %v3163 = vsel %vm1015, %v3154, %v3162
        %v3164 = vrot.slane %v3092, 6
        %v3165 = vsel %vm1015, %v3156, %v3164
        %v3166 = vrot.slane %v3093, 6
        %v3167 = vsel %vm1015, %v3158, %v3166
        %v3168 = vrot.slane %v3094, 6
        %v3169 = vsel %vm1015, %v3160, %v3168
        %v3170 = vrot.slane %v3095, 6
        %v3171 = vsel %vm1015, %v3162, %v3170
        %v3172 = vrot.slane %v3096, 6
        %v3173 = vsel %vm1015, %v3164, %v3172
        %v3174 = vrot.slane %v3097, 6
        %v3175 = vsel %vm1015, %v3166, %v3174
        %v3176 = vrot.slane %v3098, 6
        %v3177 = vsel %vm1015, %v3168, %v3176
        %v3178 = vrot.slane %v3099, 6
        %v3179 = vsel %vm1015, %v3170, %v3178
        %v3180 = vrot.slane %v3100, 6
        %v3181 = vsel %vm1015, %v3172, %v3180
        %v3182 = vrot.slane %v3101, 6
        %v3183 = vsel %vm1015, %v3174, %v3182
        %v3184 = vrot.slane %v3102, 6
        %v3185 = vsel %vm1015, %v3176, %v3184
        %v3186 = vrot.slane %v3103, 6
        %v3187 = vsel %vm1015, %v3178, %v3186
        %v3188 = vrot.slane %v3104, 6
        %v3189 = vsel %vm1015, %v3180, %v3188
        %v3190 = vrot.slane %v3105, 6
        %v3191 = vsel %vm1015, %v3182, %v3190
        %v3192 = vrot.slane %v3106, 6
        %v3193 = vsel %vm1015, %v3184, %v3192
        %v3194 = vrot.slane %v3107, 6
        %v3195 = vsel %vm1015, %v3186, %v3194
        %v3196 = vrot.slane %v3108, 6
        %v3197 = vsel %vm1015, %v3188, %v3196
        %v3198 = vrot.slane %v3109, 6
        %v3199 = vsel %vm1015, %v3190, %v3198
        %v3200 = vrot.slane %v3110, 6
        %v3201 = vsel %vm1015, %v3192, %v3200
        %v3202 = vrot.slane %v3111, 6
        %v3203 = vsel %vm1015, %v3194, %v3202
        %v3236 = vsel %vm1015, 1.0, %v3144
        %v3237 = vsel %vm1015, 1.0, %v3145
        %v3238 = vsel %vm1015, 1.0, %v3146
        %v3239 = vsel %vm1015, 1.0, %v3147
        %v3272 = vrot.slane %v3048, 6
        %v3273 = vrot.slane %v3049, 6
        %v3274 = vrot.slane %v3050, 6
        %v3275 = vrot.slane %v3051, 6
        %v3276 = vrot.slane %v3052, 6
        %v3277 = vsel %vm1015, %v3272, %v3276
        %v3278 = vrot.slane %v3053, 6
        %v3279 = vsel %vm1015, %v3273, %v3278
        %v3280 = vrot.slane %v3054, 6
        %v3281 = vsel %vm1015, %v3274, %v3280
        %v3282 = vrot.slane %v3055, 6
        %v3283 = vsel %vm1015, %v3275, %v3282
        %v3284 = vrot.slane %v3056, 6
        %v3285 = vsel %vm1015, %v3276, %v3284
        %v3286 = vrot.slane %v3057, 6
        %v3287 = vsel %vm1015, %v3278, %v3286
        %v3288 = vrot.slane %v3058, 6
        %v3289 = vsel %vm1015, %v3280, %v3288
        %v3290 = vrot.slane %v3059, 6
        %v3291 = vsel %vm1015, %v3282, %v3290
        %v3292 = vrot.slane %v3060, 6
        %v3293 = vsel %vm1015, %v3284, %v3292
        %v3294 = vrot.slane %v3061, 6
        %v3295 = vsel %vm1015, %v3286, %v3294
        %v3296 = vrot.slane %v3062, 6
        %v3297 = vsel %vm1015, %v3288, %v3296
        %v3298 = vrot.slane %v3063, 6
        %v3299 = vsel %vm1015, %v3290, %v3298
        %v3300 = vrot.slane %v3064, 6
        %v3301 = vsel %vm1015, %v3292, %v3300
        %v3302 = vrot.slane %v3065, 6
        %v3303 = vsel %vm1015, %v3294, %v3302
        %v3304 = vrot.slane %v3066, 6
        %v3305 = vsel %vm1015, %v3296, %v3304
        %v3306 = vrot.slane %v3067, 6
        %v3307 = vsel %vm1015, %v3298, %v3306
        %v3308 = vrot.slane %v3068, 6
        %v3309 = vsel %vm1015, %v3300, %v3308
        %v3310 = vrot.slane %v3069, 6
        %v3311 = vsel %vm1015, %v3302, %v3310
        %v3312 = vrot.slane %v3070, 6
        %v3313 = vsel %vm1015, %v3304, %v3312
        %v3314 = vrot.slane %v3071, 6
        %v3315 = vsel %vm1015, %v3306, %v3314
        %v3316 = vrot.slane %v3072, 6
        %v3317 = vsel %vm1015, %v3308, %v3316
        %v3318 = vrot.slane %v3073, 6
        %v3319 = vsel %vm1015, %v3310, %v3318
        %v3320 = vrot.slane %v3074, 6
        %v3321 = vsel %vm1015, %v3312, %v3320
        %v3322 = vrot.slane %v3075, 6
        %v3323 = vsel %vm1015, %v3314, %v3322
        %v3324 = vrot.slane %v3076, 6
        %v3325 = vsel %vm1015, %v3316, %v3324
        %v3326 = vrot.slane %v3077, 6
        %v3327 = vsel %vm1015, %v3318, %v3326
        %v3328 = vrot.slane %v3078, 6
        %v3329 = vsel %vm1015, %v3320, %v3328
        %v3330 = vrot.slane %v3079, 6
        %v3331 = vsel %vm1015, %v3322, %v3330
        %v3364 = vsel %vm1015, 0.0, %v3272
        %v3365 = vsel %vm1015, 0.0, %v3273
        %v3366 = vsel %vm1015, 0.0, %v3274
        %v3367 = vsel %vm1015, 0.0, %v3275
        %v3368 = vmul.f32 %v3080, %v3364
        %v3369 = vmul.f32 %v3081, %v3365
        %v3370 = vmul.f32 %v3082, %v3366
        %v3371 = vmul.f32 %v3083, %v3367
        %v3372 = vmul.f32 %v3084, %v3277
        %v3373 = vmul.f32 %v3085, %v3279
        %v3374 = vmul.f32 %v3086, %v3281
        %v3375 = vmul.f32 %v3087, %v3283
        %v3376 = vmul.f32 %v3088, %v3285
        %v3377 = vmul.f32 %v3089, %v3287
        %v3378 = vmul.f32 %v3090, %v3289
        %v3379 = vmul.f32 %v3091, %v3291
        %v3380 = vmul.f32 %v3092, %v3293
        %v3381 = vmul.f32 %v3093, %v3295
        %v3382 = vmul.f32 %v3094, %v3297
        %v3383 = vmul.f32 %v3095, %v3299
        %v3384 = vmul.f32 %v3096, %v3301
        %v3385 = vmul.f32 %v3097, %v3303
        %v3386 = vmul.f32 %v3098, %v3305
        %v3387 = vmul.f32 %v3099, %v3307
        %v3388 = vmul.f32 %v3100, %v3309
        %v3389 = vmul.f32 %v3101, %v3311
        %v3390 = vmul.f32 %v3102, %v3313
        %v3391 = vmul.f32 %v3103, %v3315
        %v3392 = vmul.f32 %v3104, %v3317
        %v3393 = vmul.f32 %v3105, %v3319
        %v3394 = vmul.f32 %v3106, %v3321
        %v3395 = vmul.f32 %v3107, %v3323
        %v3396 = vmul.f32 %v3108, %v3325
        %v3397 = vmul.f32 %v3109, %v3327
        %v3398 = vmul.f32 %v3110, %v3329
        %v3399 = vmul.f32 %v3111, %v3331
        %v3400 = vadd.f32 %v3048, %v3368
        %v3401 = vadd.f32 %v3049, %v3369
        %v3402 = vadd.f32 %v3050, %v3370
        %v3403 = vadd.f32 %v3051, %v3371
        %v3404 = vadd.f32 %v3052, %v3372
        %v3405 = vadd.f32 %v3053, %v3373
        %v3406 = vadd.f32 %v3054, %v3374
        %v3407 = vadd.f32 %v3055, %v3375
        %v3408 = vadd.f32 %v3056, %v3376
        %v3409 = vadd.f32 %v3057, %v3377
        %v3410 = vadd.f32 %v3058, %v3378
        %v3411 = vadd.f32 %v3059, %v3379
        %v3412 = vadd.f32 %v3060, %v3380
        %v3413 = vadd.f32 %v3061, %v3381
        %v3414 = vadd.f32 %v3062, %v3382
        %v3415 = vadd.f32 %v3063, %v3383
        %v3416 = vadd.f32 %v3064, %v3384
        %v3417 = vadd.f32 %v3065, %v3385
        %v3418 = vadd.f32 %v3066, %v3386
        %v3419 = vadd.f32 %v3067, %v3387
        %v3420 = vadd.f32 %v3068, %v3388
        %v3421 = vadd.f32 %v3069, %v3389
        %v3422 = vadd.f32 %v3070, %v3390
        %v3423 = vadd.f32 %v3071, %v3391
        %v3424 = vadd.f32 %v3072, %v3392
        %v3425 = vadd.f32 %v3073, %v3393
        %v3426 = vadd.f32 %v3074, %v3394
        %v3427 = vadd.f32 %v3075, %v3395
        %v3428 = vadd.f32 %v3076, %v3396
        %v3429 = vadd.f32 %v3077, %v3397
        %v3430 = vadd.f32 %v3078, %v3398
        %v3431 = vadd.f32 %v3079, %v3399
        %v3432 = vmul.f32 %v3080, %v3236
        %v3433 = vmul.f32 %v3081, %v3237
        %v3434 = vmul.f32 %v3082, %v3238
        %v3435 = vmul.f32 %v3083, %v3239
        %v3436 = vmul.f32 %v3084, %v3149
        %v3437 = vmul.f32 %v3085, %v3151
        %v3438 = vmul.f32 %v3086, %v3153
        %v3439 = vmul.f32 %v3087, %v3155
        %v3440 = vmul.f32 %v3088, %v3157
        %v3441 = vmul.f32 %v3089, %v3159
        %v3442 = vmul.f32 %v3090, %v3161
        %v3443 = vmul.f32 %v3091, %v3163
        %v3444 = vmul.f32 %v3092, %v3165
        %v3445 = vmul.f32 %v3093, %v3167
        %v3446 = vmul.f32 %v3094, %v3169
        %v3447 = vmul.f32 %v3095, %v3171
        %v3448 = vmul.f32 %v3096, %v3173
        %v3449 = vmul.f32 %v3097, %v3175
        %v3450 = vmul.f32 %v3098, %v3177
        %v3451 = vmul.f32 %v3099, %v3179
        %v3452 = vmul.f32 %v3100, %v3181
        %v3453 = vmul.f32 %v3101, %v3183
        %v3454 = vmul.f32 %v3102, %v3185
        %v3455 = vmul.f32 %v3103, %v3187
        %v3456 = vmul.f32 %v3104, %v3189
        %v3457 = vmul.f32 %v3105, %v3191
        %v3458 = vmul.f32 %v3106, %v3193
        %v3459 = vmul.f32 %v3107, %v3195
        %v3460 = vmul.f32 %v3108, %v3197
        %v3461 = vmul.f32 %v3109, %v3199
        %v3462 = vmul.f32 %v3110, %v3201
        %v3463 = vmul.f32 %v3111, %v3203
        %vm3496 = vcmask 1043456
        %v3497 = vrot.slane %v3432, 4
        %v3498 = vrot.slane %v3433, 4
        %v3499 = vrot.slane %v3434, 4
        %v3500 = vrot.slane %v3435, 4
        %v3501 = vrot.slane %v3436, 4
        %v3502 = vsel %vm3496, %v3497, %v3501
        %v3503 = vrot.slane %v3437, 4
        %v3504 = vsel %vm3496, %v3498, %v3503
        %v3505 = vrot.slane %v3438, 4
        %v3506 = vsel %vm3496, %v3499, %v3505
        %v3507 = vrot.slane %v3439, 4
        %v3508 = vsel %vm3496, %v3500, %v3507
        %v3509 = vrot.slane %v3440, 4
        %v3510 = vsel %vm3496, %v3501, %v3509
        %v3511 = vrot.slane %v3441, 4
        %v3512 = vsel %vm3496, %v3503, %v3511
        %v3513 = vrot.slane %v3442, 4
        %v3514 = vsel %vm3496, %v3505, %v3513
        %v3515 = vrot.slane %v3443, 4
        %v3516 = vsel %vm3496, %v3507, %v3515
        %v3517 = vrot.slane %v3444, 4
        %v3518 = vsel %vm3496, %v3509, %v3517
        %v3519 = vrot.slane %v3445, 4
        %v3520 = vsel %vm3496, %v3511, %v3519
        %v3521 = vrot.slane %v3446, 4
        %v3522 = vsel %vm3496, %v3513, %v3521
        %v3523 = vrot.slane %v3447, 4
        %v3524 = vsel %vm3496, %v3515, %v3523
        %v3525 = vrot.slane %v3448, 4
        %v3526 = vsel %vm3496, %v3517, %v3525
        %v3527 = vrot.slane %v3449, 4
        %v3528 = vsel %vm3496, %v3519, %v3527
        %v3529 = vrot.slane %v3450, 4
        %v3530 = vsel %vm3496, %v3521, %v3529
        %v3531 = vrot.slane %v3451, 4
        %v3532 = vsel %vm3496, %v3523, %v3531
        %v3533 = vrot.slane %v3452, 4
        %v3534 = vsel %vm3496, %v3525, %v3533
        %v3535 = vrot.slane %v3453, 4
        %v3536 = vsel %vm3496, %v3527, %v3535
        %v3537 = vrot.slane %v3454, 4
        %v3538 = vsel %vm3496, %v3529, %v3537
        %v3539 = vrot.slane %v3455, 4
        %v3540 = vsel %vm3496, %v3531, %v3539
        %v3541 = vrot.slane %v3456, 4
        %v3542 = vsel %vm3496, %v3533, %v3541
        %v3543 = vrot.slane %v3457, 4
        %v3544 = vsel %vm3496, %v3535, %v3543
        %v3545 = vrot.slane %v3458, 4
        %v3546 = vsel %vm3496, %v3537, %v3545
        %v3547 = vrot.slane %v3459, 4
        %v3548 = vsel %vm3496, %v3539, %v3547
        %v3549 = vrot.slane %v3460, 4
        %v3550 = vsel %vm3496, %v3541, %v3549
        %v3551 = vrot.slane %v3461, 4
        %v3552 = vsel %vm3496, %v3543, %v3551
        %v3553 = vrot.slane %v3462, 4
        %v3554 = vsel %vm3496, %v3545, %v3553
        %v3555 = vrot.slane %v3463, 4
        %v3556 = vsel %vm3496, %v3547, %v3555
        %v3589 = vsel %vm3496, 1.0, %v3497
        %v3590 = vsel %vm3496, 1.0, %v3498
        %v3591 = vsel %vm3496, 1.0, %v3499
        %v3592 = vsel %vm3496, 1.0, %v3500
        %v3625 = vrot.slane %v3400, 4
        %v3626 = vrot.slane %v3401, 4
        %v3627 = vrot.slane %v3402, 4
        %v3628 = vrot.slane %v3403, 4
        %v3629 = vrot.slane %v3404, 4
        %v3630 = vsel %vm3496, %v3625, %v3629
        %v3631 = vrot.slane %v3405, 4
        %v3632 = vsel %vm3496, %v3626, %v3631
        %v3633 = vrot.slane %v3406, 4
        %v3634 = vsel %vm3496, %v3627, %v3633
        %v3635 = vrot.slane %v3407, 4
        %v3636 = vsel %vm3496, %v3628, %v3635
        %v3637 = vrot.slane %v3408, 4
        %v3638 = vsel %vm3496, %v3629, %v3637
        %v3639 = vrot.slane %v3409, 4
        %v3640 = vsel %vm3496, %v3631, %v3639
        %v3641 = vrot.slane %v3410, 4
        %v3642 = vsel %vm3496, %v3633, %v3641
        %v3643 = vrot.slane %v3411, 4
        %v3644 = vsel %vm3496, %v3635, %v3643
        %v3645 = vrot.slane %v3412, 4
        %v3646 = vsel %vm3496, %v3637, %v3645
        %v3647 = vrot.slane %v3413, 4
        %v3648 = vsel %vm3496, %v3639, %v3647
        %v3649 = vrot.slane %v3414, 4
        %v3650 = vsel %vm3496, %v3641, %v3649
        %v3651 = vrot.slane %v3415, 4
        %v3652 = vsel %vm3496, %v3643, %v3651
        %v3653 = vrot.slane %v3416, 4
        %v3654 = vsel %vm3496, %v3645, %v3653
        %v3655 = vrot.slane %v3417, 4
        %v3656 = vsel %vm3496, %v3647, %v3655
        %v3657 = vrot.slane %v3418, 4
        %v3658 = vsel %vm3496, %v3649, %v3657
        %v3659 = vrot.slane %v3419, 4
        %v3660 = vsel %vm3496, %v3651, %v3659
        %v3661 = vrot.slane %v3420, 4
        %v3662 = vsel %vm3496, %v3653, %v3661
        %v3663 = vrot.slane %v3421, 4
        %v3664 = vsel %vm3496, %v3655, %v3663
        %v3665 = vrot.slane %v3422, 4
        %v3666 = vsel %vm3496, %v3657, %v3665
        %v3667 = vrot.slane %v3423, 4
        %v3668 = vsel %vm3496, %v3659, %v3667
        %v3669 = vrot.slane %v3424, 4
        %v3670 = vsel %vm3496, %v3661, %v3669
        %v3671 = vrot.slane %v3425, 4
        %v3672 = vsel %vm3496, %v3663, %v3671
        %v3673 = vrot.slane %v3426, 4
        %v3674 = vsel %vm3496, %v3665, %v3673
        %v3675 = vrot.slane %v3427, 4
        %v3676 = vsel %vm3496, %v3667, %v3675
        %v3677 = vrot.slane %v3428, 4
        %v3678 = vsel %vm3496, %v3669, %v3677
        %v3679 = vrot.slane %v3429, 4
        %v3680 = vsel %vm3496, %v3671, %v3679
        %v3681 = vrot.slane %v3430, 4
        %v3682 = vsel %vm3496, %v3673, %v3681
        %v3683 = vrot.slane %v3431, 4
        %v3684 = vsel %vm3496, %v3675, %v3683
        %v3717 = vsel %vm3496, 0.0, %v3625
        %v3718 = vsel %vm3496, 0.0, %v3626
        %v3719 = vsel %vm3496, 0.0, %v3627
        %v3720 = vsel %vm3496, 0.0, %v3628
        %v3721 = vmul.f32 %v3432, %v3717
        %v3722 = vmul.f32 %v3433, %v3718
        %v3723 = vmul.f32 %v3434, %v3719
        %v3724 = vmul.f32 %v3435, %v3720
        %v3725 = vmul.f32 %v3436, %v3630
        %v3726 = vmul.f32 %v3437, %v3632
        %v3727 = vmul.f32 %v3438, %v3634
        %v3728 = vmul.f32 %v3439, %v3636
        %v3729 = vmul.f32 %v3440, %v3638
        %v3730 = vmul.f32 %v3441, %v3640
        %v3731 = vmul.f32 %v3442, %v3642
        %v3732 = vmul.f32 %v3443, %v3644
        %v3733 = vmul.f32 %v3444, %v3646
        %v3734 = vmul.f32 %v3445, %v3648
        %v3735 = vmul.f32 %v3446, %v3650
        %v3736 = vmul.f32 %v3447, %v3652
        %v3737 = vmul.f32 %v3448, %v3654
        %v3738 = vmul.f32 %v3449, %v3656
        %v3739 = vmul.f32 %v3450, %v3658
        %v3740 = vmul.f32 %v3451, %v3660
        %v3741 = vmul.f32 %v3452, %v3662
        %v3742 = vmul.f32 %v3453, %v3664
        %v3743 = vmul.f32 %v3454, %v3666
        %v3744 = vmul.f32 %v3455, %v3668
        %v3745 = vmul.f32 %v3456, %v3670
        %v3746 = vmul.f32 %v3457, %v3672
        %v3747 = vmul.f32 %v3458, %v3674
        %v3748 = vmul.f32 %v3459, %v3676
        %v3749 = vmul.f32 %v3460, %v3678
        %v3750 = vmul.f32 %v3461, %v3680
        %v3751 = vmul.f32 %v3462, %v3682
        %v3752 = vmul.f32 %v3463, %v3684
        %v3753 = vadd.f32 %v3400, %v3721
        %v3754 = vadd.f32 %v3401, %v3722
        %v3755 = vadd.f32 %v3402, %v3723
        %v3756 = vadd.f32 %v3403, %v3724
        %v3757 = vadd.f32 %v3404, %v3725
        %v3758 = vadd.f32 %v3405, %v3726
        %v3759 = vadd.f32 %v3406, %v3727
        %v3760 = vadd.f32 %v3407, %v3728
        %v3761 = vadd.f32 %v3408, %v3729
        %v3762 = vadd.f32 %v3409, %v3730
        %v3763 = vadd.f32 %v3410, %v3731
        %v3764 = vadd.f32 %v3411, %v3732
        %v3765 = vadd.f32 %v3412, %v3733
        %v3766 = vadd.f32 %v3413, %v3734
        %v3767 = vadd.f32 %v3414, %v3735
        %v3768 = vadd.f32 %v3415, %v3736
        %v3769 = vadd.f32 %v3416, %v3737
        %v3770 = vadd.f32 %v3417, %v3738
        %v3771 = vadd.f32 %v3418, %v3739
        %v3772 = vadd.f32 %v3419, %v3740
        %v3773 = vadd.f32 %v3420, %v3741
        %v3774 = vadd.f32 %v3421, %v3742
        %v3775 = vadd.f32 %v3422, %v3743
        %v3776 = vadd.f32 %v3423, %v3744
        %v3777 = vadd.f32 %v3424, %v3745
        %v3778 = vadd.f32 %v3425, %v3746
        %v3779 = vadd.f32 %v3426, %v3747
        %v3780 = vadd.f32 %v3427, %v3748
        %v3781 = vadd.f32 %v3428, %v3749
        %v3782 = vadd.f32 %v3429, %v3750
        %v3783 = vadd.f32 %v3430, %v3751
        %v3784 = vadd.f32 %v3431, %v3752
        %v3785 = vmul.f32 %v3432, %v3589
        %v3786 = vmul.f32 %v3433, %v3590
        %v3787 = vmul.f32 %v3434, %v3591
        %v3788 = vmul.f32 %v3435, %v3592
        %v3789 = vmul.f32 %v3436, %v3502
        %v3790 = vmul.f32 %v3437, %v3504
        %v3791 = vmul.f32 %v3438, %v3506
        %v3792 = vmul.f32 %v3439, %v3508
        %v3793 = vmul.f32 %v3440, %v3510
        %v3794 = vmul.f32 %v3441, %v3512
        %v3795 = vmul.f32 %v3442, %v3514
        %v3796 = vmul.f32 %v3443, %v3516
        %v3797 = vmul.f32 %v3444, %v3518
        %v3798 = vmul.f32 %v3445, %v3520
        %v3799 = vmul.f32 %v3446, %v3522
        %v3800 = vmul.f32 %v3447, %v3524
        %v3801 = vmul.f32 %v3448, %v3526
        %v3802 = vmul.f32 %v3449, %v3528
        %v3803 = vmul.f32 %v3450, %v3530
        %v3804 = vmul.f32 %v3451, %v3532
        %v3805 = vmul.f32 %v3452, %v3534
        %v3806 = vmul.f32 %v3453, %v3536
        %v3807 = vmul.f32 %v3454, %v3538
        %v3808 = vmul.f32 %v3455, %v3540
        %v3809 = vmul.f32 %v3456, %v3542
        %v3810 = vmul.f32 %v3457, %v3544
        %v3811 = vmul.f32 %v3458, %v3546
        %v3812 = vmul.f32 %v3459, %v3548
        %v3813 = vmul.f32 %v3460, %v3550
        %v3814 = vmul.f32 %v3461, %v3552
        %v3815 = vmul.f32 %v3462, %v3554
        %v3816 = vmul.f32 %v3463, %v3556
        %v3817 = vmul.f32 %v3785, 0.0
        %v3818 = vmul.f32 %v3786, 0.0
        %v3819 = vmul.f32 %v3787, 0.0
        %v3820 = vmul.f32 %v3788, 0.0
        %v3821 = vmul.f32 %v3789, %v3753
        %v3822 = vmul.f32 %v3790, %v3754
        %v3823 = vmul.f32 %v3791, %v3755
        %v3824 = vmul.f32 %v3792, %v3756
        %v3825 = vmul.f32 %v3793, %v3757
        %v3826 = vmul.f32 %v3794, %v3758
        %v3827 = vmul.f32 %v3795, %v3759
        %v3828 = vmul.f32 %v3796, %v3760
        %v3829 = vmul.f32 %v3797, %v3761
        %v3830 = vmul.f32 %v3798, %v3762
        %v3831 = vmul.f32 %v3799, %v3763
        %v3832 = vmul.f32 %v3800, %v3764
        %v3833 = vmul.f32 %v3801, %v3765
        %v3834 = vmul.f32 %v3802, %v3766
        %v3835 = vmul.f32 %v3803, %v3767
        %v3836 = vmul.f32 %v3804, %v3768
        %v3837 = vmul.f32 %v3805, %v3769
        %v3838 = vmul.f32 %v3806, %v3770
        %v3839 = vmul.f32 %v3807, %v3771
        %v3840 = vmul.f32 %v3808, %v3772
        %v3841 = vmul.f32 %v3809, %v3773
        %v3842 = vmul.f32 %v3810, %v3774
        %v3843 = vmul.f32 %v3811, %v3775
        %v3844 = vmul.f32 %v3812, %v3776
        %v3845 = vmul.f32 %v3813, %v3777
        %v3846 = vmul.f32 %v3814, %v3778
        %v3847 = vmul.f32 %v3815, %v3779
        %v3848 = vmul.f32 %v3816, %v3780
        %v3849 = vadd.f32 %v3753, %v3817
        %v3850 = vadd.f32 %v3754, %v3818
        %v3851 = vadd.f32 %v3755, %v3819
        %v3852 = vadd.f32 %v3756, %v3820
        %v3853 = vadd.f32 %v3757, %v3821
        %v3854 = vadd.f32 %v3758, %v3822
        %v3855 = vadd.f32 %v3759, %v3823
        %v3856 = vadd.f32 %v3760, %v3824
        %v3857 = vadd.f32 %v3761, %v3825
        %v3858 = vadd.f32 %v3762, %v3826
        %v3859 = vadd.f32 %v3763, %v3827
        %v3860 = vadd.f32 %v3764, %v3828
        %v3861 = vadd.f32 %v3765, %v3829
        %v3862 = vadd.f32 %v3766, %v3830
        %v3863 = vadd.f32 %v3767, %v3831
        %v3864 = vadd.f32 %v3768, %v3832
        %v3865 = vadd.f32 %v3769, %v3833
        %v3866 = vadd.f32 %v3770, %v3834
        %v3867 = vadd.f32 %v3771, %v3835
        %v3868 = vadd.f32 %v3772, %v3836
        %v3869 = vadd.f32 %v3773, %v3837
        %v3870 = vadd.f32 %v3774, %v3838
        %v3871 = vadd.f32 %v3775, %v3839
        %v3872 = vadd.f32 %v3776, %v3840
        %v3873 = vadd.f32 %v3777, %v3841
        %v3874 = vadd.f32 %v3778, %v3842
        %v3875 = vadd.f32 %v3779, %v3843
        %v3876 = vadd.f32 %v3780, %v3844
        %v3877 = vadd.f32 %v3781, %v3845
        %v3878 = vadd.f32 %v3782, %v3846
        %v3879 = vadd.f32 %v3783, %v3847
        %v3880 = vadd.f32 %v3784, %v3848
        %v3881 = vmul.f32 %v3789, %v3785
        %v3882 = vmul.f32 %v3790, %v3786
        %v3883 = vmul.f32 %v3791, %v3787
        %v3884 = vmul.f32 %v3792, %v3788
        %v3885 = vmul.f32 %v3793, %v3789
        %v3886 = vmul.f32 %v3794, %v3790
        %v3887 = vmul.f32 %v3795, %v3791
        %v3888 = vmul.f32 %v3796, %v3792
        %v3889 = vmul.f32 %v3797, %v3793
        %v3890 = vmul.f32 %v3798, %v3794
        %v3891 = vmul.f32 %v3799, %v3795
        %v3892 = vmul.f32 %v3800, %v3796
        %v3893 = vmul.f32 %v3801, %v3797
        %v3894 = vmul.f32 %v3802, %v3798
        %v3895 = vmul.f32 %v3803, %v3799
        %v3896 = vmul.f32 %v3804, %v3800
        %v3897 = vmul.f32 %v3805, %v3801
        %v3898 = vmul.f32 %v3806, %v3802
        %v3899 = vmul.f32 %v3807, %v3803
        %v3900 = vmul.f32 %v3808, %v3804
        %v3901 = vmul.f32 %v3809, %v3805
        %v3902 = vmul.f32 %v3810, %v3806
        %v3903 = vmul.f32 %v3811, %v3807
        %v3904 = vmul.f32 %v3812, %v3808
        %v3905 = vmul.f32 %v3813, %v3809
        %v3906 = vmul.f32 %v3814, %v3810
        %v3907 = vmul.f32 %v3815, %v3811
        %v3908 = vmul.f32 %v3816, %v3812
        %v3909 = vmul.f32 %v3881, 0.0
        %v3910 = vmul.f32 %v3882, 0.0
        %v3911 = vmul.f32 %v3883, 0.0
        %v3912 = vmul.f32 %v3884, 0.0
        %v3913 = vmul.f32 %v3885, %v3849
        %v3914 = vmul.f32 %v3886, %v3850
        %v3915 = vmul.f32 %v3887, %v3851
        %v3916 = vmul.f32 %v3888, %v3852
        %v3917 = vmul.f32 %v3889, %v3853
        %v3918 = vmul.f32 %v3890, %v3854
        %v3919 = vmul.f32 %v3891, %v3855
        %v3920 = vmul.f32 %v3892, %v3856
        %v3921 = vmul.f32 %v3893, %v3857
        %v3922 = vmul.f32 %v3894, %v3858
        %v3923 = vmul.f32 %v3895, %v3859
        %v3924 = vmul.f32 %v3896, %v3860
        %v3925 = vmul.f32 %v3897, %v3861
        %v3926 = vmul.f32 %v3898, %v3862
        %v3927 = vmul.f32 %v3899, %v3863
        %v3928 = vmul.f32 %v3900, %v3864
        %v3929 = vmul.f32 %v3901, %v3865
        %v3930 = vmul.f32 %v3902, %v3866
        %v3931 = vmul.f32 %v3903, %v3867
        %v3932 = vmul.f32 %v3904, %v3868
        %v3933 = vmul.f32 %v3905, %v3869
        %v3934 = vmul.f32 %v3906, %v3870
        %v3935 = vmul.f32 %v3907, %v3871
        %v3936 = vmul.f32 %v3908, %v3872
        %v3937 = vadd.f32 %v3849, %v3817
        %v3938 = vadd.f32 %v3850, %v3818
        %v3939 = vadd.f32 %v3851, %v3819
        %v3940 = vadd.f32 %v3852, %v3820
        %v3941 = vadd.f32 %v3853, %v3909
        %v3942 = vadd.f32 %v3854, %v3910
        %v3943 = vadd.f32 %v3855, %v3911
        %v3944 = vadd.f32 %v3856, %v3912
        %v3945 = vadd.f32 %v3857, %v3913
        %v3946 = vadd.f32 %v3858, %v3914
        %v3947 = vadd.f32 %v3859, %v3915
        %v3948 = vadd.f32 %v3860, %v3916
        %v3949 = vadd.f32 %v3861, %v3917
        %v3950 = vadd.f32 %v3862, %v3918
        %v3951 = vadd.f32 %v3863, %v3919
        %v3952 = vadd.f32 %v3864, %v3920
        %v3953 = vadd.f32 %v3865, %v3921
        %v3954 = vadd.f32 %v3866, %v3922
        %v3955 = vadd.f32 %v3867, %v3923
        %v3956 = vadd.f32 %v3868, %v3924
        %v3957 = vadd.f32 %v3869, %v3925
        %v3958 = vadd.f32 %v3870, %v3926
        %v3959 = vadd.f32 %v3871, %v3927
        %v3960 = vadd.f32 %v3872, %v3928
        %v3961 = vadd.f32 %v3873, %v3929
        %v3962 = vadd.f32 %v3874, %v3930
        %v3963 = vadd.f32 %v3875, %v3931
        %v3964 = vadd.f32 %v3876, %v3932
        %v3965 = vadd.f32 %v3877, %v3933
        %v3966 = vadd.f32 %v3878, %v3934
        %v3967 = vadd.f32 %v3879, %v3935
        %v3968 = vadd.f32 %v3880, %v3936
        %v3969 = vmul.f32 %v3885, %v3785
        %v3970 = vmul.f32 %v3886, %v3786
        %v3971 = vmul.f32 %v3887, %v3787
        %v3972 = vmul.f32 %v3888, %v3788
        %v3973 = vmul.f32 %v3889, %v3881
        %v3974 = vmul.f32 %v3890, %v3882
        %v3975 = vmul.f32 %v3891, %v3883
        %v3976 = vmul.f32 %v3892, %v3884
        %v3977 = vmul.f32 %v3893, %v3885
        %v3978 = vmul.f32 %v3894, %v3886
        %v3979 = vmul.f32 %v3895, %v3887
        %v3980 = vmul.f32 %v3896, %v3888
        %v3981 = vmul.f32 %v3897, %v3889
        %v3982 = vmul.f32 %v3898, %v3890
        %v3983 = vmul.f32 %v3899, %v3891
        %v3984 = vmul.f32 %v3900, %v3892
        %v3985 = vmul.f32 %v3901, %v3893
        %v3986 = vmul.f32 %v3902, %v3894
        %v3987 = vmul.f32 %v3903, %v3895
        %v3988 = vmul.f32 %v3904, %v3896
        %v3989 = vmul.f32 %v3905, %v3897
        %v3990 = vmul.f32 %v3906, %v3898
        %v3991 = vmul.f32 %v3907, %v3899
        %v3992 = vmul.f32 %v3908, %v3900
        %v3993 = vmul.f32 %v3969, 0.0
        %v3994 = vmul.f32 %v3970, 0.0
        %v3995 = vmul.f32 %v3971, 0.0
        %v3996 = vmul.f32 %v3972, 0.0
        %v3997 = vmul.f32 %v3973, 0.0
        %v3998 = vmul.f32 %v3974, 0.0
        %v3999 = vmul.f32 %v3975, 0.0
        %v4000 = vmul.f32 %v3976, 0.0
        %v4001 = vmul.f32 %v3977, %v3937
        %v4002 = vmul.f32 %v3978, %v3938
        %v4003 = vmul.f32 %v3979, %v3939
        %v4004 = vmul.f32 %v3980, %v3940
        %v4005 = vmul.f32 %v3981, %v3941
        %v4006 = vmul.f32 %v3982, %v3942
        %v4007 = vmul.f32 %v3983, %v3943
        %v4008 = vmul.f32 %v3984, %v3944
        %v4009 = vmul.f32 %v3985, %v3945
        %v4010 = vmul.f32 %v3986, %v3946
        %v4011 = vmul.f32 %v3987, %v3947
        %v4012 = vmul.f32 %v3988, %v3948
        %v4013 = vmul.f32 %v3989, %v3949
        %v4014 = vmul.f32 %v3990, %v3950
        %v4015 = vmul.f32 %v3991, %v3951
        %v4016 = vmul.f32 %v3992, %v3952
        %v4017 = vadd.f32 %v3937, %v3817
        %v4018 = vadd.f32 %v3938, %v3818
        %v4019 = vadd.f32 %v3939, %v3819
        %v4020 = vadd.f32 %v3940, %v3820
        %v4021 = vadd.f32 %v3941, %v3909
        %v4022 = vadd.f32 %v3942, %v3910
        %v4023 = vadd.f32 %v3943, %v3911
        %v4024 = vadd.f32 %v3944, %v3912
        %v4025 = vadd.f32 %v3945, %v3993
        %v4026 = vadd.f32 %v3946, %v3994
        %v4027 = vadd.f32 %v3947, %v3995
        %v4028 = vadd.f32 %v3948, %v3996
        %v4029 = vadd.f32 %v3949, %v3997
        %v4030 = vadd.f32 %v3950, %v3998
        %v4031 = vadd.f32 %v3951, %v3999
        %v4032 = vadd.f32 %v3952, %v4000
        %v4033 = vadd.f32 %v3953, %v4001
        %v4034 = vadd.f32 %v3954, %v4002
        %v4035 = vadd.f32 %v3955, %v4003
        %v4036 = vadd.f32 %v3956, %v4004
        %v4037 = vadd.f32 %v3957, %v4005
        %v4038 = vadd.f32 %v3958, %v4006
        %v4039 = vadd.f32 %v3959, %v4007
        %v4040 = vadd.f32 %v3960, %v4008
        %v4041 = vadd.f32 %v3961, %v4009
        %v4042 = vadd.f32 %v3962, %v4010
        %v4043 = vadd.f32 %v3963, %v4011
        %v4044 = vadd.f32 %v3964, %v4012
        %v4045 = vadd.f32 %v3965, %v4013
        %v4046 = vadd.f32 %v3966, %v4014
        %v4047 = vadd.f32 %v3967, %v4015
        %v4048 = vadd.f32 %v3968, %v4016
        %v4049 = vmul.f32 %v4017, %v2451
        %v4050 = vmul.f32 %v4018, %v2453
        %v4051 = vmul.f32 %v4019, %v2564
        %v4052 = vmul.f32 %v4020, %v2566
        %v4053 = vmul.f32 %v4021, %v2457
        %v4054 = vmul.f32 %v4022, %v2459
        %v4055 = vmul.f32 %v4023, %v2570
        %v4056 = vmul.f32 %v4024, %v2572
        %v4057 = vmul.f32 %v4025, %v2463
        %v4058 = vmul.f32 %v4026, %v2465
        %v4059 = vmul.f32 %v4027, %v2576
        %v4060 = vmul.f32 %v4028, %v2578
        %v4061 = vmul.f32 %v4029, %v2469
        %v4062 = vmul.f32 %v4030, %v2471
        %v4063 = vmul.f32 %v4031, %v2582
        %v4064 = vmul.f32 %v4032, %v2584
        %v4065 = vmul.f32 %v4033, %v2475
        %v4066 = vmul.f32 %v4034, %v2477
        %v4067 = vmul.f32 %v4035, %v2588
        %v4068 = vmul.f32 %v4036, %v2590
        %v4069 = vmul.f32 %v4037, %v2481
        %v4070 = vmul.f32 %v4038, %v2483
        %v4071 = vmul.f32 %v4039, %v2594
        %v4072 = vmul.f32 %v4040, %v2596
        %v4073 = vmul.f32 %v4041, %v2487
        %v4074 = vmul.f32 %v4042, %v2489
        %v4075 = vmul.f32 %v4043, %v2600
        %v4076 = vmul.f32 %v4044, %v2602
        %v4077 = vmul.f32 %v4045, %v2493
        %v4078 = vmul.f32 %v4046, %v2495
        %v4079 = vmul.f32 %v4047, %v2606
        %v4080 = vmul.f32 %v4048, %v2608
        %v4081 = vld [vmem:[%s20] sm:$0xff]
        %v4082 = vld [vmem:[%s20 + $0x8] sm:$0xff]
        %v4083 = vld [vmem:[%s20 + $0x10] sm:$0xff]
        %v4084 = vld [vmem:[%s20 + $0x18] sm:$0xff]
        %v4085 = vld [vmem:[%s20 + $0x20] sm:$0xff]
        %v4086 = vld [vmem:[%s20 + $0x28] sm:$0xff]
        %v4087 = vld [vmem:[%s20 + $0x30] sm:$0xff]
        %v4088 = vld [vmem:[%s20 + $0x38] sm:$0xff]
        %v4089 = vld [vmem:[%s20 + $0x40] sm:$0xff]
        %v4090 = vld [vmem:[%s20 + $0x48] sm:$0xff]
        %v4091 = vld [vmem:[%s20 + $0x50] sm:$0xff]
        %v4092 = vld [vmem:[%s20 + $0x58] sm:$0xff]
        %v4093 = vld [vmem:[%s20 + $0x60] sm:$0xff]
        %v4094 = vld [vmem:[%s20 + $0x68] sm:$0xff]
        %v4095 = vld [vmem:[%s20 + $0x70] sm:$0xff]
        %v4096 = vld [vmem:[%s20 + $0x78] sm:$0xff]
        %v4097 = vld [vmem:[%s20 + $0x80] sm:$0xff]
        %v4098 = vld [vmem:[%s20 + $0x88] sm:$0xff]
        %v4099 = vld [vmem:[%s20 + $0x90] sm:$0xff]
        %v4100 = vld [vmem:[%s20 + $0x98] sm:$0xff]
        %v4101 = vld [vmem:[%s20 + $0xa0] sm:$0xff]
        %v4102 = vld [vmem:[%s20 + $0xa8] sm:$0xff]
        %v4103 = vld [vmem:[%s20 + $0xb0] sm:$0xff]
        %v4104 = vld [vmem:[%s20 + $0xb8] sm:$0xff]
        %v4105 = vld [vmem:[%s20 + $0xc0] sm:$0xff]
        %v4106 = vld [vmem:[%s20 + $0xc8] sm:$0xff]
        %v4107 = vld [vmem:[%s20 + $0xd0] sm:$0xff]
        %v4108 = vld [vmem:[%s20 + $0xd8] sm:$0xff]
        %v4109 = vld [vmem:[%s20 + $0xe0] sm:$0xff]
        %v4110 = vld [vmem:[%s20 + $0xe8] sm:$0xff]
        %v4111 = vld [vmem:[%s20 + $0xf0] sm:$0xff]
        %v4112 = vld [vmem:[%s20 + $0xf8] sm:$0xff]
        %v4113 = vld [vmem:[%s20 + $0x100] sm:$0xff]
        %v4114 = vld [vmem:[%s20 + $0x108] sm:$0xff]
        %v4115 = vld [vmem:[%s20 + $0x110] sm:$0xff]
        %v4116 = vld [vmem:[%s20 + $0x118] sm:$0xff]
        %v4117 = vld [vmem:[%s20 + $0x120] sm:$0xff]
        %v4118 = vld [vmem:[%s20 + $0x128] sm:$0xff]
        %v4119 = vld [vmem:[%s20 + $0x130] sm:$0xff]
        %v4120 = vld [vmem:[%s20 + $0x138] sm:$0xff]
        %v4121 = vld [vmem:[%s20 + $0x140] sm:$0xff]
        %v4122 = vld [vmem:[%s20 + $0x148] sm:$0xff]
        %v4123 = vld [vmem:[%s20 + $0x150] sm:$0xff]
        %v4124 = vld [vmem:[%s20 + $0x158] sm:$0xff]
        %v4125 = vld [vmem:[%s20 + $0x160] sm:$0xff]
        %v4126 = vld [vmem:[%s20 + $0x168] sm:$0xff]
        %v4127 = vld [vmem:[%s20 + $0x170] sm:$0xff]
        %v4128 = vld [vmem:[%s20 + $0x178] sm:$0xff]
        %v4129 = vld [vmem:[%s20 + $0x180] sm:$0xff]
        %v4130 = vld [vmem:[%s20 + $0x188] sm:$0xff]
        %v4131 = vld [vmem:[%s20 + $0x190] sm:$0xff]
        %v4132 = vld [vmem:[%s20 + $0x198] sm:$0xff]
        %v4133 = vld [vmem:[%s20 + $0x1a0] sm:$0xff]
        %v4134 = vld [vmem:[%s20 + $0x1a8] sm:$0xff]
        %v4135 = vld [vmem:[%s20 + $0x1b0] sm:$0xff]
        %v4136 = vld [vmem:[%s20 + $0x1b8] sm:$0xff]
        %v4137 = vld [vmem:[%s20 + $0x1c0] sm:$0xff]
        %v4138 = vld [vmem:[%s20 + $0x1c8] sm:$0xff]
        %v4139 = vld [vmem:[%s20 + $0x1d0] sm:$0xff]
        %v4140 = vld [vmem:[%s20 + $0x1d8] sm:$0xff]
        %v4141 = vld [vmem:[%s20 + $0x1e0] sm:$0xff]
        %v4142 = vld [vmem:[%s20 + $0x1e8] sm:$0xff]
        %v4143 = vld [vmem:[%s20 + $0x1f0] sm:$0xff]
        %v4144 = vld [vmem:[%s20 + $0x1f8] sm:$0xff]
        %v4145 = vld [vmem:[%s13] sm:$0x1]
        %v4147 = vlaneseq
        %v4148 = vshrl.u32 %v4147, 7
        %v4149 = vsub.s32 0, %v4148
        %v4150 = vrot.slane %v4145, %v4149
        %v4152 = vmul.f32 %v1157, %v4150
        %v4153 = vmul.f32 %v1158, %v4150
        %v4154 = vmul.f32 %v1159, %v4150
        %v4155 = vmul.f32 %v1160, %v4150
        %v4156 = vmul.f32 %v1161, %v4150
        %v4157 = vmul.f32 %v1162, %v4150
        %v4158 = vmul.f32 %v1163, %v4150
        %v4159 = vmul.f32 %v1164, %v4150
        %4160 = vmatprep.subr.mxu0 0.0
        %4161 = vmatpush1.msra.mxu0 %v4081
        %4162 = vmatprep.subr.mxu0 0.0
        %4163 = vmatpush1.msra.mxu0 %v4082
        %4164 = vmatprep.subr.mxu0 0.0
        %4165 = vmatpush1.msra.mxu0 %v4083
        %4166 = vmatprep.subr.mxu0 0.0
        %4167 = vmatpush1.msra.mxu0 %v4084
        %4168 = vmatprep.subr.mxu0 0.0
        %4169 = vmatpush1.msra.mxu0 %v4085
        %4170 = vmatprep.subr.mxu0 0.0
        %4171 = vmatpush1.msra.mxu0 %v4086
        %4172 = vmatprep.subr.mxu0 0.0
        %4173 = vmatpush1.msra.mxu0 %v4087
        %4174 = vmatprep.subr.mxu0 0.0
        %4175 = vmatpush1.msra.mxu0 %v4088
        %4176 = vmatprep.subr.mxu0 0.0
        %4177 = vmatpush1.msra.mxu0 %v4089
        %4178 = vmatprep.subr.mxu0 0.0
        %4179 = vmatpush1.msra.mxu0 %v4090
        %4180 = vmatprep.subr.mxu0 0.0
        %4181 = vmatpush1.msra.mxu0 %v4091
        %4182 = vmatprep.subr.mxu0 0.0
        %4183 = vmatpush1.msra.mxu0 %v4092
        %4184 = vmatprep.subr.mxu0 0.0
        %4185 = vmatpush1.msra.mxu0 %v4093
        %4186 = vmatprep.subr.mxu0 0.0
        %4187 = vmatpush1.msra.mxu0 %v4094
        %4188 = vmatprep.subr.mxu0 0.0
        %4189 = vmatpush1.msra.mxu0 %v4095
        %4190 = vmatprep.subr.mxu0 0.0
        %4191 = vmatpush1.msra.mxu0 %v4096
        %4192 = vmatprep.subr.mxu0 0.0
        %4193 = vmatpush1.msra.mxu0 %v4097
        %4194 = vmatprep.subr.mxu0 0.0
        %4195 = vmatpush1.msra.mxu0 %v4098
        %4196 = vmatprep.subr.mxu0 0.0
        %4197 = vmatpush1.msra.mxu0 %v4099
        %4198 = vmatprep.subr.mxu0 0.0
        %4199 = vmatpush1.msra.mxu0 %v4100
        %4200 = vmatprep.subr.mxu0 0.0
        %4201 = vmatpush1.msra.mxu0 %v4101
        %4202 = vmatprep.subr.mxu0 0.0
        %4203 = vmatpush1.msra.mxu0 %v4102
        %4204 = vmatprep.subr.mxu0 0.0
        %4205 = vmatpush1.msra.mxu0 %v4103
        %4206 = vmatprep.subr.mxu0 0.0
        %4207 = vmatpush1.msra.mxu0 %v4104
        %4208 = vmatprep.subr.mxu0 0.0
        %4209 = vmatpush1.msra.mxu0 %v4105
        %4210 = vmatprep.subr.mxu0 0.0
        %4211 = vmatpush1.msra.mxu0 %v4106
        %4212 = vmatprep.subr.mxu0 0.0
        %4213 = vmatpush1.msra.mxu0 %v4107
        %4214 = vmatprep.subr.mxu0 0.0
        %4215 = vmatpush1.msra.mxu0 %v4108
        %4216 = vmatprep.subr.mxu0 0.0
        %4217 = vmatpush1.msra.mxu0 %v4109
        %4218 = vmatprep.subr.mxu0 0.0
        %4219 = vmatpush1.msra.mxu0 %v4110
        %4220 = vmatprep.subr.mxu0 0.0
        %4221 = vmatpush1.msra.mxu0 %v4111
        %4222 = vmatprep.subr.mxu0 0.0
        %4223 = vmatpush1.msra.mxu0 %v4112
        %4224 = vmatprep.mubr.f32.mxu0 %v4050
        %4225 = vmatmul.mubr.f32.gmra.mrb[0].mxu0 %v4049
        %v4226 = vpop.f32.mrb[0].mxu0
        %v4227 = vadd.f32 %v4152, %v4226
        %v4228 = vpop.f32.mrb[0].mxu0
        %4229 = vmatprep.mubr.f32.mxu0 %v4054
        %4230 = vmatmul.mubr.f32.gmra.mrb[0].mxu0 %v4053
        %v4231 = vpop.f32.mrb[0].mxu0
        %v4232 = vadd.f32 %v4153, %v4231
        %v4233 = vpop.f32.mrb[0].mxu0
        %4234 = vmatprep.mubr.f32.mxu0 %v4058
        %4235 = vmatmul.mubr.f32.gmra.mrb[0].mxu0 %v4057
        %v4236 = vpop.f32.mrb[0].mxu0
        %v4237 = vadd.f32 %v4154, %v4236
        %v4238 = vpop.f32.mrb[0].mxu0
        %4239 = vmatprep.mubr.f32.mxu0 %v4062
        %4240 = vmatmul.mubr.f32.gmra.mrb[0].mxu0 %v4061
        %v4241 = vpop.f32.mrb[0].mxu0
        %v4242 = vadd.f32 %v4155, %v4241
        %v4243 = vpop.f32.mrb[0].mxu0
        %4244 = vmatprep.mubr.f32.mxu0 %v4066
        %4245 = vmatmul.mubr.f32.gmra.mrb[0].mxu0 %v4065
        %v4246 = vpop.f32.mrb[0].mxu0
        %v4247 = vadd.f32 %v4156, %v4246
        %v4248 = vpop.f32.mrb[0].mxu0
        %4249 = vmatprep.mubr.f32.mxu0 %v4070
        %4250 = vmatmul.mubr.f32.gmra.mrb[0].mxu0 %v4069
        %v4251 = vpop.f32.mrb[0].mxu0
        %v4252 = vadd.f32 %v4157, %v4251
        %v4253 = vpop.f32.mrb[0].mxu0
        %4254 = vmatprep.mubr.f32.mxu0 %v4074
        %4255 = vmatmul.mubr.f32.gmra.mrb[0].mxu0 %v4073
        %v4256 = vpop.f32.mrb[0].mxu0
        %v4257 = vadd.f32 %v4158, %v4256
        %v4258 = vpop.f32.mrb[0].mxu0
        %4259 = vmatprep.mubr.f32.mxu0 %v4078
        %4260 = vmatmul.mubr.f32.gmra.mrb[0].mxu0 %v4077
        %v4261 = vpop.f32.mrb[0].mxu0
        %v4262 = vadd.f32 %v4159, %v4261
        %v4263 = vpop.f32.mrb[0].mxu0
        %4264 = vdwg.mxu0
        %4265 = vmatprep.subr.mxu0 0.0
        %4266 = vmatpush1.msra.mxu0 %v4113
        %4267 = vmatprep.subr.mxu0 0.0
        %4268 = vmatpush1.msra.mxu0 %v4114
        %4269 = vmatprep.subr.mxu0 0.0
        %4270 = vmatpush1.msra.mxu0 %v4115
        %4271 = vmatprep.subr.mxu0 0.0
        %4272 = vmatpush1.msra.mxu0 %v4116
        %4273 = vmatprep.subr.mxu0 0.0
        %4274 = vmatpush1.msra.mxu0 %v4117
        %4275 = vmatprep.subr.mxu0 0.0
        %4276 = vmatpush1.msra.mxu0 %v4118
        %4277 = vmatprep.subr.mxu0 0.0
        %4278 = vmatpush1.msra.mxu0 %v4119
        %4279 = vmatprep.subr.mxu0 0.0
        %4280 = vmatpush1.msra.mxu0 %v4120
        %4281 = vmatprep.subr.mxu0 0.0
        %4282 = vmatpush1.msra.mxu0 %v4121
        %4283 = vmatprep.subr.mxu0 0.0
        %4284 = vmatpush1.msra.mxu0 %v4122
        %4285 = vmatprep.subr.mxu0 0.0
        %4286 = vmatpush1.msra.mxu0 %v4123
        %4287 = vmatprep.subr.mxu0 0.0
        %4288 = vmatpush1.msra.mxu0 %v4124
        %4289 = vmatprep.subr.mxu0 0.0
        %4290 = vmatpush1.msra.mxu0 %v4125
        %4291 = vmatprep.subr.mxu0 0.0
        %4292 = vmatpush1.msra.mxu0 %v4126
        %4293 = vmatprep.subr.mxu0 0.0
        %4294 = vmatpush1.msra.mxu0 %v4127
        %4295 = vmatprep.subr.mxu0 0.0
        %4296 = vmatpush1.msra.mxu0 %v4128
        %4297 = vmatprep.subr.mxu0 0.0
        %4298 = vmatpush1.msra.mxu0 %v4129
        %4299 = vmatprep.subr.mxu0 0.0
        %4300 = vmatpush1.msra.mxu0 %v4130
        %4301 = vmatprep.subr.mxu0 0.0
        %4302 = vmatpush1.msra.mxu0 %v4131
        %4303 = vmatprep.subr.mxu0 0.0
        %4304 = vmatpush1.msra.mxu0 %v4132
        %4305 = vmatprep.subr.mxu0 0.0
        %4306 = vmatpush1.msra.mxu0 %v4133
        %4307 = vmatprep.subr.mxu0 0.0
        %4308 = vmatpush1.msra.mxu0 %v4134
        %4309 = vmatprep.subr.mxu0 0.0
        %4310 = vmatpush1.msra.mxu0 %v4135
        %4311 = vmatprep.subr.mxu0 0.0
        %4312 = vmatpush1.msra.mxu0 %v4136
        %4313 = vmatprep.subr.mxu0 0.0
        %4314 = vmatpush1.msra.mxu0 %v4137
        %4315 = vmatprep.subr.mxu0 0.0
        %4316 = vmatpush1.msra.mxu0 %v4138
        %4317 = vmatprep.subr.mxu0 0.0
        %4318 = vmatpush1.msra.mxu0 %v4139
        %4319 = vmatprep.subr.mxu0 0.0
        %4320 = vmatpush1.msra.mxu0 %v4140
        %4321 = vmatprep.subr.mxu0 0.0
        %4322 = vmatpush1.msra.mxu0 %v4141
        %4323 = vmatprep.subr.mxu0 0.0
        %4324 = vmatpush1.msra.mxu0 %v4142
        %4325 = vmatprep.subr.mxu0 0.0
        %4326 = vmatpush1.msra.mxu0 %v4143
        %4327 = vmatprep.subr.mxu0 0.0
        %4328 = vmatpush1.msra.mxu0 %v4144
        %4329 = vmatprep.mubr.f32.mxu0 %v4052
        %4330 = vmatmul.mubr.f32.gmra.mrb[0].mxu0 %v4051
        %v4331 = vpop.f32.mrb[0].mxu0
        %v4332 = vadd.f32 %v4227, %v4331
        %v4333 = vpop.f32.mrb[0].mxu0
        %4334 = vmatprep.mubr.f32.mxu0 %v4056
        %4335 = vmatmul.mubr.f32.gmra.mrb[0].mxu0 %v4055
        %v4336 = vpop.f32.mrb[0].mxu0
        %v4337 = vadd.f32 %v4232, %v4336
        %v4338 = vpop.f32.mrb[0].mxu0
        %4339 = vmatprep.mubr.f32.mxu0 %v4060
        %4340 = vmatmul.mubr.f32.gmra.mrb[0].mxu0 %v4059
        %v4341 = vpop.f32.mrb[0].mxu0
        %v4342 = vadd.f32 %v4237, %v4341
        %v4343 = vpop.f32.mrb[0].mxu0
        %4344 = vmatprep.mubr.f32.mxu0 %v4064
        %4345 = vmatmul.mubr.f32.gmra.mrb[0].mxu0 %v4063
        %v4346 = vpop.f32.mrb[0].mxu0
        %v4347 = vadd.f32 %v4242, %v4346
        %v4348 = vpop.f32.mrb[0].mxu0
        %4349 = vmatprep.mubr.f32.mxu0 %v4068
        %4350 = vmatmul.mubr.f32.gmra.mrb[0].mxu0 %v4067
        %v4351 = vpop.f32.mrb[0].mxu0
        %v4352 = vadd.f32 %v4247, %v4351
        %v4353 = vpop.f32.mrb[0].mxu0
        %4354 = vmatprep.mubr.f32.mxu0 %v4072
        %4355 = vmatmul.mubr.f32.gmra.mrb[0].mxu0 %v4071
        %v4356 = vpop.f32.mrb[0].mxu0
        %v4357 = vadd.f32 %v4252, %v4356
        %v4358 = vpop.f32.mrb[0].mxu0
        %4359 = vmatprep.mubr.f32.mxu0 %v4076
        %4360 = vmatmul.mubr.f32.gmra.mrb[0].mxu0 %v4075
        %v4361 = vpop.f32.mrb[0].mxu0
        %v4362 = vadd.f32 %v4257, %v4361
        %v4363 = vpop.f32.mrb[0].mxu0
        %4364 = vmatprep.mubr.f32.mxu0 %v4080
        %4365 = vmatmul.mubr.f32.gmra.mrb[0].mxu0 %v4079
        %v4366 = vpop.f32.mrb[0].mxu0
        %v4367 = vadd.f32 %v4262, %v4366
        %v4368 = vpop.f32.mrb[0].mxu0
        %4369 = vdwg.mxu0
        %v4370 = vmul.f32 %v924, 0.5
        %v4371 = vmul.f32 %v927, 0.5
        %v4372 = vmul.f32 %v932, 0.5
        %v4373 = vmul.f32 %v935, 0.5
        %v4374 = vmul.f32 %v940, 0.5
        %v4375 = vmul.f32 %v943, 0.5
        %v4376 = vmul.f32 %v948, 0.5
        %v4377 = vmul.f32 %v951, 0.5
        %v4378 = vtanh.pop %v4370
        %v4379 = vtanh.pop %v4371
        %v4380 = vtanh.pop %v4372
        %v4381 = vtanh.pop %v4373
        %v4382 = vtanh.pop %v4374
        %v4383 = vtanh.pop %v4375
        %v4384 = vtanh.pop %v4376
        %v4385 = vtanh.pop %v4377
        %v4386 = vadd.f32 %v4378, 1.0
        %v4387 = vadd.f32 %v4379, 1.0
        %v4388 = vadd.f32 %v4380, 1.0
        %v4389 = vadd.f32 %v4381, 1.0
        %v4390 = vadd.f32 %v4382, 1.0
        %v4391 = vadd.f32 %v4383, 1.0
        %v4392 = vadd.f32 %v4384, 1.0
        %v4393 = vadd.f32 %v4385, 1.0
        %v4394 = vmul.f32 %v4386, 0.5
        %v4395 = vmul.f32 %v4387, 0.5
        %v4396 = vmul.f32 %v4388, 0.5
        %v4397 = vmul.f32 %v4389, 0.5
        %v4398 = vmul.f32 %v4390, 0.5
        %v4399 = vmul.f32 %v4391, 0.5
        %v4400 = vmul.f32 %v4392, 0.5
        %v4401 = vmul.f32 %v4393, 0.5
        %v4402 = vmul.f32 %v924, %v4394
        %v4403 = vmul.f32 %v927, %v4395
        %v4404 = vmul.f32 %v932, %v4396
        %v4405 = vmul.f32 %v935, %v4397
        %v4406 = vmul.f32 %v940, %v4398
        %v4407 = vmul.f32 %v943, %v4399
        %v4408 = vmul.f32 %v948, %v4400
        %v4409 = vmul.f32 %v951, %v4401
        %v4410 = vmul.f32 %v4332, %v4402
        %v4411 = vmul.f32 %v4337, %v4403
        %v4412 = vmul.f32 %v4342, %v4404
        %v4413 = vmul.f32 %v4347, %v4405
        %v4414 = vmul.f32 %v4352, %v4406
        %v4415 = vmul.f32 %v4357, %v4407
        %v4416 = vmul.f32 %v4362, %v4408
        %v4417 = vmul.f32 %v4367, %v4409
        %v4418 = vld [vmem:[%s14] sm:$0xff]
        %v4419 = vld [vmem:[%s14 + $0x8] sm:$0xff]
        %v4420 = vld [vmem:[%s14 + $0x10] sm:$0xff]
        %v4421 = vld [vmem:[%s14 + $0x18] sm:$0xff]
        %v4422 = vpack.c.bf16 %v4411, %v4410
        %v4423 = vpack.c.bf16 %v4413, %v4412
        %v4424 = vpack.c.bf16 %v4415, %v4414
        %v4425 = vpack.c.bf16 %v4417, %v4416
        %v4426 = vpack.c.bf16 %v4419, %v4418
        %v4427 = vpack.c.bf16 %v4421, %v4420
        %v4428 = vld [vmem:[#allocation2] sm:$0x1]
        %v4430 = vlaneseq
        %v4431 = vshrl.u32 %v4430, 7
        %v4432 = vsub.s32 0, %v4431
        %v4433 = vrot.slane %v4428, %v4432
        %4434 = vset.pattern.permute.xlu0 0
        %4435 = vperm.xlu0 %4434, %v4433
        %v4436 = vpop.permute.xlu0 %4435
        %v4438 = vmul.f32 %v4436, %v794
        %v4439 = vmul.f32 %v4436, %v795
        %v4440 = vmul.f32 %v4436, %v796
        %v4441 = vmul.f32 %v4436, %v797
        %v4442 = vmul.f32 %v4436, %v798
        %v4443 = vmul.f32 %v4436, %v799
        %v4444 = vmul.f32 %v4436, %v800
        %v4445 = vmul.f32 %v4436, %v801
        %v4447 = vsel %vm1175, %v4422, 0
        %v4450 = vsel %vm1175, %v4423, 0
        %v4453 = vsel %vm1175, %v4424, 0
        %v4456 = vsel %vm1175, %v4425, 0
        %4458 = vmatprep.subr.bf16.mxu0 0
        %4459 = vmatpush1.bf16.msra.mxu0 %v4426
        %4460 = vmatprep.subr.bf16.mxu0 0
        %4461 = vmatpush1.bf16.msra.mxu0 %v4427
        %4462 = vmatprep.subr.bf16.mxu0 0
        %4463 = vmatpush1.bf16.msra.mxu0 0
        %4464 = vmatprep.subr.bf16.mxu0 0
        %4465 = vmatpush1.bf16.msra.mxu0 0
        %4466 = vmatprep.subr.bf16.mxu0 0
        %4467 = vmatpush1.bf16.msra.mxu0 0
        %4468 = vmatprep.subr.bf16.mxu0 0
        %4469 = vmatpush1.bf16.msra.mxu0 0
        %4470 = vmatprep.subr.bf16.mxu0 0
        %4471 = vmatpush1.bf16.msra.mxu0 0
        %4472 = vmatprep.subr.bf16.mxu0 0
        %4473 = vmatpush1.bf16.msra.mxu0 0
        %4474 = vmatprep.subr.bf16.mxu0 0
        %4475 = vmatpush1.bf16.msra.mxu0 0
        %4476 = vmatprep.subr.bf16.mxu0 0
        %4477 = vmatpush1.bf16.msra.mxu0 0
        %4478 = vmatprep.subr.bf16.mxu0 0
        %4479 = vmatpush1.bf16.msra.mxu0 0
        %4480 = vmatprep.subr.bf16.mxu0 0
        %4481 = vmatpush1.bf16.msra.mxu0 0
        %4482 = vmatprep.subr.bf16.mxu0 0
        %4483 = vmatpush1.bf16.msra.mxu0 0
        %4484 = vmatprep.subr.bf16.mxu0 0
        %4485 = vmatpush1.bf16.msra.mxu0 0
        %4486 = vmatprep.subr.bf16.mxu0 0
        %4487 = vmatpush1.bf16.msra.mxu0 0
        %4488 = vmatprep.subr.bf16.mxu0 0
        %4489 = vmatpush1.bf16.msra.mxu0 0
        %4490 = vmatprep.mubr.bf16.mxu0 0
        %4491 = vmatmul.mubr.bf16.gmra.mrb[0].mxu0 %v4447
        %v4492 = vpop.f32.mrb[0].mxu0
        %v4493 = vadd.f32 %v4438, %v4492
        %v4494 = vpop.f32.mrb[0].mxu0
        %v4495 = vpop.f32.mrb[0].mxu0
        %v4496 = vadd.f32 %v4439, %v4495
        %v4497 = vpop.f32.mrb[0].mxu0
        %4498 = vmatprep.mubr.bf16.mxu0 0
        %4499 = vmatmul.mubr.bf16.gmra.mrb[0].mxu0 %v4450
        %v4500 = vpop.f32.mrb[0].mxu0
        %v4501 = vadd.f32 %v4440, %v4500
        %v4502 = vpop.f32.mrb[0].mxu0
        %v4503 = vpop.f32.mrb[0].mxu0
        %v4504 = vadd.f32 %v4441, %v4503
        %v4505 = vpop.f32.mrb[0].mxu0
        %4506 = vmatprep.mubr.bf16.mxu0 0
        %4507 = vmatmul.mubr.bf16.gmra.mrb[0].mxu0 %v4453
        %v4508 = vpop.f32.mrb[0].mxu0
        %v4509 = vadd.f32 %v4442, %v4508
        %v4510 = vpop.f32.mrb[0].mxu0
        %v4511 = vpop.f32.mrb[0].mxu0
        %v4512 = vadd.f32 %v4443, %v4511
        %v4513 = vpop.f32.mrb[0].mxu0
        %4514 = vmatprep.mubr.bf16.mxu0 0
        %4515 = vmatmul.mubr.bf16.gmra.mrb[0].mxu0 %v4456
        %v4516 = vpop.f32.mrb[0].mxu0
        %v4517 = vadd.f32 %v4444, %v4516
        %v4518 = vpop.f32.mrb[0].mxu0
        %v4519 = vpop.f32.mrb[0].mxu0
        %v4520 = vadd.f32 %v4445, %v4519
        %v4521 = vpop.f32.mrb[0].mxu0
        %4522 = vdwg.mxu0
        %v4523 = vsel %vm668, %v4493, 0.0
        %4524 = vadd.xlane.f32.xlu0 %v4523
        %v4525 = vpop.xlane.xlu0 %4524
        %v4526 = vsel %vm668, %v4496, 0.0
        %4527 = vadd.xlane.f32.xlu0 %v4526
        %v4528 = vpop.xlane.xlu0 %4527
        %v4529 = vsel %vm668, %v4501, 0.0
        %4530 = vadd.xlane.f32.xlu0 %v4529
        %v4531 = vpop.xlane.xlu0 %4530
        %v4532 = vsel %vm668, %v4504, 0.0
        %4533 = vadd.xlane.f32.xlu0 %v4532
        %v4534 = vpop.xlane.xlu0 %4533
        %v4535 = vsel %vm668, %v4509, 0.0
        %4536 = vadd.xlane.f32.xlu0 %v4535
        %v4537 = vpop.xlane.xlu0 %4536
        %v4538 = vsel %vm668, %v4512, 0.0
        %4539 = vadd.xlane.f32.xlu0 %v4538
        %v4540 = vpop.xlane.xlu0 %4539
        %v4541 = vsel %vm668, %v4517, 0.0
        %4542 = vadd.xlane.f32.xlu0 %v4541
        %v4543 = vpop.xlane.xlu0 %4542
        %v4544 = vsel %vm668, %v4520, 0.0
        %4545 = vadd.xlane.f32.xlu0 %v4544
        %v4546 = vpop.xlane.xlu0 %4545
        %v4547 = vmul.f32 %v4525, %v693
        %v4548 = vmul.f32 %v4528, %v693
        %v4549 = vmul.f32 %v4531, %v693
        %v4550 = vmul.f32 %v4534, %v693
        %v4551 = vmul.f32 %v4537, %v693
        %v4552 = vmul.f32 %v4540, %v693
        %v4553 = vmul.f32 %v4543, %v693
        %v4554 = vmul.f32 %v4546, %v693
        %v4555 = vsub.f32 %v4493, %v4547
        %v4556 = vsub.f32 %v4496, %v4548
        %v4557 = vsub.f32 %v4501, %v4549
        %v4558 = vsub.f32 %v4504, %v4550
        %v4559 = vsub.f32 %v4509, %v4551
        %v4560 = vsub.f32 %v4512, %v4552
        %v4561 = vsub.f32 %v4517, %v4553
        %v4562 = vsub.f32 %v4520, %v4554
        %v4563 = vmul.f32 %v4555, %v4555
        %v4564 = vmul.f32 %v4556, %v4556
        %v4565 = vmul.f32 %v4557, %v4557
        %v4566 = vmul.f32 %v4558, %v4558
        %v4567 = vmul.f32 %v4559, %v4559
        %v4568 = vmul.f32 %v4560, %v4560
        %v4569 = vmul.f32 %v4561, %v4561
        %v4570 = vmul.f32 %v4562, %v4562
        %v4571 = vsel %vm668, %v4563, 0.0
        %4572 = vadd.xlane.f32.xlu0 %v4571
        %v4573 = vpop.xlane.xlu0 %4572
        %v4574 = vsel %vm668, %v4564, 0.0
        %4575 = vadd.xlane.f32.xlu0 %v4574
        %v4576 = vpop.xlane.xlu0 %4575
        %v4577 = vsel %vm668, %v4565, 0.0
        %4578 = vadd.xlane.f32.xlu0 %v4577
        %v4579 = vpop.xlane.xlu0 %4578
        %v4580 = vsel %vm668, %v4566, 0.0
        %4581 = vadd.xlane.f32.xlu0 %v4580
        %v4582 = vpop.xlane.xlu0 %4581
        %v4583 = vsel %vm668, %v4567, 0.0
        %4584 = vadd.xlane.f32.xlu0 %v4583
        %v4585 = vpop.xlane.xlu0 %4584
        %v4586 = vsel %vm668, %v4568, 0.0
        %4587 = vadd.xlane.f32.xlu0 %v4586
        %v4588 = vpop.xlane.xlu0 %4587
        %v4589 = vsel %vm668, %v4569, 0.0
        %4590 = vadd.xlane.f32.xlu0 %v4589
        %v4591 = vpop.xlane.xlu0 %4590
        %v4592 = vsel %vm668, %v4570, 0.0
        %4593 = vadd.xlane.f32.xlu0 %v4592
        %v4594 = vpop.xlane.xlu0 %4593
        %v4595 = vmul.f32 %v4573, %v693
        %v4596 = vmul.f32 %v4576, %v693
        %v4597 = vmul.f32 %v4579, %v693
        %v4598 = vmul.f32 %v4582, %v693
        %v4599 = vmul.f32 %v4585, %v693
        %v4600 = vmul.f32 %v4588, %v693
        %v4601 = vmul.f32 %v4591, %v693
        %v4602 = vmul.f32 %v4594, %v693
        %v4603 = vadd.f32 %v4595, 1e-05
        %v4604 = vadd.f32 %v4596, 1e-05
        %v4605 = vadd.f32 %v4597, 1e-05
        %v4606 = vadd.f32 %v4598, 1e-05
        %v4607 = vadd.f32 %v4599, 1e-05
        %v4608 = vadd.f32 %v4600, 1e-05
        %v4609 = vadd.f32 %v4601, 1e-05
        %v4610 = vadd.f32 %v4602, 1e-05
        %v4611 = vrsqrt.pop %v4603
        %v4612 = vrsqrt.pop %v4604
        %v4613 = vrsqrt.pop %v4605
        %v4614 = vrsqrt.pop %v4606
        %v4615 = vrsqrt.pop %v4607
        %v4616 = vrsqrt.pop %v4608
        %v4617 = vrsqrt.pop %v4609
        %v4618 = vrsqrt.pop %v4610
        %v4619 = vmul.f32 %v4555, %v4611
        %v4620 = vmul.f32 %v4556, %v4612
        %v4621 = vmul.f32 %v4557, %v4613
        %v4622 = vmul.f32 %v4558, %v4614
        %v4623 = vmul.f32 %v4559, %v4615
        %v4624 = vmul.f32 %v4560, %v4616
        %v4625 = vmul.f32 %v4561, %v4617
        %v4626 = vmul.f32 %v4562, %v4618
        %v4627 = vmul.f32 %v4619, %v778
        %v4628 = vmul.f32 %v4620, %v778
        %v4629 = vmul.f32 %v4621, %v778
        %v4630 = vmul.f32 %v4622, %v778
        %v4631 = vmul.f32 %v4623, %v778
        %v4632 = vmul.f32 %v4624, %v778
        %v4633 = vmul.f32 %v4625, %v778
        %v4634 = vmul.f32 %v4626, %v778
        %v4635 = vadd.f32 %v4627, %v792
        %v4636 = vadd.f32 %v4628, %v792
        %v4637 = vadd.f32 %v4629, %v792
        %v4638 = vadd.f32 %v4630, %v792
        %v4639 = vadd.f32 %v4631, %v792
        %v4640 = vadd.f32 %v4632, %v792
        %v4641 = vadd.f32 %v4633, %v792
        %v4642 = vadd.f32 %v4634, %v792
        %v4643 = vld [vmem:[%s16] sm:$0xff]
        %v4644 = vld [vmem:[%s16 + $0x8] sm:$0xff]
        %v4645 = vpack.c.bf16 %v4636, %v4635
        %v4646 = vpack.c.bf16 %v4638, %v4637
        %v4647 = vpack.c.bf16 %v4640, %v4639
        %v4648 = vpack.c.bf16 %v4642, %v4641
        %v4649 = vpack.c.bf16 %v4644, %v4643
        %v4650 = vld [vmem:[%s17] sm:$0x1]
        %v4652 = vlaneseq
        %v4653 = vshrl.u32 %v4652, 7
        %v4654 = vsub.s32 0, %v4653
        %v4655 = vrot.slane %v4650, %v4654
        %v4658 = vsel %vm668, %v4645, 0
        %v4661 = vsel %vm668, %v4646, 0
        %v4664 = vsel %vm668, %v4647, 0
        %v4667 = vsel %vm668, %v4648, 0
        %4669 = vmatprep.subr.bf16.mxu0 0
        %4670 = vmatpush1.bf16.msra.mxu0 %v4649
        %4671 = vmatprep.subr.bf16.mxu0 0
        %4672 = vmatpush1.bf16.msra.mxu0 0
        %4673 = vmatprep.subr.bf16.mxu0 0
        %4674 = vmatpush1.bf16.msra.mxu0 0
        %4675 = vmatprep.subr.bf16.mxu0 0
        %4676 = vmatpush1.bf16.msra.mxu0 0
        %4677 = vmatprep.subr.bf16.mxu0 0
        %4678 = vmatpush1.bf16.msra.mxu0 0
        %4679 = vmatprep.subr.bf16.mxu0 0
        %4680 = vmatpush1.bf16.msra.mxu0 0
        %4681 = vmatprep.subr.bf16.mxu0 0
        %4682 = vmatpush1.bf16.msra.mxu0 0
        %4683 = vmatprep.subr.bf16.mxu0 0
        %4684 = vmatpush1.bf16.msra.mxu0 0
        %4685 = vmatprep.subr.bf16.mxu0 0
        %4686 = vmatpush1.bf16.msra.mxu0 0
        %4687 = vmatprep.subr.bf16.mxu0 0
        %4688 = vmatpush1.bf16.msra.mxu0 0
        %4689 = vmatprep.subr.bf16.mxu0 0
        %4690 = vmatpush1.bf16.msra.mxu0 0
        %4691 = vmatprep.subr.bf16.mxu0 0
        %4692 = vmatpush1.bf16.msra.mxu0 0
        %4693 = vmatprep.subr.bf16.mxu0 0
        %4694 = vmatpush1.bf16.msra.mxu0 0
        %4695 = vmatprep.subr.bf16.mxu0 0
        %4696 = vmatpush1.bf16.msra.mxu0 0
        %4697 = vmatprep.subr.bf16.mxu0 0
        %4698 = vmatpush1.bf16.msra.mxu0 0
        %4699 = vmatprep.subr.bf16.mxu0 0
        %4700 = vmatpush1.bf16.msra.mxu0 0
        %4701 = vmatprep.mubr.bf16.mxu0 0
        %4702 = vmatmul.mubr.bf16.gmra.mrb[0].mxu0 %v4658
        %v4703 = vpop.f32.mrb[0].mxu0
        %v4704 = vadd.f32 %v4655, %v4703
        %v4705 = vpop.f32.mrb[0].mxu0
        %v4706 = vpop.f32.mrb[0].mxu0
        %v4707 = vadd.f32 %v4655, %v4706
        %v4708 = vpop.f32.mrb[0].mxu0
        %4709 = vmatprep.mubr.bf16.mxu0 0
        %4710 = vmatmul.mubr.bf16.gmra.mrb[0].mxu0 %v4661
        %v4711 = vpop.f32.mrb[0].mxu0
        %v4712 = vadd.f32 %v4655, %v4711
        %v4713 = vpop.f32.mrb[0].mxu0
        %v4714 = vpop.f32.mrb[0].mxu0
        %v4715 = vadd.f32 %v4655, %v4714
        %v4716 = vpop.f32.mrb[0].mxu0
        %4717 = vmatprep.mubr.bf16.mxu0 0
        %4718 = vmatmul.mubr.bf16.gmra.mrb[0].mxu0 %v4664
        %v4719 = vpop.f32.mrb[0].mxu0
        %v4720 = vadd.f32 %v4655, %v4719
        %v4721 = vpop.f32.mrb[0].mxu0
        %v4722 = vpop.f32.mrb[0].mxu0
        %v4723 = vadd.f32 %v4655, %v4722
        %v4724 = vpop.f32.mrb[0].mxu0
        %4725 = vmatprep.mubr.bf16.mxu0 0
        %4726 = vmatmul.mubr.bf16.gmra.mrb[0].mxu0 %v4667
        %v4727 = vpop.f32.mrb[0].mxu0
        %v4728 = vadd.f32 %v4655, %v4727
        %v4729 = vpop.f32.mrb[0].mxu0
        %v4730 = vpop.f32.mrb[0].mxu0
        %v4731 = vadd.f32 %v4655, %v4730
        %v4732 = vpop.f32.mrb[0].mxu0
        %4733 = vdwg.mxu0
        %4734 = vst [vmem:[%s651] sm:$0xff] %v4704
        %4735 = vst [vmem:[%s651 + $0x8] sm:$0xff] %v4707
        %4736 = vst [vmem:[%s651 + $0x10] sm:$0xff] %v4712
        %4737 = vst [vmem:[%s651 + $0x18] sm:$0xff] %v4715
        %4738 = vst [vmem:[%s651 + $0x20] sm:$0xff] %v4720
        %4739 = vst [vmem:[%s651 + $0x28] sm:$0xff] %v4723
        %4740 = vst [vmem:[%s651 + $0x30] sm:$0xff] %v4728
        %4741 = vst [vmem:[%s651 + $0x38] sm:$0xff] %v4731
        %s4742 = sand.u32 %s491, 1
        %s4743 = scalar_lea.sflag [#allocation4], %s4742
        %s4744 = sand.u32 %s491, 1
        %s4745 = smul.addr %s4744, 64
        %s4746 = scalar_lea.vmem [#allocation3], %s4745
        // Predicated region
        $region105: #{tpu_custom_call.1} parent=103 // pred_check
          %p4747 = pneg %p501
        $region106: #{tpu_custom_call.1} parent=103 // pred_check_branch
          %4749 = sbr.rel (%p4747) target = $region108
        $region107: #{tpu_custom_call.1} parent=103 // pred_region
          %s4751 = ssub.s32 1024, 1024
          %4752 = vsyncadd %s4743, %s4751
          %s4753 = smul.addr %s37, 8
          %s4754 = smul.addr %s4753, 128
          %s4755 = scalar_lea.hbm %s21, %s4754
          %s4756 = sshll.u32 %s4746, 4
          %s4757 = int_to_ptr.vmem [resolvable:$true] %s4756
          %4762 = dma.vmem_to_hbm [thread:$0]  %s4757, 1024, %s4755, %s4743, 128, 128, 8
        $region108: #{tpu_custom_call.1} parent=103 // pred_fallthru
          _
      $region104: #{tpu_custom_call.1} parent=5 // pred_fallthru
        _
      %p4763 = scmp.le.s32.totalorder 2, %s32
      // Predicated region
      $region109: #{tpu_custom_call.1} parent=5 // pred_check
        %p4764 = pneg %p4763
      $region110: #{tpu_custom_call.1} parent=5 // pred_check_branch
        %4766 = sbr.rel (%p4764) target = $region112
      $region111: #{tpu_custom_call.1} parent=5 // pred_region
        %s4767 = ssub.s32 %s32, 2
        // Predicated region
        $region113: #{tpu_custom_call.1} parent=111 // pred_check
          %p4768 = pneg %p507
        $region114: #{tpu_custom_call.1} parent=111 // pred_check_branch
          %4770 = sbr.rel (%p4768) target = $region116
        $region115: #{tpu_custom_call.1} parent=111 // pred_region
          %s4771 = sand.u32 %s492, 1
          %s4772 = scalar_lea.sflag [#allocation4], %s4771
          %s4773 = sand.u32 %s492, 1
          %s4774 = smul.addr %s4773, 64
          %s4775 = scalar_lea.vmem [#allocation3], %s4774
          %4776 = dma.done %s4772, 1024
        $region116: #{tpu_custom_call.1} parent=111 // pred_fallthru
          _
      $region112: #{tpu_custom_call.1} parent=5 // pred_fallthru
        _
    $region6: #{tpu_custom_call.1} parent=1 // loop_footer
      %s36 = sadd.s32 1, %s32
    $region7: #{tpu_custom_call.1} parent=1 // loop_footer_branch
      %31 = sbr.rel target = $region3
    $region8: #{tpu_custom_call.1} parent=1 // loop_exit
      _
    %4777 = vsyncpa [#allocation4], 1
    %s4778 = scalar_lea.sflag [#allocation4], 1
    %4779 = vsyncpa %s4778, 1

</llo_original>
